<compile_context>
chip_gen: v5e
topology: v5e:2x2
jax: 0.10.0
libtpu: 0.0.40
codegen_flags: <defaults>
</compile_context>

<pallas_src>
import functools
import math

import jax
import jax.numpy as jnp
from jax import lax
from jax.experimental import pallas as pl
from jax.experimental.pallas import tpu as pltpu

F32 = jnp.float32
BF16 = jnp.bfloat16


# --------------------------------------------------------------------------- helpers


def _shift_rows(a, d):
    """s[i] = a[i + d] along the time (sublane) axis, zero outside [0, T)."""
    if d == 0:
        return a
    T, C = a.shape
    z = jnp.zeros((abs(d), C), a.dtype)
    if d > 0:
        return jnp.concatenate([a[d:, :], z], axis=0)
    return jnp.concatenate([z, a[:T + d, :]], axis=0)


def _layer_norm(h, gamma, beta, eps=1e-5):
    """VITS LayerNorm over the channel (lane) dim."""
    mean = jnp.mean(h, axis=-1, keepdims=True)
    cent = h - mean
    var = jnp.mean(cent * cent, axis=-1, keepdims=True)
    return cent * lax.rsqrt(var + eps) * gamma + beta


# ----------------------------------------------------------------------- fused kernel


def w2v_fused_kernel(lens_ref,                              # scalar prefetch (SMEM)
                     x_ref, g_ref, cw_ref, cb_ref,
                     wqkv_ref, bqkv_ref, wo_ref, bo_ref,
                     ekb_ref, evb_ref,
                     ln1g_ref, ln1b_ref,
                     w1_ref, b1_ref, w2_ref, b2_ref,
                     ln2g_ref, ln2b_ref,
                     o_ref, *,
                     n_heads, window, kernel_size, n_layers1, n_layers_total):
    T, C = x_ref.shape[1], x_ref.shape[2]
    dk = C // n_heads
    nrel = 2 * window + 1
    scale = 1.0 / math.sqrt(dk)
    pad_l = (kernel_size - 1) // 2
    CN = (((1,), (1,)), ((), ()))          # contract last dims: a @ b.T without transpose

    # ---------- hoisted, loop-invariant tensors (built once per batch step) ----------
    b = pl.program_id(0)
    length = lens_ref[b]
    mc = (lax.broadcasted_iota(jnp.int32, (T, 1), 0) < length).astype(F32)   # [T, 1]
    mr = (lax.broadcasted_iota(jnp.int32, (1, T), 1) < length).astype(F32)   # [1, T]
    # additive attention bias: 0 where valid, -1e4 where masked (== masked_fill(-1e4)
    # up to the finite score offset; identical after softmax).
    neg_bias = (mc * mr - 1.0) * 1e4                                         # [T, T]

    row = lax.broadcasted_iota(jnp.int32, (T, T), 0)
    col = lax.broadcasted_iota(jnp.int32, (T, T), 1)
    rel = col - row + window                        # relative index, valid in [0, 2*window]
    band = [(rel == r).astype(F32) for r in range(nrel)]                     # [T, T] each
    ridx = lax.broadcasted_iota(jnp.int32, (1, nrel), 1)
    col_oh = [(ridx == r).astype(F32) for r in range(nrel)]                  # [1, nrel] each

    # ---- conditioning: x = x + Conv1d(256->C, 1)(g)  (g has a single frame -> broadcast) ----
    cond = jnp.dot(g_ref[0].astype(BF16), cw_ref[...],
                   preferred_element_type=F32) + cb_ref[...]                 # [1, C]
    x = x_ref[0].astype(F32) + cond                                          # [T, C]
    x = x * mc                                                               # Encoder input mask

    for l in range(n_layers_total):
        # ---------------- multi-head attention with relative position ----------------
        qkv = jnp.dot(x.astype(BF16), wqkv_ref[l],
                      preferred_element_type=F32) + bqkv_ref[l]              # [T, 3C]
        qb = (qkv[:, :C] * scale).astype(BF16)      # scale applied to q (as in VITS)
        kb = qkv[:, C:2 * C].astype(BF16)
        vb = qkv[:, 2 * C:].astype(BF16)

        # relative-key logits for all heads in ONE matmul (block-diagonal emb_k)
        qe_all = jnp.dot(qb, ekb_ref[l], preferred_element_type=F32)         # [T, H*nrel]

        head_outs = []
        wrels = []
        for h in range(n_heads):
            qh = qb[:, h * dk:(h + 1) * dk]
            kh = kb[:, h * dk:(h + 1) * dk]
            vh = vb[:, h * dk:(h + 1) * dk]

            s = lax.dot_general(qh, kh, CN, preferred_element_type=F32)      # [T, T]

            # place relative-key logits on the band (hoisted 0/1 band masks, FMA only)
            qe = qe_all[:, h * nrel:(h + 1) * nrel]
            for r in range(nrel):
                s = s + qe[:, r:r + 1] * band[r]
            s = s + neg_bias

            m = jnp.max(s, axis=-1, keepdims=True)
            e = jnp.exp(s - m)
            p = e / jnp.sum(e, axis=-1, keepdims=True)                       # exact softmax

            head_outs.append(jnp.dot(p.astype(BF16), vh,
                                     preferred_element_type=F32))            # [T, dk]

            # band-extract p -> [T, nrel] (relative-value weights)
            wrel = jnp.zeros((T, nrel), F32)
            for r in range(nrel):
                wrel = wrel + jnp.sum(p * band[r], axis=-1, keepdims=True) * col_oh[r]
            wrels.append(wrel)

        att = jnp.concatenate(head_outs, axis=1)                             # [T, C]
        wrel_all = jnp.concatenate(wrels, axis=1)                            # [T, H*nrel]
        # relative-value term for all heads in ONE matmul, lands in head-concat layout
        att = att + jnp.dot(wrel_all.astype(BF16), evb_ref[l],
                            preferred_element_type=F32)
        # single output projection [T,C] @ [C,C]
        y = jnp.dot(att.astype(BF16), wo_ref[l],
                    preferred_element_type=F32) + bo_ref[l]

        x = _layer_norm(x + y, ln1g_ref[l], ln1b_ref[l])

        # -------- FFN (im2col): mask -> same conv -> relu -> mask -> same conv -> mask --------
        xm = x * mc
        slab1 = jnp.concatenate(
            [_shift_rows(xm, t - pad_l) for t in range(kernel_size)], axis=1)   # [T, k*C]
        h1 = jnp.dot(slab1.astype(BF16), w1_ref[l],
                     preferred_element_type=F32) + b1_ref[l]                     # [T, F]
        hm = jnp.maximum(h1, 0.0) * mc
        slab2 = jnp.concatenate(
            [_shift_rows(hm, t - pad_l) for t in range(kernel_size)], axis=1)    # [T, k*F]
        y2 = (jnp.dot(slab2.astype(BF16), w2_ref[l],
                      preferred_element_type=F32) + b2_ref[l]) * mc

        x = _layer_norm(x + y2, ln2g_ref[l], ln2b_ref[l])

        # encoder boundary masks (end of encoder1 / end of encoder2)
        if l == n_layers1 - 1 or l == n_layers_total - 1:
            x = x * mc

    o_ref[0] = x.astype(o_ref.dtype)


# ------------------------------------------------------------------------- wrapper


def w2v_encoder_forward(x_bct, x_lengths, g_bct, params, *,
                        n_heads, window, kernel_size, n_layers1):
    B, C, T = x_bct.shape
    dtype = x_bct.dtype
    L, nrel, dk = params['emb_k'].shape
    assert T > window + 1, "kernel assumes the VITS zero-padded rel-emb path (T > window+1)"

    # commons.sequence_mask (returned as x_mask)
    mask_bt = (jnp.arange(T)[None, :] < x_lengths[:, None]).astype(dtype)

    x_btc = jnp.transpose(x_bct, (0, 2, 1))        # NCW -> (B, T, C)
    g_btc = jnp.transpose(g_bct, (0, 2, 1))        # (B, 1, 256)

    # Block-diagonal (per-head) relative embeddings so ONE matmul covers all heads:
    #   ek_blk[l, h*dk+d, h*nrel+r] = emb_k[l, r, d]   (query side)
    #   ev_blk[l, h*nrel+r, h*dk+d] = emb_v[l, r, d]   (value side)
    eye = jnp.eye(n_heads, dtype=F32)
    ek_blk = jnp.einsum('hg,ldr->lhdgr', eye,
                        jnp.transpose(params['emb_k'], (0, 2, 1))
                        ).reshape(L, n_heads * dk, n_heads * nrel)
    ev_blk = jnp.einsum('hg,lrd->lhrgd', eye, params['emb_v']
                        ).reshape(L, n_heads * nrel, n_heads * dk)

    # FFN conv weights in im2col layout [L, k*Cin, Cout]
    # (from PyTorch Conv1d weight [Cout, Cin, k]: permute -> [k, Cin, Cout] -> reshape)
    w1 = params['w1'].reshape(L, kernel_size * C, -1)
    w2 = params['w2'].reshape(L, kernel_size * params['w2'].shape[2], C)

    def b16(a):                       # MXU inputs in bf16, f32 accumulation in-kernel
        return a.astype(BF16)

    operands = [
        x_btc, g_btc,
        b16(params['cond_w']), params['cond_b'],
        b16(params['wqkv']), params['bqkv'], b16(params['wo']), params['bo'],
        b16(ek_blk), b16(ev_blk),
        params['ln1_g'], params['ln1_b'],
        b16(w1), params['b1'], b16(w2), params['b2'],
        params['ln2_g'], params['ln2_b'],
    ]

    def full_spec(a):                 # weights: same full block every batch step (DMA'd once)
        zeros = (0,) * a.ndim
        return pl.BlockSpec(a.shape, lambda b, lens: zeros)

    def batch_spec(a):                # per-batch activations
        tail = (0,) * (a.ndim - 1)
        return pl.BlockSpec((1,) + a.shape[1:], lambda b, lens: (b,) + tail)

    in_specs = [batch_spec(x_btc), batch_spec(g_btc)] + [full_spec(a) for a in operands[2:]]

    kernel = functools.partial(
        w2v_fused_kernel, n_heads=n_heads, window=window, kernel_size=kernel_size,
        n_layers1=n_layers1, n_layers_total=L)

    y_btc = pl.pallas_call(
        kernel,
        out_shape=jax.ShapeDtypeStruct((B, T, C), dtype),
        grid_spec=pltpu.PrefetchScalarGridSpec(
            num_scalar_prefetch=1,
            grid=(B,),
            in_specs=in_specs,
            out_specs=pl.BlockSpec((1, T, C), lambda b, lens: (b, 0, 0)),
        ),
        compiler_params=pltpu.CompilerParams(dimension_semantics=("parallel",)),
    )(x_lengths.astype(jnp.int32), *operands)

    return jnp.transpose(y_btc, (0, 2, 1)), mask_bt[:, None, :]   # x [B,C,T], x_mask [B,1,T]


# ----------------------------------------------------------------------- parameter init


def init_params(key, hidden, filter_ch, n_heads, n_layers1, n_layers2, kernel_size, window=4):
    """Random params in the fused/stacked layout used by the kernel.

    Mapping from PyTorch:
      cond_w:  Conv1d(256,H,1).weight[:, :, 0].T           -> [256, H]
      wqkv:    concat(conv_q, conv_k, conv_v).weight.T     -> [L, H, 3H]
      wo:      conv_o.weight[:, :, 0].T                    -> [L, H, H]
      emb_k/v: emb_rel_k / emb_rel_v (heads shared)        -> [L, 2w+1, dk]
      w1/w2:   FFN conv weight [Cout, Cin, k] -> permute   -> [L, k, Cin, Cout]
    """
    L = n_layers1 + n_layers2
    dk = hidden // n_heads
    nrel = 2 * window + 1
    keys = iter(jax.random.split(key, 64))

    def nrm(shape, s=0.1):
        return jax.random.normal(next(keys), shape, F32) * s

    return dict(
        cond_w=nrm((256, hidden)),
        cond_b=nrm((1, hidden), 0.01),
        wqkv=nrm((L, hidden, 3 * hidden)),
        bqkv=nrm((L, 1, 3 * hidden), 0.01),
        wo=nrm((L, hidden, hidden)),
        bo=nrm((L, 1, hidden), 0.01),
        emb_k=nrm((L, nrel, dk), dk ** -0.5),
        emb_v=nrm((L, nrel, dk), dk ** -0.5),
        ln1_g=jnp.ones((L, 1, hidden), F32),
        ln1_b=jnp.zeros((L, 1, hidden), F32),
        w1=nrm((L, kernel_size, hidden, filter_ch)),
        b1=nrm((L, 1, filter_ch), 0.01),
        w2=nrm((L, kernel_size, filter_ch, hidden)),
        b2=nrm((L, 1, hidden), 0.01),
        ln2_g=jnp.ones((L, 1, hidden), F32),
        ln2_b=jnp.zeros((L, 1, hidden), F32),
    )


# ------------------------------------------------------------------------------- main


if __name__ == "__main__":
    # W2VEncoder(out_channels=16, hidden_channels=32, filter_channels=64,
    #            n_heads=2, n_layers=2, kernel_size=3, p_dropout=0.1)
    B, T, hidden = 2, 16, 32              # B kept even so v7x's two TensorCores split batch
    filter_ch, n_heads, n_layers, kernel_size = 64, 2, 2, 3
    window = 4                            # VITS Encoder default window_size

    key = jax.random.PRNGKey(0)
    kx, kg, kp = jax.random.split(key, 3)
    x = jax.random.normal(kx, (B, hidden, T), jnp.float32)     # w2v features, NCW
    g = jax.random.normal(kg, (B, 256, 1), jnp.float32)        # conditioning, NCW
    x_lengths = jnp.array([16, 11], jnp.int32)

    params = init_params(kp, hidden, filter_ch, n_heads,
                         n_layers1=n_layers, n_layers2=1,
                         kernel_size=kernel_size, window=window)

    fwd = jax.jit(functools.partial(
        w2v_encoder_forward, n_heads=n_heads, window=window,
        kernel_size=kernel_size, n_layers1=n_layers))

    y, y_mask = fwd(x, x_lengths, g, params)
    jax.block_until_ready((y, y_mask))
    assert y.shape == (B, hidden, T) and y_mask.shape == (B, 1, T)
    print("KERNEL_OK")
</pallas_src>

<mosaic_0001>
module attributes {stable_mosaic.version = 11 : i64} {
  func.func @w2v_fused_kernel(%arg0: i32, %arg1: memref<2xi32, #tpu.memory_space<smem>>, %arg2: memref<1x16x32xf32, #tpu.memory_space<vmem>>, %arg3: memref<1x1x256xf32, #tpu.memory_space<vmem>>, %arg4: memref<256x32xbf16, #tpu.memory_space<vmem>>, %arg5: memref<1x32xf32, #tpu.memory_space<vmem>>, %arg6: memref<3x32x96xbf16, #tpu.memory_space<vmem>>, %arg7: memref<3x1x96xf32, #tpu.memory_space<vmem>>, %arg8: memref<3x32x32xbf16, #tpu.memory_space<vmem>>, %arg9: memref<3x1x32xf32, #tpu.memory_space<vmem>>, %arg10: memref<3x32x18xbf16, #tpu.memory_space<vmem>>, %arg11: memref<3x18x32xbf16, #tpu.memory_space<vmem>>, %arg12: memref<3x1x32xf32, #tpu.memory_space<vmem>>, %arg13: memref<3x1x32xf32, #tpu.memory_space<vmem>>, %arg14: memref<3x96x64xbf16, #tpu.memory_space<vmem>>, %arg15: memref<3x1x64xf32, #tpu.memory_space<vmem>>, %arg16: memref<3x192x32xbf16, #tpu.memory_space<vmem>>, %arg17: memref<3x1x32xf32, #tpu.memory_space<vmem>>, %arg18: memref<3x1x32xf32, #tpu.memory_space<vmem>>, %arg19: memref<3x1x32xf32, #tpu.memory_space<vmem>>, %arg20: memref<1x16x32xf32, #tpu.memory_space<vmem>>) attributes {dimension_semantics = [#tpu.dimension_semantics<parallel>], iteration_bounds = array<i64: 2>, scalar_prefetch = 1 : i64, scratch_operands = 0 : i64, tpu.core_type = #tpu.core_type<tc>, window_params = [{transform_indices = @transform_0, window_bounds = array<i64: 1, 16, 32>}, {transform_indices = @transform_1, window_bounds = array<i64: 1, 1, 256>}, {pipeline_mode = #tpu.pipeline_mode<synchronous>, transform_indices = @transform_2, window_bounds = array<i64: 256, 32>}, {pipeline_mode = #tpu.pipeline_mode<synchronous>, transform_indices = @transform_3, window_bounds = array<i64: 1, 32>}, {pipeline_mode = #tpu.pipeline_mode<synchronous>, transform_indices = @transform_4, window_bounds = array<i64: 3, 32, 96>}, {pipeline_mode = #tpu.pipeline_mode<synchronous>, transform_indices = @transform_5, window_bounds = array<i64: 3, 1, 96>}, {pipeline_mode = #tpu.pipeline_mode<synchronous>, transform_indices = @transform_6, window_bounds = array<i64: 3, 32, 32>}, {pipeline_mode = #tpu.pipeline_mode<synchronous>, transform_indices = @transform_7, window_bounds = array<i64: 3, 1, 32>}, {pipeline_mode = #tpu.pipeline_mode<synchronous>, transform_indices = @transform_8, window_bounds = array<i64: 3, 32, 18>}, {pipeline_mode = #tpu.pipeline_mode<synchronous>, transform_indices = @transform_9, window_bounds = array<i64: 3, 18, 32>}, {pipeline_mode = #tpu.pipeline_mode<synchronous>, transform_indices = @transform_10, window_bounds = array<i64: 3, 1, 32>}, {pipeline_mode = #tpu.pipeline_mode<synchronous>, transform_indices = @transform_11, window_bounds = array<i64: 3, 1, 32>}, {pipeline_mode = #tpu.pipeline_mode<synchronous>, transform_indices = @transform_12, window_bounds = array<i64: 3, 96, 64>}, {pipeline_mode = #tpu.pipeline_mode<synchronous>, transform_indices = @transform_13, window_bounds = array<i64: 3, 1, 64>}, {pipeline_mode = #tpu.pipeline_mode<synchronous>, transform_indices = @transform_14, window_bounds = array<i64: 3, 192, 32>}, {pipeline_mode = #tpu.pipeline_mode<synchronous>, transform_indices = @transform_15, window_bounds = array<i64: 3, 1, 32>}, {pipeline_mode = #tpu.pipeline_mode<synchronous>, transform_indices = @transform_16, window_bounds = array<i64: 3, 1, 32>}, {pipeline_mode = #tpu.pipeline_mode<synchronous>, transform_indices = @transform_17, window_bounds = array<i64: 3, 1, 32>}, {transform_indices = @transform_18, window_bounds = array<i64: 1, 16, 32>}]} {
    %0 = arith.index_cast %arg0 : i32 to index
    %1 = memref.load %arg1[%0] : memref<2xi32, #tpu.memory_space<smem>>
    %2 = tpu.iota {dimensions = array<i32: 0>} : vector<16x1xi32>
    %3 = vector.broadcast %1 : i32 to vector<16x1xi32>
    %4 = arith.cmpi slt, %2, %3 : vector<16x1xi32>
    %5 = arith.extui %4 : vector<16x1xi1> to vector<16x1xi32>
    %6 = arith.sitofp %5 : vector<16x1xi32> to vector<16x1xf32>
    %7 = tpu.iota {dimensions = array<i32: 1>} : vector<1x16xi32>
    %8 = vector.broadcast %1 : i32 to vector<1x16xi32>
    %9 = arith.cmpi slt, %7, %8 : vector<1x16xi32>
    %10 = arith.extui %9 : vector<1x16xi1> to vector<1x16xi32>
    %11 = arith.sitofp %10 : vector<1x16xi32> to vector<1x16xf32>
    %12 = vector.broadcast %6 : vector<16x1xf32> to vector<16x16xf32>
    %13 = vector.broadcast %11 : vector<1x16xf32> to vector<16x16xf32>
    %14 = arith.mulf %12, %13 : vector<16x16xf32>
    %cst = arith.constant 1.000000e+00 : f32
    %15 = vector.broadcast %cst : f32 to vector<16x16xf32>
    %16 = arith.subf %14, %15 : vector<16x16xf32>
    %cst_0 = arith.constant 1.000000e+04 : f32
    %17 = vector.broadcast %cst_0 : f32 to vector<16x16xf32>
    %18 = arith.mulf %16, %17 : vector<16x16xf32>
    %19 = tpu.iota {dimensions = array<i32: 0>} : vector<16x16xi32>
    %20 = tpu.iota {dimensions = array<i32: 1>} : vector<16x16xi32>
    %21 = arith.subi %20, %19 : vector<16x16xi32>
    %c4_i32 = arith.constant 4 : i32
    %22 = vector.broadcast %c4_i32 : i32 to vector<16x16xi32>
    %23 = arith.addi %21, %22 : vector<16x16xi32>
    %c0_i32 = arith.constant 0 : i32
    %24 = vector.broadcast %c0_i32 : i32 to vector<16x16xi32>
    %25 = arith.cmpi eq, %23, %24 : vector<16x16xi32>
    %26 = arith.extui %25 : vector<16x16xi1> to vector<16x16xi32>
    %27 = arith.sitofp %26 : vector<16x16xi32> to vector<16x16xf32>
    %c1_i32 = arith.constant 1 : i32
    %28 = vector.broadcast %c1_i32 : i32 to vector<16x16xi32>
    %29 = arith.cmpi eq, %23, %28 : vector<16x16xi32>
    %30 = arith.extui %29 : vector<16x16xi1> to vector<16x16xi32>
    %31 = arith.sitofp %30 : vector<16x16xi32> to vector<16x16xf32>
    %c2_i32 = arith.constant 2 : i32
    %32 = vector.broadcast %c2_i32 : i32 to vector<16x16xi32>
    %33 = arith.cmpi eq, %23, %32 : vector<16x16xi32>
    %34 = arith.extui %33 : vector<16x16xi1> to vector<16x16xi32>
    %35 = arith.sitofp %34 : vector<16x16xi32> to vector<16x16xf32>
    %c3_i32 = arith.constant 3 : i32
    %36 = vector.broadcast %c3_i32 : i32 to vector<16x16xi32>
    %37 = arith.cmpi eq, %23, %36 : vector<16x16xi32>
    %38 = arith.extui %37 : vector<16x16xi1> to vector<16x16xi32>
    %39 = arith.sitofp %38 : vector<16x16xi32> to vector<16x16xf32>
    %c4_i32_1 = arith.constant 4 : i32
    %40 = vector.broadcast %c4_i32_1 : i32 to vector<16x16xi32>
    %41 = arith.cmpi eq, %23, %40 : vector<16x16xi32>
    %42 = arith.extui %41 : vector<16x16xi1> to vector<16x16xi32>
    %43 = arith.sitofp %42 : vector<16x16xi32> to vector<16x16xf32>
    %c5_i32 = arith.constant 5 : i32
    %44 = vector.broadcast %c5_i32 : i32 to vector<16x16xi32>
    %45 = arith.cmpi eq, %23, %44 : vector<16x16xi32>
    %46 = arith.extui %45 : vector<16x16xi1> to vector<16x16xi32>
    %47 = arith.sitofp %46 : vector<16x16xi32> to vector<16x16xf32>
    %c6_i32 = arith.constant 6 : i32
    %48 = vector.broadcast %c6_i32 : i32 to vector<16x16xi32>
    %49 = arith.cmpi eq, %23, %48 : vector<16x16xi32>
    %50 = arith.extui %49 : vector<16x16xi1> to vector<16x16xi32>
    %51 = arith.sitofp %50 : vector<16x16xi32> to vector<16x16xf32>
    %c7_i32 = arith.constant 7 : i32
    %52 = vector.broadcast %c7_i32 : i32 to vector<16x16xi32>
    %53 = arith.cmpi eq, %23, %52 : vector<16x16xi32>
    %54 = arith.extui %53 : vector<16x16xi1> to vector<16x16xi32>
    %55 = arith.sitofp %54 : vector<16x16xi32> to vector<16x16xf32>
    %c8_i32 = arith.constant 8 : i32
    %56 = vector.broadcast %c8_i32 : i32 to vector<16x16xi32>
    %57 = arith.cmpi eq, %23, %56 : vector<16x16xi32>
    %58 = arith.extui %57 : vector<16x16xi1> to vector<16x16xi32>
    %59 = arith.sitofp %58 : vector<16x16xi32> to vector<16x16xf32>
    %60 = tpu.iota {dimensions = array<i32: 1>} : vector<1x9xi32>
    %c0_i32_2 = arith.constant 0 : i32
    %61 = vector.broadcast %c0_i32_2 : i32 to vector<1x9xi32>
    %62 = arith.cmpi eq, %60, %61 : vector<1x9xi32>
    %63 = arith.extui %62 : vector<1x9xi1> to vector<1x9xi32>
    %64 = arith.sitofp %63 : vector<1x9xi32> to vector<1x9xf32>
    %c1_i32_3 = arith.constant 1 : i32
    %65 = vector.broadcast %c1_i32_3 : i32 to vector<1x9xi32>
    %66 = arith.cmpi eq, %60, %65 : vector<1x9xi32>
    %67 = arith.extui %66 : vector<1x9xi1> to vector<1x9xi32>
    %68 = arith.sitofp %67 : vector<1x9xi32> to vector<1x9xf32>
    %c2_i32_4 = arith.constant 2 : i32
    %69 = vector.broadcast %c2_i32_4 : i32 to vector<1x9xi32>
    %70 = arith.cmpi eq, %60, %69 : vector<1x9xi32>
    %71 = arith.extui %70 : vector<1x9xi1> to vector<1x9xi32>
    %72 = arith.sitofp %71 : vector<1x9xi32> to vector<1x9xf32>
    %c3_i32_5 = arith.constant 3 : i32
    %73 = vector.broadcast %c3_i32_5 : i32 to vector<1x9xi32>
    %74 = arith.cmpi eq, %60, %73 : vector<1x9xi32>
    %75 = arith.extui %74 : vector<1x9xi1> to vector<1x9xi32>
    %76 = arith.sitofp %75 : vector<1x9xi32> to vector<1x9xf32>
    %c4_i32_6 = arith.constant 4 : i32
    %77 = vector.broadcast %c4_i32_6 : i32 to vector<1x9xi32>
    %78 = arith.cmpi eq, %60, %77 : vector<1x9xi32>
    %79 = arith.extui %78 : vector<1x9xi1> to vector<1x9xi32>
    %80 = arith.sitofp %79 : vector<1x9xi32> to vector<1x9xf32>
    %c5_i32_7 = arith.constant 5 : i32
    %81 = vector.broadcast %c5_i32_7 : i32 to vector<1x9xi32>
    %82 = arith.cmpi eq, %60, %81 : vector<1x9xi32>
    %83 = arith.extui %82 : vector<1x9xi1> to vector<1x9xi32>
    %84 = arith.sitofp %83 : vector<1x9xi32> to vector<1x9xf32>
    %c6_i32_8 = arith.constant 6 : i32
    %85 = vector.broadcast %c6_i32_8 : i32 to vector<1x9xi32>
    %86 = arith.cmpi eq, %60, %85 : vector<1x9xi32>
    %87 = arith.extui %86 : vector<1x9xi1> to vector<1x9xi32>
    %88 = arith.sitofp %87 : vector<1x9xi32> to vector<1x9xf32>
    %c7_i32_9 = arith.constant 7 : i32
    %89 = vector.broadcast %c7_i32_9 : i32 to vector<1x9xi32>
    %90 = arith.cmpi eq, %60, %89 : vector<1x9xi32>
    %91 = arith.extui %90 : vector<1x9xi1> to vector<1x9xi32>
    %92 = arith.sitofp %91 : vector<1x9xi32> to vector<1x9xf32>
    %c8_i32_10 = arith.constant 8 : i32
    %93 = vector.broadcast %c8_i32_10 : i32 to vector<1x9xi32>
    %94 = arith.cmpi eq, %60, %93 : vector<1x9xi32>
    %95 = arith.extui %94 : vector<1x9xi1> to vector<1x9xi32>
    %96 = arith.sitofp %95 : vector<1x9xi32> to vector<1x9xf32>
    %c0 = arith.constant 0 : index
    %c0_11 = arith.constant 0 : index
    %c0_12 = arith.constant 0 : index
    %97 = vector.load %arg3[%c0, %c0_11, %c0_12] : memref<1x1x256xf32, #tpu.memory_space<vmem>>, vector<1x1x256xf32>
    %98 = vector.shape_cast %97 : vector<1x1x256xf32> to vector<1x256xf32>
    %99 = arith.truncf %98 : vector<1x256xf32> to vector<1x256xbf16>
    %c0_13 = arith.constant 0 : index
    %c0_14 = arith.constant 0 : index
    %100 = vector.load %arg4[%c0_13, %c0_14] : memref<256x32xbf16, #tpu.memory_space<vmem>>, vector<256x32xbf16>
    %cst_15 = arith.constant dense<0.000000e+00> : vector<1x32xf32>
    %101 = tpu.matmul %99, %100, %cst_15 {dimension_numbers = #tpu.dot_dimension_numbers<[1], [0], [0], [1], [0, 0, 1, 1], [], []>} : vector<1x256xbf16>, vector<256x32xbf16>, vector<1x32xf32> -> vector<1x32xf32>
    %c0_16 = arith.constant 0 : index
    %c0_17 = arith.constant 0 : index
    %102 = vector.load %arg5[%c0_16, %c0_17] : memref<1x32xf32, #tpu.memory_space<vmem>>, vector<1x32xf32>
    %103 = arith.addf %101, %102 : vector<1x32xf32>
    %c0_18 = arith.constant 0 : index
    %c0_19 = arith.constant 0 : index
    %c0_20 = arith.constant 0 : index
    %104 = vector.load %arg2[%c0_18, %c0_19, %c0_20] : memref<1x16x32xf32, #tpu.memory_space<vmem>>, vector<1x16x32xf32>
    %105 = vector.shape_cast %104 : vector<1x16x32xf32> to vector<16x32xf32>
    %106 = vector.broadcast %103 : vector<1x32xf32> to vector<16x32xf32>
    %107 = arith.addf %105, %106 : vector<16x32xf32>
    %108 = vector.broadcast %6 : vector<16x1xf32> to vector<16x32xf32>
    %109 = arith.mulf %107, %108 : vector<16x32xf32>
    %110 = arith.truncf %109 : vector<16x32xf32> to vector<16x32xbf16>
    %c0_21 = arith.constant 0 : index
    %c0_22 = arith.constant 0 : index
    %c0_23 = arith.constant 0 : index
    %111 = vector.load %arg6[%c0_21, %c0_22, %c0_23] : memref<3x32x96xbf16, #tpu.memory_space<vmem>>, vector<1x32x96xbf16>
    %112 = vector.shape_cast %111 : vector<1x32x96xbf16> to vector<32x96xbf16>
    %cst_24 = arith.constant dense<0.000000e+00> : vector<16x96xf32>
    %113 = tpu.matmul %110, %112, %cst_24 {dimension_numbers = #tpu.dot_dimension_numbers<[1], [0], [0], [1], [0, 0, 1, 1], [], []>} : vector<16x32xbf16>, vector<32x96xbf16>, vector<16x96xf32> -> vector<16x96xf32>
    %c0_25 = arith.constant 0 : index
    %c0_26 = arith.constant 0 : index
    %c0_27 = arith.constant 0 : index
    %114 = vector.load %arg7[%c0_25, %c0_26, %c0_27] : memref<3x1x96xf32, #tpu.memory_space<vmem>>, vector<1x1x96xf32>
    %115 = vector.shape_cast %114 : vector<1x1x96xf32> to vector<1x96xf32>
    %116 = vector.broadcast %115 : vector<1x96xf32> to vector<16x96xf32>
    %117 = arith.addf %113, %116 : vector<16x96xf32>
    %118 = vector.extract_strided_slice %117 {offsets = [0, 0], sizes = [16, 32], strides = [1, 1]} : vector<16x96xf32> to vector<16x32xf32>
    %cst_28 = arith.constant 2.500000e-01 : f32
    %119 = vector.broadcast %cst_28 : f32 to vector<16x32xf32>
    %120 = arith.mulf %118, %119 : vector<16x32xf32>
    %121 = arith.truncf %120 : vector<16x32xf32> to vector<16x32xbf16>
    %122 = vector.extract_strided_slice %117 {offsets = [0, 32], sizes = [16, 32], strides = [1, 1]} : vector<16x96xf32> to vector<16x32xf32>
    %123 = arith.truncf %122 : vector<16x32xf32> to vector<16x32xbf16>
    %124 = vector.extract_strided_slice %117 {offsets = [0, 64], sizes = [16, 32], strides = [1, 1]} : vector<16x96xf32> to vector<16x32xf32>
    %125 = arith.truncf %124 : vector<16x32xf32> to vector<16x32xbf16>
    %c0_29 = arith.constant 0 : index
    %c0_30 = arith.constant 0 : index
    %c0_31 = arith.constant 0 : index
    %126 = vector.load %arg10[%c0_29, %c0_30, %c0_31] : memref<3x32x18xbf16, #tpu.memory_space<vmem>>, vector<1x32x18xbf16>
    %127 = vector.shape_cast %126 : vector<1x32x18xbf16> to vector<32x18xbf16>
    %cst_32 = arith.constant dense<0.000000e+00> : vector<16x18xf32>
    %128 = tpu.matmul %121, %127, %cst_32 {dimension_numbers = #tpu.dot_dimension_numbers<[1], [0], [0], [1], [0, 0, 1, 1], [], []>} : vector<16x32xbf16>, vector<32x18xbf16>, vector<16x18xf32> -> vector<16x18xf32>
    %129 = vector.extract_strided_slice %121 {offsets = [0, 0], sizes = [16, 16], strides = [1, 1]} : vector<16x32xbf16> to vector<16x16xbf16>
    %130 = vector.extract_strided_slice %123 {offsets = [0, 0], sizes = [16, 16], strides = [1, 1]} : vector<16x32xbf16> to vector<16x16xbf16>
    %131 = vector.extract_strided_slice %125 {offsets = [0, 0], sizes = [16, 16], strides = [1, 1]} : vector<16x32xbf16> to vector<16x16xbf16>
    %cst_33 = arith.constant dense<0.000000e+00> : vector<16x16xf32>
    %132 = tpu.matmul %129, %130, %cst_33 {dimension_numbers = #tpu.dot_dimension_numbers<[1], [1], [0], [0], [0, 0, 1, 0], [], []>} : vector<16x16xbf16>, vector<16x16xbf16>, vector<16x16xf32> -> vector<16x16xf32>
    %133 = vector.extract_strided_slice %128 {offsets = [0, 0], sizes = [16, 9], strides = [1, 1]} : vector<16x18xf32> to vector<16x9xf32>
    %134 = vector.extract_strided_slice %133 {offsets = [0, 0], sizes = [16, 1], strides = [1, 1]} : vector<16x9xf32> to vector<16x1xf32>
    %135 = vector.broadcast %134 : vector<16x1xf32> to vector<16x16xf32>
    %136 = arith.mulf %135, %27 : vector<16x16xf32>
    %137 = arith.addf %132, %136 : vector<16x16xf32>
    %138 = vector.extract_strided_slice %133 {offsets = [0, 1], sizes = [16, 1], strides = [1, 1]} : vector<16x9xf32> to vector<16x1xf32>
    %139 = vector.broadcast %138 : vector<16x1xf32> to vector<16x16xf32>
    %140 = arith.mulf %139, %31 : vector<16x16xf32>
    %141 = arith.addf %137, %140 : vector<16x16xf32>
    %142 = vector.extract_strided_slice %133 {offsets = [0, 2], sizes = [16, 1], strides = [1, 1]} : vector<16x9xf32> to vector<16x1xf32>
    %143 = vector.broadcast %142 : vector<16x1xf32> to vector<16x16xf32>
    %144 = arith.mulf %143, %35 : vector<16x16xf32>
    %145 = arith.addf %141, %144 : vector<16x16xf32>
    %146 = vector.extract_strided_slice %133 {offsets = [0, 3], sizes = [16, 1], strides = [1, 1]} : vector<16x9xf32> to vector<16x1xf32>
    %147 = vector.broadcast %146 : vector<16x1xf32> to vector<16x16xf32>
    %148 = arith.mulf %147, %39 : vector<16x16xf32>
    %149 = arith.addf %145, %148 : vector<16x16xf32>
    %150 = vector.extract_strided_slice %133 {offsets = [0, 4], sizes = [16, 1], strides = [1, 1]} : vector<16x9xf32> to vector<16x1xf32>
    %151 = vector.broadcast %150 : vector<16x1xf32> to vector<16x16xf32>
    %152 = arith.mulf %151, %43 : vector<16x16xf32>
    %153 = arith.addf %149, %152 : vector<16x16xf32>
    %154 = vector.extract_strided_slice %133 {offsets = [0, 5], sizes = [16, 1], strides = [1, 1]} : vector<16x9xf32> to vector<16x1xf32>
    %155 = vector.broadcast %154 : vector<16x1xf32> to vector<16x16xf32>
    %156 = arith.mulf %155, %47 : vector<16x16xf32>
    %157 = arith.addf %153, %156 : vector<16x16xf32>
    %158 = vector.extract_strided_slice %133 {offsets = [0, 6], sizes = [16, 1], strides = [1, 1]} : vector<16x9xf32> to vector<16x1xf32>
    %159 = vector.broadcast %158 : vector<16x1xf32> to vector<16x16xf32>
    %160 = arith.mulf %159, %51 : vector<16x16xf32>
    %161 = arith.addf %157, %160 : vector<16x16xf32>
    %162 = vector.extract_strided_slice %133 {offsets = [0, 7], sizes = [16, 1], strides = [1, 1]} : vector<16x9xf32> to vector<16x1xf32>
    %163 = vector.broadcast %162 : vector<16x1xf32> to vector<16x16xf32>
    %164 = arith.mulf %163, %55 : vector<16x16xf32>
    %165 = arith.addf %161, %164 : vector<16x16xf32>
    %166 = vector.extract_strided_slice %133 {offsets = [0, 8], sizes = [16, 1], strides = [1, 1]} : vector<16x9xf32> to vector<16x1xf32>
    %167 = vector.broadcast %166 : vector<16x1xf32> to vector<16x16xf32>
    %168 = arith.mulf %167, %59 : vector<16x16xf32>
    %169 = arith.addf %165, %168 : vector<16x16xf32>
    %170 = arith.addf %169, %18 : vector<16x16xf32>
    %cst_34 = arith.constant dense<0xFF800000> : vector<16xf32>
    %171 = vector.multi_reduction <maximumf>, %170, %cst_34 [1] : vector<16x16xf32> to vector<16xf32>
    %172 = vector.shape_cast %171 : vector<16xf32> to vector<16x1xf32>
    %173 = vector.broadcast %172 : vector<16x1xf32> to vector<16x16xf32>
    %174 = arith.subf %170, %173 : vector<16x16xf32>
    %175 = math.exp %174 : vector<16x16xf32>
    %cst_35 = arith.constant dense<0.000000e+00> : vector<16xf32>
    %176 = vector.multi_reduction <add>, %175, %cst_35 [1] : vector<16x16xf32> to vector<16xf32>
    %177 = vector.shape_cast %176 : vector<16xf32> to vector<16x1xf32>
    %178 = vector.broadcast %177 : vector<16x1xf32> to vector<16x16xf32>
    %179 = arith.divf %175, %178 : vector<16x16xf32>
    %180 = arith.truncf %179 : vector<16x16xf32> to vector<16x16xbf16>
    %cst_36 = arith.constant dense<0.000000e+00> : vector<16x16xf32>
    %181 = tpu.matmul %180, %131, %cst_36 {dimension_numbers = #tpu.dot_dimension_numbers<[1], [0], [0], [1], [0, 0, 1, 1], [], []>} : vector<16x16xbf16>, vector<16x16xbf16>, vector<16x16xf32> -> vector<16x16xf32>
    %cst_37 = arith.constant 0.000000e+00 : f32
    %182 = vector.broadcast %cst_37 : f32 to vector<16x9xf32>
    %183 = arith.mulf %179, %27 : vector<16x16xf32>
    %cst_38 = arith.constant dense<0.000000e+00> : vector<16xf32>
    %184 = vector.multi_reduction <add>, %183, %cst_38 [1] : vector<16x16xf32> to vector<16xf32>
    %185 = vector.shape_cast %184 : vector<16xf32> to vector<16x1xf32>
    %186 = vector.broadcast %185 : vector<16x1xf32> to vector<16x9xf32>
    %187 = vector.broadcast %64 : vector<1x9xf32> to vector<16x9xf32>
    %188 = arith.mulf %186, %187 : vector<16x9xf32>
    %189 = arith.addf %182, %188 : vector<16x9xf32>
    %190 = arith.mulf %179, %31 : vector<16x16xf32>
    %cst_39 = arith.constant dense<0.000000e+00> : vector<16xf32>
    %191 = vector.multi_reduction <add>, %190, %cst_39 [1] : vector<16x16xf32> to vector<16xf32>
    %192 = vector.shape_cast %191 : vector<16xf32> to vector<16x1xf32>
    %193 = vector.broadcast %192 : vector<16x1xf32> to vector<16x9xf32>
    %194 = vector.broadcast %68 : vector<1x9xf32> to vector<16x9xf32>
    %195 = arith.mulf %193, %194 : vector<16x9xf32>
    %196 = arith.addf %189, %195 : vector<16x9xf32>
    %197 = arith.mulf %179, %35 : vector<16x16xf32>
    %cst_40 = arith.constant dense<0.000000e+00> : vector<16xf32>
    %198 = vector.multi_reduction <add>, %197, %cst_40 [1] : vector<16x16xf32> to vector<16xf32>
    %199 = vector.shape_cast %198 : vector<16xf32> to vector<16x1xf32>
    %200 = vector.broadcast %199 : vector<16x1xf32> to vector<16x9xf32>
    %201 = vector.broadcast %72 : vector<1x9xf32> to vector<16x9xf32>
    %202 = arith.mulf %200, %201 : vector<16x9xf32>
    %203 = arith.addf %196, %202 : vector<16x9xf32>
    %204 = arith.mulf %179, %39 : vector<16x16xf32>
    %cst_41 = arith.constant dense<0.000000e+00> : vector<16xf32>
    %205 = vector.multi_reduction <add>, %204, %cst_41 [1] : vector<16x16xf32> to vector<16xf32>
    %206 = vector.shape_cast %205 : vector<16xf32> to vector<16x1xf32>
    %207 = vector.broadcast %206 : vector<16x1xf32> to vector<16x9xf32>
    %208 = vector.broadcast %76 : vector<1x9xf32> to vector<16x9xf32>
    %209 = arith.mulf %207, %208 : vector<16x9xf32>
    %210 = arith.addf %203, %209 : vector<16x9xf32>
    %211 = arith.mulf %179, %43 : vector<16x16xf32>
    %cst_42 = arith.constant dense<0.000000e+00> : vector<16xf32>
    %212 = vector.multi_reduction <add>, %211, %cst_42 [1] : vector<16x16xf32> to vector<16xf32>
    %213 = vector.shape_cast %212 : vector<16xf32> to vector<16x1xf32>
    %214 = vector.broadcast %213 : vector<16x1xf32> to vector<16x9xf32>
    %215 = vector.broadcast %80 : vector<1x9xf32> to vector<16x9xf32>
    %216 = arith.mulf %214, %215 : vector<16x9xf32>
    %217 = arith.addf %210, %216 : vector<16x9xf32>
    %218 = arith.mulf %179, %47 : vector<16x16xf32>
    %cst_43 = arith.constant dense<0.000000e+00> : vector<16xf32>
    %219 = vector.multi_reduction <add>, %218, %cst_43 [1] : vector<16x16xf32> to vector<16xf32>
    %220 = vector.shape_cast %219 : vector<16xf32> to vector<16x1xf32>
    %221 = vector.broadcast %220 : vector<16x1xf32> to vector<16x9xf32>
    %222 = vector.broadcast %84 : vector<1x9xf32> to vector<16x9xf32>
    %223 = arith.mulf %221, %222 : vector<16x9xf32>
    %224 = arith.addf %217, %223 : vector<16x9xf32>
    %225 = arith.mulf %179, %51 : vector<16x16xf32>
    %cst_44 = arith.constant dense<0.000000e+00> : vector<16xf32>
    %226 = vector.multi_reduction <add>, %225, %cst_44 [1] : vector<16x16xf32> to vector<16xf32>
    %227 = vector.shape_cast %226 : vector<16xf32> to vector<16x1xf32>
    %228 = vector.broadcast %227 : vector<16x1xf32> to vector<16x9xf32>
    %229 = vector.broadcast %88 : vector<1x9xf32> to vector<16x9xf32>
    %230 = arith.mulf %228, %229 : vector<16x9xf32>
    %231 = arith.addf %224, %230 : vector<16x9xf32>
    %232 = arith.mulf %179, %55 : vector<16x16xf32>
    %cst_45 = arith.constant dense<0.000000e+00> : vector<16xf32>
    %233 = vector.multi_reduction <add>, %232, %cst_45 [1] : vector<16x16xf32> to vector<16xf32>
    %234 = vector.shape_cast %233 : vector<16xf32> to vector<16x1xf32>
    %235 = vector.broadcast %234 : vector<16x1xf32> to vector<16x9xf32>
    %236 = vector.broadcast %92 : vector<1x9xf32> to vector<16x9xf32>
    %237 = arith.mulf %235, %236 : vector<16x9xf32>
    %238 = arith.addf %231, %237 : vector<16x9xf32>
    %239 = arith.mulf %179, %59 : vector<16x16xf32>
    %cst_46 = arith.constant dense<0.000000e+00> : vector<16xf32>
    %240 = vector.multi_reduction <add>, %239, %cst_46 [1] : vector<16x16xf32> to vector<16xf32>
    %241 = vector.shape_cast %240 : vector<16xf32> to vector<16x1xf32>
    %242 = vector.broadcast %241 : vector<16x1xf32> to vector<16x9xf32>
    %243 = vector.broadcast %96 : vector<1x9xf32> to vector<16x9xf32>
    %244 = arith.mulf %242, %243 : vector<16x9xf32>
    %245 = arith.addf %238, %244 : vector<16x9xf32>
    %246 = vector.extract_strided_slice %121 {offsets = [0, 16], sizes = [16, 16], strides = [1, 1]} : vector<16x32xbf16> to vector<16x16xbf16>
    %247 = vector.extract_strided_slice %123 {offsets = [0, 16], sizes = [16, 16], strides = [1, 1]} : vector<16x32xbf16> to vector<16x16xbf16>
    %248 = vector.extract_strided_slice %125 {offsets = [0, 16], sizes = [16, 16], strides = [1, 1]} : vector<16x32xbf16> to vector<16x16xbf16>
    %cst_47 = arith.constant dense<0.000000e+00> : vector<16x16xf32>
    %249 = tpu.matmul %246, %247, %cst_47 {dimension_numbers = #tpu.dot_dimension_numbers<[1], [1], [0], [0], [0, 0, 1, 0], [], []>} : vector<16x16xbf16>, vector<16x16xbf16>, vector<16x16xf32> -> vector<16x16xf32>
    %250 = vector.extract_strided_slice %128 {offsets = [0, 9], sizes = [16, 9], strides = [1, 1]} : vector<16x18xf32> to vector<16x9xf32>
    %251 = vector.extract_strided_slice %250 {offsets = [0, 0], sizes = [16, 1], strides = [1, 1]} : vector<16x9xf32> to vector<16x1xf32>
    %252 = vector.broadcast %251 : vector<16x1xf32> to vector<16x16xf32>
    %253 = arith.mulf %252, %27 : vector<16x16xf32>
    %254 = arith.addf %249, %253 : vector<16x16xf32>
    %255 = vector.extract_strided_slice %250 {offsets = [0, 1], sizes = [16, 1], strides = [1, 1]} : vector<16x9xf32> to vector<16x1xf32>
    %256 = vector.broadcast %255 : vector<16x1xf32> to vector<16x16xf32>
    %257 = arith.mulf %256, %31 : vector<16x16xf32>
    %258 = arith.addf %254, %257 : vector<16x16xf32>
    %259 = vector.extract_strided_slice %250 {offsets = [0, 2], sizes = [16, 1], strides = [1, 1]} : vector<16x9xf32> to vector<16x1xf32>
    %260 = vector.broadcast %259 : vector<16x1xf32> to vector<16x16xf32>
    %261 = arith.mulf %260, %35 : vector<16x16xf32>
    %262 = arith.addf %258, %261 : vector<16x16xf32>
    %263 = vector.extract_strided_slice %250 {offsets = [0, 3], sizes = [16, 1], strides = [1, 1]} : vector<16x9xf32> to vector<16x1xf32>
    %264 = vector.broadcast %263 : vector<16x1xf32> to vector<16x16xf32>
    %265 = arith.mulf %264, %39 : vector<16x16xf32>
    %266 = arith.addf %262, %265 : vector<16x16xf32>
    %267 = vector.extract_strided_slice %250 {offsets = [0, 4], sizes = [16, 1], strides = [1, 1]} : vector<16x9xf32> to vector<16x1xf32>
    %268 = vector.broadcast %267 : vector<16x1xf32> to vector<16x16xf32>
    %269 = arith.mulf %268, %43 : vector<16x16xf32>
    %270 = arith.addf %266, %269 : vector<16x16xf32>
    %271 = vector.extract_strided_slice %250 {offsets = [0, 5], sizes = [16, 1], strides = [1, 1]} : vector<16x9xf32> to vector<16x1xf32>
    %272 = vector.broadcast %271 : vector<16x1xf32> to vector<16x16xf32>
    %273 = arith.mulf %272, %47 : vector<16x16xf32>
    %274 = arith.addf %270, %273 : vector<16x16xf32>
    %275 = vector.extract_strided_slice %250 {offsets = [0, 6], sizes = [16, 1], strides = [1, 1]} : vector<16x9xf32> to vector<16x1xf32>
    %276 = vector.broadcast %275 : vector<16x1xf32> to vector<16x16xf32>
    %277 = arith.mulf %276, %51 : vector<16x16xf32>
    %278 = arith.addf %274, %277 : vector<16x16xf32>
    %279 = vector.extract_strided_slice %250 {offsets = [0, 7], sizes = [16, 1], strides = [1, 1]} : vector<16x9xf32> to vector<16x1xf32>
    %280 = vector.broadcast %279 : vector<16x1xf32> to vector<16x16xf32>
    %281 = arith.mulf %280, %55 : vector<16x16xf32>
    %282 = arith.addf %278, %281 : vector<16x16xf32>
    %283 = vector.extract_strided_slice %250 {offsets = [0, 8], sizes = [16, 1], strides = [1, 1]} : vector<16x9xf32> to vector<16x1xf32>
    %284 = vector.broadcast %283 : vector<16x1xf32> to vector<16x16xf32>
    %285 = arith.mulf %284, %59 : vector<16x16xf32>
    %286 = arith.addf %282, %285 : vector<16x16xf32>
    %287 = arith.addf %286, %18 : vector<16x16xf32>
    %cst_48 = arith.constant dense<0xFF800000> : vector<16xf32>
    %288 = vector.multi_reduction <maximumf>, %287, %cst_48 [1] : vector<16x16xf32> to vector<16xf32>
    %289 = vector.shape_cast %288 : vector<16xf32> to vector<16x1xf32>
    %290 = vector.broadcast %289 : vector<16x1xf32> to vector<16x16xf32>
    %291 = arith.subf %287, %290 : vector<16x16xf32>
    %292 = math.exp %291 : vector<16x16xf32>
    %cst_49 = arith.constant dense<0.000000e+00> : vector<16xf32>
    %293 = vector.multi_reduction <add>, %292, %cst_49 [1] : vector<16x16xf32> to vector<16xf32>
    %294 = vector.shape_cast %293 : vector<16xf32> to vector<16x1xf32>
    %295 = vector.broadcast %294 : vector<16x1xf32> to vector<16x16xf32>
    %296 = arith.divf %292, %295 : vector<16x16xf32>
    %297 = arith.truncf %296 : vector<16x16xf32> to vector<16x16xbf16>
    %cst_50 = arith.constant dense<0.000000e+00> : vector<16x16xf32>
    %298 = tpu.matmul %297, %248, %cst_50 {dimension_numbers = #tpu.dot_dimension_numbers<[1], [0], [0], [1], [0, 0, 1, 1], [], []>} : vector<16x16xbf16>, vector<16x16xbf16>, vector<16x16xf32> -> vector<16x16xf32>
    %cst_51 = arith.constant 0.000000e+00 : f32
    %299 = vector.broadcast %cst_51 : f32 to vector<16x9xf32>
    %300 = arith.mulf %296, %27 : vector<16x16xf32>
    %cst_52 = arith.constant dense<0.000000e+00> : vector<16xf32>
    %301 = vector.multi_reduction <add>, %300, %cst_52 [1] : vector<16x16xf32> to vector<16xf32>
    %302 = vector.shape_cast %301 : vector<16xf32> to vector<16x1xf32>
    %303 = vector.broadcast %302 : vector<16x1xf32> to vector<16x9xf32>
    %304 = vector.broadcast %64 : vector<1x9xf32> to vector<16x9xf32>
    %305 = arith.mulf %303, %304 : vector<16x9xf32>
    %306 = arith.addf %299, %305 : vector<16x9xf32>
    %307 = arith.mulf %296, %31 : vector<16x16xf32>
    %cst_53 = arith.constant dense<0.000000e+00> : vector<16xf32>
    %308 = vector.multi_reduction <add>, %307, %cst_53 [1] : vector<16x16xf32> to vector<16xf32>
    %309 = vector.shape_cast %308 : vector<16xf32> to vector<16x1xf32>
    %310 = vector.broadcast %309 : vector<16x1xf32> to vector<16x9xf32>
    %311 = vector.broadcast %68 : vector<1x9xf32> to vector<16x9xf32>
    %312 = arith.mulf %310, %311 : vector<16x9xf32>
    %313 = arith.addf %306, %312 : vector<16x9xf32>
    %314 = arith.mulf %296, %35 : vector<16x16xf32>
    %cst_54 = arith.constant dense<0.000000e+00> : vector<16xf32>
    %315 = vector.multi_reduction <add>, %314, %cst_54 [1] : vector<16x16xf32> to vector<16xf32>
    %316 = vector.shape_cast %315 : vector<16xf32> to vector<16x1xf32>
    %317 = vector.broadcast %316 : vector<16x1xf32> to vector<16x9xf32>
    %318 = vector.broadcast %72 : vector<1x9xf32> to vector<16x9xf32>
    %319 = arith.mulf %317, %318 : vector<16x9xf32>
    %320 = arith.addf %313, %319 : vector<16x9xf32>
    %321 = arith.mulf %296, %39 : vector<16x16xf32>
    %cst_55 = arith.constant dense<0.000000e+00> : vector<16xf32>
    %322 = vector.multi_reduction <add>, %321, %cst_55 [1] : vector<16x16xf32> to vector<16xf32>
    %323 = vector.shape_cast %322 : vector<16xf32> to vector<16x1xf32>
    %324 = vector.broadcast %323 : vector<16x1xf32> to vector<16x9xf32>
    %325 = vector.broadcast %76 : vector<1x9xf32> to vector<16x9xf32>
    %326 = arith.mulf %324, %325 : vector<16x9xf32>
    %327 = arith.addf %320, %326 : vector<16x9xf32>
    %328 = arith.mulf %296, %43 : vector<16x16xf32>
    %cst_56 = arith.constant dense<0.000000e+00> : vector<16xf32>
    %329 = vector.multi_reduction <add>, %328, %cst_56 [1] : vector<16x16xf32> to vector<16xf32>
    %330 = vector.shape_cast %329 : vector<16xf32> to vector<16x1xf32>
    %331 = vector.broadcast %330 : vector<16x1xf32> to vector<16x9xf32>
    %332 = vector.broadcast %80 : vector<1x9xf32> to vector<16x9xf32>
    %333 = arith.mulf %331, %332 : vector<16x9xf32>
    %334 = arith.addf %327, %333 : vector<16x9xf32>
    %335 = arith.mulf %296, %47 : vector<16x16xf32>
    %cst_57 = arith.constant dense<0.000000e+00> : vector<16xf32>
    %336 = vector.multi_reduction <add>, %335, %cst_57 [1] : vector<16x16xf32> to vector<16xf32>
    %337 = vector.shape_cast %336 : vector<16xf32> to vector<16x1xf32>
    %338 = vector.broadcast %337 : vector<16x1xf32> to vector<16x9xf32>
    %339 = vector.broadcast %84 : vector<1x9xf32> to vector<16x9xf32>
    %340 = arith.mulf %338, %339 : vector<16x9xf32>
    %341 = arith.addf %334, %340 : vector<16x9xf32>
    %342 = arith.mulf %296, %51 : vector<16x16xf32>
    %cst_58 = arith.constant dense<0.000000e+00> : vector<16xf32>
    %343 = vector.multi_reduction <add>, %342, %cst_58 [1] : vector<16x16xf32> to vector<16xf32>
    %344 = vector.shape_cast %343 : vector<16xf32> to vector<16x1xf32>
    %345 = vector.broadcast %344 : vector<16x1xf32> to vector<16x9xf32>
    %346 = vector.broadcast %88 : vector<1x9xf32> to vector<16x9xf32>
    %347 = arith.mulf %345, %346 : vector<16x9xf32>
    %348 = arith.addf %341, %347 : vector<16x9xf32>
    %349 = arith.mulf %296, %55 : vector<16x16xf32>
    %cst_59 = arith.constant dense<0.000000e+00> : vector<16xf32>
    %350 = vector.multi_reduction <add>, %349, %cst_59 [1] : vector<16x16xf32> to vector<16xf32>
    %351 = vector.shape_cast %350 : vector<16xf32> to vector<16x1xf32>
    %352 = vector.broadcast %351 : vector<16x1xf32> to vector<16x9xf32>
    %353 = vector.broadcast %92 : vector<1x9xf32> to vector<16x9xf32>
    %354 = arith.mulf %352, %353 : vector<16x9xf32>
    %355 = arith.addf %348, %354 : vector<16x9xf32>
    %356 = arith.mulf %296, %59 : vector<16x16xf32>
    %cst_60 = arith.constant dense<0.000000e+00> : vector<16xf32>
    %357 = vector.multi_reduction <add>, %356, %cst_60 [1] : vector<16x16xf32> to vector<16xf32>
    %358 = vector.shape_cast %357 : vector<16xf32> to vector<16x1xf32>
    %359 = vector.broadcast %358 : vector<16x1xf32> to vector<16x9xf32>
    %360 = vector.broadcast %96 : vector<1x9xf32> to vector<16x9xf32>
    %361 = arith.mulf %359, %360 : vector<16x9xf32>
    %362 = arith.addf %355, %361 : vector<16x9xf32>
    %363 = tpu.concatenate %181, %298 in 1 : vector<16x16xf32>, vector<16x16xf32> -> vector<16x32xf32>
    %364 = tpu.concatenate %245, %362 in 1 : vector<16x9xf32>, vector<16x9xf32> -> vector<16x18xf32>
    %365 = arith.truncf %364 : vector<16x18xf32> to vector<16x18xbf16>
    %c0_61 = arith.constant 0 : index
    %c0_62 = arith.constant 0 : index
    %c0_63 = arith.constant 0 : index
    %366 = vector.load %arg11[%c0_61, %c0_62, %c0_63] : memref<3x18x32xbf16, #tpu.memory_space<vmem>>, vector<1x18x32xbf16>
    %367 = vector.shape_cast %366 : vector<1x18x32xbf16> to vector<18x32xbf16>
    %cst_64 = arith.constant dense<0.000000e+00> : vector<16x32xf32>
    %368 = tpu.matmul %365, %367, %cst_64 {dimension_numbers = #tpu.dot_dimension_numbers<[1], [0], [0], [1], [0, 0, 1, 1], [], []>} : vector<16x18xbf16>, vector<18x32xbf16>, vector<16x32xf32> -> vector<16x32xf32>
    %369 = arith.addf %363, %368 : vector<16x32xf32>
    %370 = arith.truncf %369 : vector<16x32xf32> to vector<16x32xbf16>
    %c0_65 = arith.constant 0 : index
    %c0_66 = arith.constant 0 : index
    %c0_67 = arith.constant 0 : index
    %371 = vector.load %arg8[%c0_65, %c0_66, %c0_67] : memref<3x32x32xbf16, #tpu.memory_space<vmem>>, vector<1x32x32xbf16>
    %372 = vector.shape_cast %371 : vector<1x32x32xbf16> to vector<32x32xbf16>
    %cst_68 = arith.constant dense<0.000000e+00> : vector<16x32xf32>
    %373 = tpu.matmul %370, %372, %cst_68 {dimension_numbers = #tpu.dot_dimension_numbers<[1], [0], [0], [1], [0, 0, 1, 1], [], []>} : vector<16x32xbf16>, vector<32x32xbf16>, vector<16x32xf32> -> vector<16x32xf32>
    %c0_69 = arith.constant 0 : index
    %c0_70 = arith.constant 0 : index
    %c0_71 = arith.constant 0 : index
    %374 = vector.load %arg9[%c0_69, %c0_70, %c0_71] : memref<3x1x32xf32, #tpu.memory_space<vmem>>, vector<1x1x32xf32>
    %375 = vector.shape_cast %374 : vector<1x1x32xf32> to vector<1x32xf32>
    %376 = vector.broadcast %375 : vector<1x32xf32> to vector<16x32xf32>
    %377 = arith.addf %373, %376 : vector<16x32xf32>
    %378 = arith.addf %109, %377 : vector<16x32xf32>
    %c0_72 = arith.constant 0 : index
    %c0_73 = arith.constant 0 : index
    %c0_74 = arith.constant 0 : index
    %379 = vector.load %arg12[%c0_72, %c0_73, %c0_74] : memref<3x1x32xf32, #tpu.memory_space<vmem>>, vector<1x1x32xf32>
    %380 = vector.shape_cast %379 : vector<1x1x32xf32> to vector<1x32xf32>
    %c0_75 = arith.constant 0 : index
    %c0_76 = arith.constant 0 : index
    %c0_77 = arith.constant 0 : index
    %381 = vector.load %arg13[%c0_75, %c0_76, %c0_77] : memref<3x1x32xf32, #tpu.memory_space<vmem>>, vector<1x1x32xf32>
    %382 = vector.shape_cast %381 : vector<1x1x32xf32> to vector<1x32xf32>
    %cst_78 = arith.constant dense<0.000000e+00> : vector<16xf32>
    %383 = vector.multi_reduction <add>, %378, %cst_78 [1] : vector<16x32xf32> to vector<16xf32>
    %384 = vector.shape_cast %383 : vector<16xf32> to vector<16x1xf32>
    %cst_79 = arith.constant 3.200000e+01 : f32
    %385 = vector.broadcast %cst_79 : f32 to vector<16x1xf32>
    %386 = arith.divf %384, %385 : vector<16x1xf32>
    %387 = vector.broadcast %386 : vector<16x1xf32> to vector<16x32xf32>
    %388 = arith.subf %378, %387 : vector<16x32xf32>
    %389 = arith.mulf %388, %388 : vector<16x32xf32>
    %cst_80 = arith.constant dense<0.000000e+00> : vector<16xf32>
    %390 = vector.multi_reduction <add>, %389, %cst_80 [1] : vector<16x32xf32> to vector<16xf32>
    %391 = vector.shape_cast %390 : vector<16xf32> to vector<16x1xf32>
    %cst_81 = arith.constant 3.200000e+01 : f32
    %392 = vector.broadcast %cst_81 : f32 to vector<16x1xf32>
    %393 = arith.divf %391, %392 : vector<16x1xf32>
    %cst_82 = arith.constant 9.99999974E-6 : f32
    %394 = vector.broadcast %cst_82 : f32 to vector<16x1xf32>
    %395 = arith.addf %393, %394 : vector<16x1xf32>
    %396 = math.rsqrt %395 : vector<16x1xf32>
    %397 = vector.broadcast %396 : vector<16x1xf32> to vector<16x32xf32>
    %398 = arith.mulf %388, %397 : vector<16x32xf32>
    %399 = vector.broadcast %380 : vector<1x32xf32> to vector<16x32xf32>
    %400 = arith.mulf %398, %399 : vector<16x32xf32>
    %401 = vector.broadcast %382 : vector<1x32xf32> to vector<16x32xf32>
    %402 = arith.addf %400, %401 : vector<16x32xf32>
    %403 = vector.broadcast %6 : vector<16x1xf32> to vector<16x32xf32>
    %404 = arith.mulf %402, %403 : vector<16x32xf32>
    %cst_83 = arith.constant 0.000000e+00 : f32
    %405 = vector.broadcast %cst_83 : f32 to vector<1x32xf32>
    %406 = vector.extract_strided_slice %404 {offsets = [0, 0], sizes = [15, 32], strides = [1, 1]} : vector<16x32xf32> to vector<15x32xf32>
    %407 = tpu.concatenate %405, %406 in 0 : vector<1x32xf32>, vector<15x32xf32> -> vector<16x32xf32>
    %cst_84 = arith.constant 0.000000e+00 : f32
    %408 = vector.broadcast %cst_84 : f32 to vector<1x32xf32>
    %409 = vector.extract_strided_slice %404 {offsets = [1, 0], sizes = [15, 32], strides = [1, 1]} : vector<16x32xf32> to vector<15x32xf32>
    %410 = tpu.concatenate %409, %408 in 0 : vector<15x32xf32>, vector<1x32xf32> -> vector<16x32xf32>
    %411 = tpu.concatenate %407, %404, %410 in 1 : vector<16x32xf32>, vector<16x32xf32>, vector<16x32xf32> -> vector<16x96xf32>
    %412 = arith.truncf %411 : vector<16x96xf32> to vector<16x96xbf16>
    %c0_85 = arith.constant 0 : index
    %c0_86 = arith.constant 0 : index
    %c0_87 = arith.constant 0 : index
    %413 = vector.load %arg14[%c0_85, %c0_86, %c0_87] : memref<3x96x64xbf16, #tpu.memory_space<vmem>>, vector<1x96x64xbf16>
    %414 = vector.shape_cast %413 : vector<1x96x64xbf16> to vector<96x64xbf16>
    %cst_88 = arith.constant dense<0.000000e+00> : vector<16x64xf32>
    %415 = tpu.matmul %412, %414, %cst_88 {dimension_numbers = #tpu.dot_dimension_numbers<[1], [0], [0], [1], [0, 0, 1, 1], [], []>} : vector<16x96xbf16>, vector<96x64xbf16>, vector<16x64xf32> -> vector<16x64xf32>
    %c0_89 = arith.constant 0 : index
    %c0_90 = arith.constant 0 : index
    %c0_91 = arith.constant 0 : index
    %416 = vector.load %arg15[%c0_89, %c0_90, %c0_91] : memref<3x1x64xf32, #tpu.memory_space<vmem>>, vector<1x1x64xf32>
    %417 = vector.shape_cast %416 : vector<1x1x64xf32> to vector<1x64xf32>
    %418 = vector.broadcast %417 : vector<1x64xf32> to vector<16x64xf32>
    %419 = arith.addf %415, %418 : vector<16x64xf32>
    %cst_92 = arith.constant 0.000000e+00 : f32
    %420 = vector.broadcast %cst_92 : f32 to vector<16x64xf32>
    %421 = arith.maximumf %419, %420 : vector<16x64xf32>
    %422 = vector.broadcast %6 : vector<16x1xf32> to vector<16x64xf32>
    %423 = arith.mulf %421, %422 : vector<16x64xf32>
    %cst_93 = arith.constant 0.000000e+00 : f32
    %424 = vector.broadcast %cst_93 : f32 to vector<1x64xf32>
    %425 = vector.extract_strided_slice %423 {offsets = [0, 0], sizes = [15, 64], strides = [1, 1]} : vector<16x64xf32> to vector<15x64xf32>
    %426 = tpu.concatenate %424, %425 in 0 : vector<1x64xf32>, vector<15x64xf32> -> vector<16x64xf32>
    %cst_94 = arith.constant 0.000000e+00 : f32
    %427 = vector.broadcast %cst_94 : f32 to vector<1x64xf32>
    %428 = vector.extract_strided_slice %423 {offsets = [1, 0], sizes = [15, 64], strides = [1, 1]} : vector<16x64xf32> to vector<15x64xf32>
    %429 = tpu.concatenate %428, %427 in 0 : vector<15x64xf32>, vector<1x64xf32> -> vector<16x64xf32>
    %430 = tpu.concatenate %426, %423, %429 in 1 : vector<16x64xf32>, vector<16x64xf32>, vector<16x64xf32> -> vector<16x192xf32>
    %431 = arith.truncf %430 : vector<16x192xf32> to vector<16x192xbf16>
    %c0_95 = arith.constant 0 : index
    %c0_96 = arith.constant 0 : index
    %c0_97 = arith.constant 0 : index
    %432 = vector.load %arg16[%c0_95, %c0_96, %c0_97] : memref<3x192x32xbf16, #tpu.memory_space<vmem>>, vector<1x192x32xbf16>
    %433 = vector.shape_cast %432 : vector<1x192x32xbf16> to vector<192x32xbf16>
    %cst_98 = arith.constant dense<0.000000e+00> : vector<16x32xf32>
    %434 = tpu.matmul %431, %433, %cst_98 {dimension_numbers = #tpu.dot_dimension_numbers<[1], [0], [0], [1], [0, 0, 1, 1], [], []>} : vector<16x192xbf16>, vector<192x32xbf16>, vector<16x32xf32> -> vector<16x32xf32>
    %c0_99 = arith.constant 0 : index
    %c0_100 = arith.constant 0 : index
    %c0_101 = arith.constant 0 : index
    %435 = vector.load %arg17[%c0_99, %c0_100, %c0_101] : memref<3x1x32xf32, #tpu.memory_space<vmem>>, vector<1x1x32xf32>
    %436 = vector.shape_cast %435 : vector<1x1x32xf32> to vector<1x32xf32>
    %437 = vector.broadcast %436 : vector<1x32xf32> to vector<16x32xf32>
    %438 = arith.addf %434, %437 : vector<16x32xf32>
    %439 = vector.broadcast %6 : vector<16x1xf32> to vector<16x32xf32>
    %440 = arith.mulf %438, %439 : vector<16x32xf32>
    %441 = arith.addf %402, %440 : vector<16x32xf32>
    %c0_102 = arith.constant 0 : index
    %c0_103 = arith.constant 0 : index
    %c0_104 = arith.constant 0 : index
    %442 = vector.load %arg18[%c0_102, %c0_103, %c0_104] : memref<3x1x32xf32, #tpu.memory_space<vmem>>, vector<1x1x32xf32>
    %443 = vector.shape_cast %442 : vector<1x1x32xf32> to vector<1x32xf32>
    %c0_105 = arith.constant 0 : index
    %c0_106 = arith.constant 0 : index
    %c0_107 = arith.constant 0 : index
    %444 = vector.load %arg19[%c0_105, %c0_106, %c0_107] : memref<3x1x32xf32, #tpu.memory_space<vmem>>, vector<1x1x32xf32>
    %445 = vector.shape_cast %444 : vector<1x1x32xf32> to vector<1x32xf32>
    %cst_108 = arith.constant dense<0.000000e+00> : vector<16xf32>
    %446 = vector.multi_reduction <add>, %441, %cst_108 [1] : vector<16x32xf32> to vector<16xf32>
    %447 = vector.shape_cast %446 : vector<16xf32> to vector<16x1xf32>
    %cst_109 = arith.constant 3.200000e+01 : f32
    %448 = vector.broadcast %cst_109 : f32 to vector<16x1xf32>
    %449 = arith.divf %447, %448 : vector<16x1xf32>
    %450 = vector.broadcast %449 : vector<16x1xf32> to vector<16x32xf32>
    %451 = arith.subf %441, %450 : vector<16x32xf32>
    %452 = arith.mulf %451, %451 : vector<16x32xf32>
    %cst_110 = arith.constant dense<0.000000e+00> : vector<16xf32>
    %453 = vector.multi_reduction <add>, %452, %cst_110 [1] : vector<16x32xf32> to vector<16xf32>
    %454 = vector.shape_cast %453 : vector<16xf32> to vector<16x1xf32>
    %cst_111 = arith.constant 3.200000e+01 : f32
    %455 = vector.broadcast %cst_111 : f32 to vector<16x1xf32>
    %456 = arith.divf %454, %455 : vector<16x1xf32>
    %cst_112 = arith.constant 9.99999974E-6 : f32
    %457 = vector.broadcast %cst_112 : f32 to vector<16x1xf32>
    %458 = arith.addf %456, %457 : vector<16x1xf32>
    %459 = math.rsqrt %458 : vector<16x1xf32>
    %460 = vector.broadcast %459 : vector<16x1xf32> to vector<16x32xf32>
    %461 = arith.mulf %451, %460 : vector<16x32xf32>
    %462 = vector.broadcast %443 : vector<1x32xf32> to vector<16x32xf32>
    %463 = arith.mulf %461, %462 : vector<16x32xf32>
    %464 = vector.broadcast %445 : vector<1x32xf32> to vector<16x32xf32>
    %465 = arith.addf %463, %464 : vector<16x32xf32>
    %466 = arith.truncf %465 : vector<16x32xf32> to vector<16x32xbf16>
    %c1 = arith.constant 1 : index
    %c0_113 = arith.constant 0 : index
    %c0_114 = arith.constant 0 : index
    %467 = vector.load %arg6[%c1, %c0_113, %c0_114] : memref<3x32x96xbf16, #tpu.memory_space<vmem>>, vector<1x32x96xbf16>
    %468 = vector.shape_cast %467 : vector<1x32x96xbf16> to vector<32x96xbf16>
    %cst_115 = arith.constant dense<0.000000e+00> : vector<16x96xf32>
    %469 = tpu.matmul %466, %468, %cst_115 {dimension_numbers = #tpu.dot_dimension_numbers<[1], [0], [0], [1], [0, 0, 1, 1], [], []>} : vector<16x32xbf16>, vector<32x96xbf16>, vector<16x96xf32> -> vector<16x96xf32>
    %c1_116 = arith.constant 1 : index
    %c0_117 = arith.constant 0 : index
    %c0_118 = arith.constant 0 : index
    %470 = vector.load %arg7[%c1_116, %c0_117, %c0_118] : memref<3x1x96xf32, #tpu.memory_space<vmem>>, vector<1x1x96xf32>
    %471 = vector.shape_cast %470 : vector<1x1x96xf32> to vector<1x96xf32>
    %472 = vector.broadcast %471 : vector<1x96xf32> to vector<16x96xf32>
    %473 = arith.addf %469, %472 : vector<16x96xf32>
    %474 = vector.extract_strided_slice %473 {offsets = [0, 0], sizes = [16, 32], strides = [1, 1]} : vector<16x96xf32> to vector<16x32xf32>
    %cst_119 = arith.constant 2.500000e-01 : f32
    %475 = vector.broadcast %cst_119 : f32 to vector<16x32xf32>
    %476 = arith.mulf %474, %475 : vector<16x32xf32>
    %477 = arith.truncf %476 : vector<16x32xf32> to vector<16x32xbf16>
    %478 = vector.extract_strided_slice %473 {offsets = [0, 32], sizes = [16, 32], strides = [1, 1]} : vector<16x96xf32> to vector<16x32xf32>
    %479 = arith.truncf %478 : vector<16x32xf32> to vector<16x32xbf16>
    %480 = vector.extract_strided_slice %473 {offsets = [0, 64], sizes = [16, 32], strides = [1, 1]} : vector<16x96xf32> to vector<16x32xf32>
    %481 = arith.truncf %480 : vector<16x32xf32> to vector<16x32xbf16>
    %c1_120 = arith.constant 1 : index
    %c0_121 = arith.constant 0 : index
    %c0_122 = arith.constant 0 : index
    %482 = vector.load %arg10[%c1_120, %c0_121, %c0_122] : memref<3x32x18xbf16, #tpu.memory_space<vmem>>, vector<1x32x18xbf16>
    %483 = vector.shape_cast %482 : vector<1x32x18xbf16> to vector<32x18xbf16>
    %cst_123 = arith.constant dense<0.000000e+00> : vector<16x18xf32>
    %484 = tpu.matmul %477, %483, %cst_123 {dimension_numbers = #tpu.dot_dimension_numbers<[1], [0], [0], [1], [0, 0, 1, 1], [], []>} : vector<16x32xbf16>, vector<32x18xbf16>, vector<16x18xf32> -> vector<16x18xf32>
    %485 = vector.extract_strided_slice %477 {offsets = [0, 0], sizes = [16, 16], strides = [1, 1]} : vector<16x32xbf16> to vector<16x16xbf16>
    %486 = vector.extract_strided_slice %479 {offsets = [0, 0], sizes = [16, 16], strides = [1, 1]} : vector<16x32xbf16> to vector<16x16xbf16>
    %487 = vector.extract_strided_slice %481 {offsets = [0, 0], sizes = [16, 16], strides = [1, 1]} : vector<16x32xbf16> to vector<16x16xbf16>
    %cst_124 = arith.constant dense<0.000000e+00> : vector<16x16xf32>
    %488 = tpu.matmul %485, %486, %cst_124 {dimension_numbers = #tpu.dot_dimension_numbers<[1], [1], [0], [0], [0, 0, 1, 0], [], []>} : vector<16x16xbf16>, vector<16x16xbf16>, vector<16x16xf32> -> vector<16x16xf32>
    %489 = vector.extract_strided_slice %484 {offsets = [0, 0], sizes = [16, 9], strides = [1, 1]} : vector<16x18xf32> to vector<16x9xf32>
    %490 = vector.extract_strided_slice %489 {offsets = [0, 0], sizes = [16, 1], strides = [1, 1]} : vector<16x9xf32> to vector<16x1xf32>
    %491 = vector.broadcast %490 : vector<16x1xf32> to vector<16x16xf32>
    %492 = arith.mulf %491, %27 : vector<16x16xf32>
    %493 = arith.addf %488, %492 : vector<16x16xf32>
    %494 = vector.extract_strided_slice %489 {offsets = [0, 1], sizes = [16, 1], strides = [1, 1]} : vector<16x9xf32> to vector<16x1xf32>
    %495 = vector.broadcast %494 : vector<16x1xf32> to vector<16x16xf32>
    %496 = arith.mulf %495, %31 : vector<16x16xf32>
    %497 = arith.addf %493, %496 : vector<16x16xf32>
    %498 = vector.extract_strided_slice %489 {offsets = [0, 2], sizes = [16, 1], strides = [1, 1]} : vector<16x9xf32> to vector<16x1xf32>
    %499 = vector.broadcast %498 : vector<16x1xf32> to vector<16x16xf32>
    %500 = arith.mulf %499, %35 : vector<16x16xf32>
    %501 = arith.addf %497, %500 : vector<16x16xf32>
    %502 = vector.extract_strided_slice %489 {offsets = [0, 3], sizes = [16, 1], strides = [1, 1]} : vector<16x9xf32> to vector<16x1xf32>
    %503 = vector.broadcast %502 : vector<16x1xf32> to vector<16x16xf32>
    %504 = arith.mulf %503, %39 : vector<16x16xf32>
    %505 = arith.addf %501, %504 : vector<16x16xf32>
    %506 = vector.extract_strided_slice %489 {offsets = [0, 4], sizes = [16, 1], strides = [1, 1]} : vector<16x9xf32> to vector<16x1xf32>
    %507 = vector.broadcast %506 : vector<16x1xf32> to vector<16x16xf32>
    %508 = arith.mulf %507, %43 : vector<16x16xf32>
    %509 = arith.addf %505, %508 : vector<16x16xf32>
    %510 = vector.extract_strided_slice %489 {offsets = [0, 5], sizes = [16, 1], strides = [1, 1]} : vector<16x9xf32> to vector<16x1xf32>
    %511 = vector.broadcast %510 : vector<16x1xf32> to vector<16x16xf32>
    %512 = arith.mulf %511, %47 : vector<16x16xf32>
    %513 = arith.addf %509, %512 : vector<16x16xf32>
    %514 = vector.extract_strided_slice %489 {offsets = [0, 6], sizes = [16, 1], strides = [1, 1]} : vector<16x9xf32> to vector<16x1xf32>
    %515 = vector.broadcast %514 : vector<16x1xf32> to vector<16x16xf32>
    %516 = arith.mulf %515, %51 : vector<16x16xf32>
    %517 = arith.addf %513, %516 : vector<16x16xf32>
    %518 = vector.extract_strided_slice %489 {offsets = [0, 7], sizes = [16, 1], strides = [1, 1]} : vector<16x9xf32> to vector<16x1xf32>
    %519 = vector.broadcast %518 : vector<16x1xf32> to vector<16x16xf32>
    %520 = arith.mulf %519, %55 : vector<16x16xf32>
    %521 = arith.addf %517, %520 : vector<16x16xf32>
    %522 = vector.extract_strided_slice %489 {offsets = [0, 8], sizes = [16, 1], strides = [1, 1]} : vector<16x9xf32> to vector<16x1xf32>
    %523 = vector.broadcast %522 : vector<16x1xf32> to vector<16x16xf32>
    %524 = arith.mulf %523, %59 : vector<16x16xf32>
    %525 = arith.addf %521, %524 : vector<16x16xf32>
    %526 = arith.addf %525, %18 : vector<16x16xf32>
    %cst_125 = arith.constant dense<0xFF800000> : vector<16xf32>
    %527 = vector.multi_reduction <maximumf>, %526, %cst_125 [1] : vector<16x16xf32> to vector<16xf32>
    %528 = vector.shape_cast %527 : vector<16xf32> to vector<16x1xf32>
    %529 = vector.broadcast %528 : vector<16x1xf32> to vector<16x16xf32>
    %530 = arith.subf %526, %529 : vector<16x16xf32>
    %531 = math.exp %530 : vector<16x16xf32>
    %cst_126 = arith.constant dense<0.000000e+00> : vector<16xf32>
    %532 = vector.multi_reduction <add>, %531, %cst_126 [1] : vector<16x16xf32> to vector<16xf32>
    %533 = vector.shape_cast %532 : vector<16xf32> to vector<16x1xf32>
    %534 = vector.broadcast %533 : vector<16x1xf32> to vector<16x16xf32>
    %535 = arith.divf %531, %534 : vector<16x16xf32>
    %536 = arith.truncf %535 : vector<16x16xf32> to vector<16x16xbf16>
    %cst_127 = arith.constant dense<0.000000e+00> : vector<16x16xf32>
    %537 = tpu.matmul %536, %487, %cst_127 {dimension_numbers = #tpu.dot_dimension_numbers<[1], [0], [0], [1], [0, 0, 1, 1], [], []>} : vector<16x16xbf16>, vector<16x16xbf16>, vector<16x16xf32> -> vector<16x16xf32>
    %cst_128 = arith.constant 0.000000e+00 : f32
    %538 = vector.broadcast %cst_128 : f32 to vector<16x9xf32>
    %539 = arith.mulf %535, %27 : vector<16x16xf32>
    %cst_129 = arith.constant dense<0.000000e+00> : vector<16xf32>
    %540 = vector.multi_reduction <add>, %539, %cst_129 [1] : vector<16x16xf32> to vector<16xf32>
    %541 = vector.shape_cast %540 : vector<16xf32> to vector<16x1xf32>
    %542 = vector.broadcast %541 : vector<16x1xf32> to vector<16x9xf32>
    %543 = vector.broadcast %64 : vector<1x9xf32> to vector<16x9xf32>
    %544 = arith.mulf %542, %543 : vector<16x9xf32>
    %545 = arith.addf %538, %544 : vector<16x9xf32>
    %546 = arith.mulf %535, %31 : vector<16x16xf32>
    %cst_130 = arith.constant dense<0.000000e+00> : vector<16xf32>
    %547 = vector.multi_reduction <add>, %546, %cst_130 [1] : vector<16x16xf32> to vector<16xf32>
    %548 = vector.shape_cast %547 : vector<16xf32> to vector<16x1xf32>
    %549 = vector.broadcast %548 : vector<16x1xf32> to vector<16x9xf32>
    %550 = vector.broadcast %68 : vector<1x9xf32> to vector<16x9xf32>
    %551 = arith.mulf %549, %550 : vector<16x9xf32>
    %552 = arith.addf %545, %551 : vector<16x9xf32>
    %553 = arith.mulf %535, %35 : vector<16x16xf32>
    %cst_131 = arith.constant dense<0.000000e+00> : vector<16xf32>
    %554 = vector.multi_reduction <add>, %553, %cst_131 [1] : vector<16x16xf32> to vector<16xf32>
    %555 = vector.shape_cast %554 : vector<16xf32> to vector<16x1xf32>
    %556 = vector.broadcast %555 : vector<16x1xf32> to vector<16x9xf32>
    %557 = vector.broadcast %72 : vector<1x9xf32> to vector<16x9xf32>
    %558 = arith.mulf %556, %557 : vector<16x9xf32>
    %559 = arith.addf %552, %558 : vector<16x9xf32>
    %560 = arith.mulf %535, %39 : vector<16x16xf32>
    %cst_132 = arith.constant dense<0.000000e+00> : vector<16xf32>
    %561 = vector.multi_reduction <add>, %560, %cst_132 [1] : vector<16x16xf32> to vector<16xf32>
    %562 = vector.shape_cast %561 : vector<16xf32> to vector<16x1xf32>
    %563 = vector.broadcast %562 : vector<16x1xf32> to vector<16x9xf32>
    %564 = vector.broadcast %76 : vector<1x9xf32> to vector<16x9xf32>
    %565 = arith.mulf %563, %564 : vector<16x9xf32>
    %566 = arith.addf %559, %565 : vector<16x9xf32>
    %567 = arith.mulf %535, %43 : vector<16x16xf32>
    %cst_133 = arith.constant dense<0.000000e+00> : vector<16xf32>
    %568 = vector.multi_reduction <add>, %567, %cst_133 [1] : vector<16x16xf32> to vector<16xf32>
    %569 = vector.shape_cast %568 : vector<16xf32> to vector<16x1xf32>
    %570 = vector.broadcast %569 : vector<16x1xf32> to vector<16x9xf32>
    %571 = vector.broadcast %80 : vector<1x9xf32> to vector<16x9xf32>
    %572 = arith.mulf %570, %571 : vector<16x9xf32>
    %573 = arith.addf %566, %572 : vector<16x9xf32>
    %574 = arith.mulf %535, %47 : vector<16x16xf32>
    %cst_134 = arith.constant dense<0.000000e+00> : vector<16xf32>
    %575 = vector.multi_reduction <add>, %574, %cst_134 [1] : vector<16x16xf32> to vector<16xf32>
    %576 = vector.shape_cast %575 : vector<16xf32> to vector<16x1xf32>
    %577 = vector.broadcast %576 : vector<16x1xf32> to vector<16x9xf32>
    %578 = vector.broadcast %84 : vector<1x9xf32> to vector<16x9xf32>
    %579 = arith.mulf %577, %578 : vector<16x9xf32>
    %580 = arith.addf %573, %579 : vector<16x9xf32>
    %581 = arith.mulf %535, %51 : vector<16x16xf32>
    %cst_135 = arith.constant dense<0.000000e+00> : vector<16xf32>
    %582 = vector.multi_reduction <add>, %581, %cst_135 [1] : vector<16x16xf32> to vector<16xf32>
    %583 = vector.shape_cast %582 : vector<16xf32> to vector<16x1xf32>
    %584 = vector.broadcast %583 : vector<16x1xf32> to vector<16x9xf32>
    %585 = vector.broadcast %88 : vector<1x9xf32> to vector<16x9xf32>
    %586 = arith.mulf %584, %585 : vector<16x9xf32>
    %587 = arith.addf %580, %586 : vector<16x9xf32>
    %588 = arith.mulf %535, %55 : vector<16x16xf32>
    %cst_136 = arith.constant dense<0.000000e+00> : vector<16xf32>
    %589 = vector.multi_reduction <add>, %588, %cst_136 [1] : vector<16x16xf32> to vector<16xf32>
    %590 = vector.shape_cast %589 : vector<16xf32> to vector<16x1xf32>
    %591 = vector.broadcast %590 : vector<16x1xf32> to vector<16x9xf32>
    %592 = vector.broadcast %92 : vector<1x9xf32> to vector<16x9xf32>
    %593 = arith.mulf %591, %592 : vector<16x9xf32>
    %594 = arith.addf %587, %593 : vector<16x9xf32>
    %595 = arith.mulf %535, %59 : vector<16x16xf32>
    %cst_137 = arith.constant dense<0.000000e+00> : vector<16xf32>
    %596 = vector.multi_reduction <add>, %595, %cst_137 [1] : vector<16x16xf32> to vector<16xf32>
    %597 = vector.shape_cast %596 : vector<16xf32> to vector<16x1xf32>
    %598 = vector.broadcast %597 : vector<16x1xf32> to vector<16x9xf32>
    %599 = vector.broadcast %96 : vector<1x9xf32> to vector<16x9xf32>
    %600 = arith.mulf %598, %599 : vector<16x9xf32>
    %601 = arith.addf %594, %600 : vector<16x9xf32>
    %602 = vector.extract_strided_slice %477 {offsets = [0, 16], sizes = [16, 16], strides = [1, 1]} : vector<16x32xbf16> to vector<16x16xbf16>
    %603 = vector.extract_strided_slice %479 {offsets = [0, 16], sizes = [16, 16], strides = [1, 1]} : vector<16x32xbf16> to vector<16x16xbf16>
    %604 = vector.extract_strided_slice %481 {offsets = [0, 16], sizes = [16, 16], strides = [1, 1]} : vector<16x32xbf16> to vector<16x16xbf16>
    %cst_138 = arith.constant dense<0.000000e+00> : vector<16x16xf32>
    %605 = tpu.matmul %602, %603, %cst_138 {dimension_numbers = #tpu.dot_dimension_numbers<[1], [1], [0], [0], [0, 0, 1, 0], [], []>} : vector<16x16xbf16>, vector<16x16xbf16>, vector<16x16xf32> -> vector<16x16xf32>
    %606 = vector.extract_strided_slice %484 {offsets = [0, 9], sizes = [16, 9], strides = [1, 1]} : vector<16x18xf32> to vector<16x9xf32>
    %607 = vector.extract_strided_slice %606 {offsets = [0, 0], sizes = [16, 1], strides = [1, 1]} : vector<16x9xf32> to vector<16x1xf32>
    %608 = vector.broadcast %607 : vector<16x1xf32> to vector<16x16xf32>
    %609 = arith.mulf %608, %27 : vector<16x16xf32>
    %610 = arith.addf %605, %609 : vector<16x16xf32>
    %611 = vector.extract_strided_slice %606 {offsets = [0, 1], sizes = [16, 1], strides = [1, 1]} : vector<16x9xf32> to vector<16x1xf32>
    %612 = vector.broadcast %611 : vector<16x1xf32> to vector<16x16xf32>
    %613 = arith.mulf %612, %31 : vector<16x16xf32>
    %614 = arith.addf %610, %613 : vector<16x16xf32>
    %615 = vector.extract_strided_slice %606 {offsets = [0, 2], sizes = [16, 1], strides = [1, 1]} : vector<16x9xf32> to vector<16x1xf32>
    %616 = vector.broadcast %615 : vector<16x1xf32> to vector<16x16xf32>
    %617 = arith.mulf %616, %35 : vector<16x16xf32>
    %618 = arith.addf %614, %617 : vector<16x16xf32>
    %619 = vector.extract_strided_slice %606 {offsets = [0, 3], sizes = [16, 1], strides = [1, 1]} : vector<16x9xf32> to vector<16x1xf32>
    %620 = vector.broadcast %619 : vector<16x1xf32> to vector<16x16xf32>
    %621 = arith.mulf %620, %39 : vector<16x16xf32>
    %622 = arith.addf %618, %621 : vector<16x16xf32>
    %623 = vector.extract_strided_slice %606 {offsets = [0, 4], sizes = [16, 1], strides = [1, 1]} : vector<16x9xf32> to vector<16x1xf32>
    %624 = vector.broadcast %623 : vector<16x1xf32> to vector<16x16xf32>
    %625 = arith.mulf %624, %43 : vector<16x16xf32>
    %626 = arith.addf %622, %625 : vector<16x16xf32>
    %627 = vector.extract_strided_slice %606 {offsets = [0, 5], sizes = [16, 1], strides = [1, 1]} : vector<16x9xf32> to vector<16x1xf32>
    %628 = vector.broadcast %627 : vector<16x1xf32> to vector<16x16xf32>
    %629 = arith.mulf %628, %47 : vector<16x16xf32>
    %630 = arith.addf %626, %629 : vector<16x16xf32>
    %631 = vector.extract_strided_slice %606 {offsets = [0, 6], sizes = [16, 1], strides = [1, 1]} : vector<16x9xf32> to vector<16x1xf32>
    %632 = vector.broadcast %631 : vector<16x1xf32> to vector<16x16xf32>
    %633 = arith.mulf %632, %51 : vector<16x16xf32>
    %634 = arith.addf %630, %633 : vector<16x16xf32>
    %635 = vector.extract_strided_slice %606 {offsets = [0, 7], sizes = [16, 1], strides = [1, 1]} : vector<16x9xf32> to vector<16x1xf32>
    %636 = vector.broadcast %635 : vector<16x1xf32> to vector<16x16xf32>
    %637 = arith.mulf %636, %55 : vector<16x16xf32>
    %638 = arith.addf %634, %637 : vector<16x16xf32>
    %639 = vector.extract_strided_slice %606 {offsets = [0, 8], sizes = [16, 1], strides = [1, 1]} : vector<16x9xf32> to vector<16x1xf32>
    %640 = vector.broadcast %639 : vector<16x1xf32> to vector<16x16xf32>
    %641 = arith.mulf %640, %59 : vector<16x16xf32>
    %642 = arith.addf %638, %641 : vector<16x16xf32>
    %643 = arith.addf %642, %18 : vector<16x16xf32>
    %cst_139 = arith.constant dense<0xFF800000> : vector<16xf32>
    %644 = vector.multi_reduction <maximumf>, %643, %cst_139 [1] : vector<16x16xf32> to vector<16xf32>
    %645 = vector.shape_cast %644 : vector<16xf32> to vector<16x1xf32>
    %646 = vector.broadcast %645 : vector<16x1xf32> to vector<16x16xf32>
    %647 = arith.subf %643, %646 : vector<16x16xf32>
    %648 = math.exp %647 : vector<16x16xf32>
    %cst_140 = arith.constant dense<0.000000e+00> : vector<16xf32>
    %649 = vector.multi_reduction <add>, %648, %cst_140 [1] : vector<16x16xf32> to vector<16xf32>
    %650 = vector.shape_cast %649 : vector<16xf32> to vector<16x1xf32>
    %651 = vector.broadcast %650 : vector<16x1xf32> to vector<16x16xf32>
    %652 = arith.divf %648, %651 : vector<16x16xf32>
    %653 = arith.truncf %652 : vector<16x16xf32> to vector<16x16xbf16>
    %cst_141 = arith.constant dense<0.000000e+00> : vector<16x16xf32>
    %654 = tpu.matmul %653, %604, %cst_141 {dimension_numbers = #tpu.dot_dimension_numbers<[1], [0], [0], [1], [0, 0, 1, 1], [], []>} : vector<16x16xbf16>, vector<16x16xbf16>, vector<16x16xf32> -> vector<16x16xf32>
    %cst_142 = arith.constant 0.000000e+00 : f32
    %655 = vector.broadcast %cst_142 : f32 to vector<16x9xf32>
    %656 = arith.mulf %652, %27 : vector<16x16xf32>
    %cst_143 = arith.constant dense<0.000000e+00> : vector<16xf32>
    %657 = vector.multi_reduction <add>, %656, %cst_143 [1] : vector<16x16xf32> to vector<16xf32>
    %658 = vector.shape_cast %657 : vector<16xf32> to vector<16x1xf32>
    %659 = vector.broadcast %658 : vector<16x1xf32> to vector<16x9xf32>
    %660 = vector.broadcast %64 : vector<1x9xf32> to vector<16x9xf32>
    %661 = arith.mulf %659, %660 : vector<16x9xf32>
    %662 = arith.addf %655, %661 : vector<16x9xf32>
    %663 = arith.mulf %652, %31 : vector<16x16xf32>
    %cst_144 = arith.constant dense<0.000000e+00> : vector<16xf32>
    %664 = vector.multi_reduction <add>, %663, %cst_144 [1] : vector<16x16xf32> to vector<16xf32>
    %665 = vector.shape_cast %664 : vector<16xf32> to vector<16x1xf32>
    %666 = vector.broadcast %665 : vector<16x1xf32> to vector<16x9xf32>
    %667 = vector.broadcast %68 : vector<1x9xf32> to vector<16x9xf32>
    %668 = arith.mulf %666, %667 : vector<16x9xf32>
    %669 = arith.addf %662, %668 : vector<16x9xf32>
    %670 = arith.mulf %652, %35 : vector<16x16xf32>
    %cst_145 = arith.constant dense<0.000000e+00> : vector<16xf32>
    %671 = vector.multi_reduction <add>, %670, %cst_145 [1] : vector<16x16xf32> to vector<16xf32>
    %672 = vector.shape_cast %671 : vector<16xf32> to vector<16x1xf32>
    %673 = vector.broadcast %672 : vector<16x1xf32> to vector<16x9xf32>
    %674 = vector.broadcast %72 : vector<1x9xf32> to vector<16x9xf32>
    %675 = arith.mulf %673, %674 : vector<16x9xf32>
    %676 = arith.addf %669, %675 : vector<16x9xf32>
    %677 = arith.mulf %652, %39 : vector<16x16xf32>
    %cst_146 = arith.constant dense<0.000000e+00> : vector<16xf32>
    %678 = vector.multi_reduction <add>, %677, %cst_146 [1] : vector<16x16xf32> to vector<16xf32>
    %679 = vector.shape_cast %678 : vector<16xf32> to vector<16x1xf32>
    %680 = vector.broadcast %679 : vector<16x1xf32> to vector<16x9xf32>
    %681 = vector.broadcast %76 : vector<1x9xf32> to vector<16x9xf32>
    %682 = arith.mulf %680, %681 : vector<16x9xf32>
    %683 = arith.addf %676, %682 : vector<16x9xf32>
    %684 = arith.mulf %652, %43 : vector<16x16xf32>
    %cst_147 = arith.constant dense<0.000000e+00> : vector<16xf32>
    %685 = vector.multi_reduction <add>, %684, %cst_147 [1] : vector<16x16xf32> to vector<16xf32>
    %686 = vector.shape_cast %685 : vector<16xf32> to vector<16x1xf32>
    %687 = vector.broadcast %686 : vector<16x1xf32> to vector<16x9xf32>
    %688 = vector.broadcast %80 : vector<1x9xf32> to vector<16x9xf32>
    %689 = arith.mulf %687, %688 : vector<16x9xf32>
    %690 = arith.addf %683, %689 : vector<16x9xf32>
    %691 = arith.mulf %652, %47 : vector<16x16xf32>
    %cst_148 = arith.constant dense<0.000000e+00> : vector<16xf32>
    %692 = vector.multi_reduction <add>, %691, %cst_148 [1] : vector<16x16xf32> to vector<16xf32>
    %693 = vector.shape_cast %692 : vector<16xf32> to vector<16x1xf32>
    %694 = vector.broadcast %693 : vector<16x1xf32> to vector<16x9xf32>
    %695 = vector.broadcast %84 : vector<1x9xf32> to vector<16x9xf32>
    %696 = arith.mulf %694, %695 : vector<16x9xf32>
    %697 = arith.addf %690, %696 : vector<16x9xf32>
    %698 = arith.mulf %652, %51 : vector<16x16xf32>
    %cst_149 = arith.constant dense<0.000000e+00> : vector<16xf32>
    %699 = vector.multi_reduction <add>, %698, %cst_149 [1] : vector<16x16xf32> to vector<16xf32>
    %700 = vector.shape_cast %699 : vector<16xf32> to vector<16x1xf32>
    %701 = vector.broadcast %700 : vector<16x1xf32> to vector<16x9xf32>
    %702 = vector.broadcast %88 : vector<1x9xf32> to vector<16x9xf32>
    %703 = arith.mulf %701, %702 : vector<16x9xf32>
    %704 = arith.addf %697, %703 : vector<16x9xf32>
    %705 = arith.mulf %652, %55 : vector<16x16xf32>
    %cst_150 = arith.constant dense<0.000000e+00> : vector<16xf32>
    %706 = vector.multi_reduction <add>, %705, %cst_150 [1] : vector<16x16xf32> to vector<16xf32>
    %707 = vector.shape_cast %706 : vector<16xf32> to vector<16x1xf32>
    %708 = vector.broadcast %707 : vector<16x1xf32> to vector<16x9xf32>
    %709 = vector.broadcast %92 : vector<1x9xf32> to vector<16x9xf32>
    %710 = arith.mulf %708, %709 : vector<16x9xf32>
    %711 = arith.addf %704, %710 : vector<16x9xf32>
    %712 = arith.mulf %652, %59 : vector<16x16xf32>
    %cst_151 = arith.constant dense<0.000000e+00> : vector<16xf32>
    %713 = vector.multi_reduction <add>, %712, %cst_151 [1] : vector<16x16xf32> to vector<16xf32>
    %714 = vector.shape_cast %713 : vector<16xf32> to vector<16x1xf32>
    %715 = vector.broadcast %714 : vector<16x1xf32> to vector<16x9xf32>
    %716 = vector.broadcast %96 : vector<1x9xf32> to vector<16x9xf32>
    %717 = arith.mulf %715, %716 : vector<16x9xf32>
    %718 = arith.addf %711, %717 : vector<16x9xf32>
    %719 = tpu.concatenate %537, %654 in 1 : vector<16x16xf32>, vector<16x16xf32> -> vector<16x32xf32>
    %720 = tpu.concatenate %601, %718 in 1 : vector<16x9xf32>, vector<16x9xf32> -> vector<16x18xf32>
    %721 = arith.truncf %720 : vector<16x18xf32> to vector<16x18xbf16>
    %c1_152 = arith.constant 1 : index
    %c0_153 = arith.constant 0 : index
    %c0_154 = arith.constant 0 : index
    %722 = vector.load %arg11[%c1_152, %c0_153, %c0_154] : memref<3x18x32xbf16, #tpu.memory_space<vmem>>, vector<1x18x32xbf16>
    %723 = vector.shape_cast %722 : vector<1x18x32xbf16> to vector<18x32xbf16>
    %cst_155 = arith.constant dense<0.000000e+00> : vector<16x32xf32>
    %724 = tpu.matmul %721, %723, %cst_155 {dimension_numbers = #tpu.dot_dimension_numbers<[1], [0], [0], [1], [0, 0, 1, 1], [], []>} : vector<16x18xbf16>, vector<18x32xbf16>, vector<16x32xf32> -> vector<16x32xf32>
    %725 = arith.addf %719, %724 : vector<16x32xf32>
    %726 = arith.truncf %725 : vector<16x32xf32> to vector<16x32xbf16>
    %c1_156 = arith.constant 1 : index
    %c0_157 = arith.constant 0 : index
    %c0_158 = arith.constant 0 : index
    %727 = vector.load %arg8[%c1_156, %c0_157, %c0_158] : memref<3x32x32xbf16, #tpu.memory_space<vmem>>, vector<1x32x32xbf16>
    %728 = vector.shape_cast %727 : vector<1x32x32xbf16> to vector<32x32xbf16>
    %cst_159 = arith.constant dense<0.000000e+00> : vector<16x32xf32>
    %729 = tpu.matmul %726, %728, %cst_159 {dimension_numbers = #tpu.dot_dimension_numbers<[1], [0], [0], [1], [0, 0, 1, 1], [], []>} : vector<16x32xbf16>, vector<32x32xbf16>, vector<16x32xf32> -> vector<16x32xf32>
    %c1_160 = arith.constant 1 : index
    %c0_161 = arith.constant 0 : index
    %c0_162 = arith.constant 0 : index
    %730 = vector.load %arg9[%c1_160, %c0_161, %c0_162] : memref<3x1x32xf32, #tpu.memory_space<vmem>>, vector<1x1x32xf32>
    %731 = vector.shape_cast %730 : vector<1x1x32xf32> to vector<1x32xf32>
    %732 = vector.broadcast %731 : vector<1x32xf32> to vector<16x32xf32>
    %733 = arith.addf %729, %732 : vector<16x32xf32>
    %734 = arith.addf %465, %733 : vector<16x32xf32>
    %c1_163 = arith.constant 1 : index
    %c0_164 = arith.constant 0 : index
    %c0_165 = arith.constant 0 : index
    %735 = vector.load %arg12[%c1_163, %c0_164, %c0_165] : memref<3x1x32xf32, #tpu.memory_space<vmem>>, vector<1x1x32xf32>
    %736 = vector.shape_cast %735 : vector<1x1x32xf32> to vector<1x32xf32>
    %c1_166 = arith.constant 1 : index
    %c0_167 = arith.constant 0 : index
    %c0_168 = arith.constant 0 : index
    %737 = vector.load %arg13[%c1_166, %c0_167, %c0_168] : memref<3x1x32xf32, #tpu.memory_space<vmem>>, vector<1x1x32xf32>
    %738 = vector.shape_cast %737 : vector<1x1x32xf32> to vector<1x32xf32>
    %cst_169 = arith.constant dense<0.000000e+00> : vector<16xf32>
    %739 = vector.multi_reduction <add>, %734, %cst_169 [1] : vector<16x32xf32> to vector<16xf32>
    %740 = vector.shape_cast %739 : vector<16xf32> to vector<16x1xf32>
    %cst_170 = arith.constant 3.200000e+01 : f32
    %741 = vector.broadcast %cst_170 : f32 to vector<16x1xf32>
    %742 = arith.divf %740, %741 : vector<16x1xf32>
    %743 = vector.broadcast %742 : vector<16x1xf32> to vector<16x32xf32>
    %744 = arith.subf %734, %743 : vector<16x32xf32>
    %745 = arith.mulf %744, %744 : vector<16x32xf32>
    %cst_171 = arith.constant dense<0.000000e+00> : vector<16xf32>
    %746 = vector.multi_reduction <add>, %745, %cst_171 [1] : vector<16x32xf32> to vector<16xf32>
    %747 = vector.shape_cast %746 : vector<16xf32> to vector<16x1xf32>
    %cst_172 = arith.constant 3.200000e+01 : f32
    %748 = vector.broadcast %cst_172 : f32 to vector<16x1xf32>
    %749 = arith.divf %747, %748 : vector<16x1xf32>
    %cst_173 = arith.constant 9.99999974E-6 : f32
    %750 = vector.broadcast %cst_173 : f32 to vector<16x1xf32>
    %751 = arith.addf %749, %750 : vector<16x1xf32>
    %752 = math.rsqrt %751 : vector<16x1xf32>
    %753 = vector.broadcast %752 : vector<16x1xf32> to vector<16x32xf32>
    %754 = arith.mulf %744, %753 : vector<16x32xf32>
    %755 = vector.broadcast %736 : vector<1x32xf32> to vector<16x32xf32>
    %756 = arith.mulf %754, %755 : vector<16x32xf32>
    %757 = vector.broadcast %738 : vector<1x32xf32> to vector<16x32xf32>
    %758 = arith.addf %756, %757 : vector<16x32xf32>
    %759 = vector.broadcast %6 : vector<16x1xf32> to vector<16x32xf32>
    %760 = arith.mulf %758, %759 : vector<16x32xf32>
    %cst_174 = arith.constant 0.000000e+00 : f32
    %761 = vector.broadcast %cst_174 : f32 to vector<1x32xf32>
    %762 = vector.extract_strided_slice %760 {offsets = [0, 0], sizes = [15, 32], strides = [1, 1]} : vector<16x32xf32> to vector<15x32xf32>
    %763 = tpu.concatenate %761, %762 in 0 : vector<1x32xf32>, vector<15x32xf32> -> vector<16x32xf32>
    %cst_175 = arith.constant 0.000000e+00 : f32
    %764 = vector.broadcast %cst_175 : f32 to vector<1x32xf32>
    %765 = vector.extract_strided_slice %760 {offsets = [1, 0], sizes = [15, 32], strides = [1, 1]} : vector<16x32xf32> to vector<15x32xf32>
    %766 = tpu.concatenate %765, %764 in 0 : vector<15x32xf32>, vector<1x32xf32> -> vector<16x32xf32>
    %767 = tpu.concatenate %763, %760, %766 in 1 : vector<16x32xf32>, vector<16x32xf32>, vector<16x32xf32> -> vector<16x96xf32>
    %768 = arith.truncf %767 : vector<16x96xf32> to vector<16x96xbf16>
    %c1_176 = arith.constant 1 : index
    %c0_177 = arith.constant 0 : index
    %c0_178 = arith.constant 0 : index
    %769 = vector.load %arg14[%c1_176, %c0_177, %c0_178] : memref<3x96x64xbf16, #tpu.memory_space<vmem>>, vector<1x96x64xbf16>
    %770 = vector.shape_cast %769 : vector<1x96x64xbf16> to vector<96x64xbf16>
    %cst_179 = arith.constant dense<0.000000e+00> : vector<16x64xf32>
    %771 = tpu.matmul %768, %770, %cst_179 {dimension_numbers = #tpu.dot_dimension_numbers<[1], [0], [0], [1], [0, 0, 1, 1], [], []>} : vector<16x96xbf16>, vector<96x64xbf16>, vector<16x64xf32> -> vector<16x64xf32>
    %c1_180 = arith.constant 1 : index
    %c0_181 = arith.constant 0 : index
    %c0_182 = arith.constant 0 : index
    %772 = vector.load %arg15[%c1_180, %c0_181, %c0_182] : memref<3x1x64xf32, #tpu.memory_space<vmem>>, vector<1x1x64xf32>
    %773 = vector.shape_cast %772 : vector<1x1x64xf32> to vector<1x64xf32>
    %774 = vector.broadcast %773 : vector<1x64xf32> to vector<16x64xf32>
    %775 = arith.addf %771, %774 : vector<16x64xf32>
    %cst_183 = arith.constant 0.000000e+00 : f32
    %776 = vector.broadcast %cst_183 : f32 to vector<16x64xf32>
    %777 = arith.maximumf %775, %776 : vector<16x64xf32>
    %778 = vector.broadcast %6 : vector<16x1xf32> to vector<16x64xf32>
    %779 = arith.mulf %777, %778 : vector<16x64xf32>
    %cst_184 = arith.constant 0.000000e+00 : f32
    %780 = vector.broadcast %cst_184 : f32 to vector<1x64xf32>
    %781 = vector.extract_strided_slice %779 {offsets = [0, 0], sizes = [15, 64], strides = [1, 1]} : vector<16x64xf32> to vector<15x64xf32>
    %782 = tpu.concatenate %780, %781 in 0 : vector<1x64xf32>, vector<15x64xf32> -> vector<16x64xf32>
    %cst_185 = arith.constant 0.000000e+00 : f32
    %783 = vector.broadcast %cst_185 : f32 to vector<1x64xf32>
    %784 = vector.extract_strided_slice %779 {offsets = [1, 0], sizes = [15, 64], strides = [1, 1]} : vector<16x64xf32> to vector<15x64xf32>
    %785 = tpu.concatenate %784, %783 in 0 : vector<15x64xf32>, vector<1x64xf32> -> vector<16x64xf32>
    %786 = tpu.concatenate %782, %779, %785 in 1 : vector<16x64xf32>, vector<16x64xf32>, vector<16x64xf32> -> vector<16x192xf32>
    %787 = arith.truncf %786 : vector<16x192xf32> to vector<16x192xbf16>
    %c1_186 = arith.constant 1 : index
    %c0_187 = arith.constant 0 : index
    %c0_188 = arith.constant 0 : index
    %788 = vector.load %arg16[%c1_186, %c0_187, %c0_188] : memref<3x192x32xbf16, #tpu.memory_space<vmem>>, vector<1x192x32xbf16>
    %789 = vector.shape_cast %788 : vector<1x192x32xbf16> to vector<192x32xbf16>
    %cst_189 = arith.constant dense<0.000000e+00> : vector<16x32xf32>
    %790 = tpu.matmul %787, %789, %cst_189 {dimension_numbers = #tpu.dot_dimension_numbers<[1], [0], [0], [1], [0, 0, 1, 1], [], []>} : vector<16x192xbf16>, vector<192x32xbf16>, vector<16x32xf32> -> vector<16x32xf32>
    %c1_190 = arith.constant 1 : index
    %c0_191 = arith.constant 0 : index
    %c0_192 = arith.constant 0 : index
    %791 = vector.load %arg17[%c1_190, %c0_191, %c0_192] : memref<3x1x32xf32, #tpu.memory_space<vmem>>, vector<1x1x32xf32>
    %792 = vector.shape_cast %791 : vector<1x1x32xf32> to vector<1x32xf32>
    %793 = vector.broadcast %792 : vector<1x32xf32> to vector<16x32xf32>
    %794 = arith.addf %790, %793 : vector<16x32xf32>
    %795 = vector.broadcast %6 : vector<16x1xf32> to vector<16x32xf32>
    %796 = arith.mulf %794, %795 : vector<16x32xf32>
    %797 = arith.addf %758, %796 : vector<16x32xf32>
    %c1_193 = arith.constant 1 : index
    %c0_194 = arith.constant 0 : index
    %c0_195 = arith.constant 0 : index
    %798 = vector.load %arg18[%c1_193, %c0_194, %c0_195] : memref<3x1x32xf32, #tpu.memory_space<vmem>>, vector<1x1x32xf32>
    %799 = vector.shape_cast %798 : vector<1x1x32xf32> to vector<1x32xf32>
    %c1_196 = arith.constant 1 : index
    %c0_197 = arith.constant 0 : index
    %c0_198 = arith.constant 0 : index
    %800 = vector.load %arg19[%c1_196, %c0_197, %c0_198] : memref<3x1x32xf32, #tpu.memory_space<vmem>>, vector<1x1x32xf32>
    %801 = vector.shape_cast %800 : vector<1x1x32xf32> to vector<1x32xf32>
    %cst_199 = arith.constant dense<0.000000e+00> : vector<16xf32>
    %802 = vector.multi_reduction <add>, %797, %cst_199 [1] : vector<16x32xf32> to vector<16xf32>
    %803 = vector.shape_cast %802 : vector<16xf32> to vector<16x1xf32>
    %cst_200 = arith.constant 3.200000e+01 : f32
    %804 = vector.broadcast %cst_200 : f32 to vector<16x1xf32>
    %805 = arith.divf %803, %804 : vector<16x1xf32>
    %806 = vector.broadcast %805 : vector<16x1xf32> to vector<16x32xf32>
    %807 = arith.subf %797, %806 : vector<16x32xf32>
    %808 = arith.mulf %807, %807 : vector<16x32xf32>
    %cst_201 = arith.constant dense<0.000000e+00> : vector<16xf32>
    %809 = vector.multi_reduction <add>, %808, %cst_201 [1] : vector<16x32xf32> to vector<16xf32>
    %810 = vector.shape_cast %809 : vector<16xf32> to vector<16x1xf32>
    %cst_202 = arith.constant 3.200000e+01 : f32
    %811 = vector.broadcast %cst_202 : f32 to vector<16x1xf32>
    %812 = arith.divf %810, %811 : vector<16x1xf32>
    %cst_203 = arith.constant 9.99999974E-6 : f32
    %813 = vector.broadcast %cst_203 : f32 to vector<16x1xf32>
    %814 = arith.addf %812, %813 : vector<16x1xf32>
    %815 = math.rsqrt %814 : vector<16x1xf32>
    %816 = vector.broadcast %815 : vector<16x1xf32> to vector<16x32xf32>
    %817 = arith.mulf %807, %816 : vector<16x32xf32>
    %818 = vector.broadcast %799 : vector<1x32xf32> to vector<16x32xf32>
    %819 = arith.mulf %817, %818 : vector<16x32xf32>
    %820 = vector.broadcast %801 : vector<1x32xf32> to vector<16x32xf32>
    %821 = arith.addf %819, %820 : vector<16x32xf32>
    %822 = vector.broadcast %6 : vector<16x1xf32> to vector<16x32xf32>
    %823 = arith.mulf %821, %822 : vector<16x32xf32>
    %824 = arith.truncf %823 : vector<16x32xf32> to vector<16x32xbf16>
    %c2 = arith.constant 2 : index
    %c0_204 = arith.constant 0 : index
    %c0_205 = arith.constant 0 : index
    %825 = vector.load %arg6[%c2, %c0_204, %c0_205] : memref<3x32x96xbf16, #tpu.memory_space<vmem>>, vector<1x32x96xbf16>
    %826 = vector.shape_cast %825 : vector<1x32x96xbf16> to vector<32x96xbf16>
    %cst_206 = arith.constant dense<0.000000e+00> : vector<16x96xf32>
    %827 = tpu.matmul %824, %826, %cst_206 {dimension_numbers = #tpu.dot_dimension_numbers<[1], [0], [0], [1], [0, 0, 1, 1], [], []>} : vector<16x32xbf16>, vector<32x96xbf16>, vector<16x96xf32> -> vector<16x96xf32>
    %c2_207 = arith.constant 2 : index
    %c0_208 = arith.constant 0 : index
    %c0_209 = arith.constant 0 : index
    %828 = vector.load %arg7[%c2_207, %c0_208, %c0_209] : memref<3x1x96xf32, #tpu.memory_space<vmem>>, vector<1x1x96xf32>
    %829 = vector.shape_cast %828 : vector<1x1x96xf32> to vector<1x96xf32>
    %830 = vector.broadcast %829 : vector<1x96xf32> to vector<16x96xf32>
    %831 = arith.addf %827, %830 : vector<16x96xf32>
    %832 = vector.extract_strided_slice %831 {offsets = [0, 0], sizes = [16, 32], strides = [1, 1]} : vector<16x96xf32> to vector<16x32xf32>
    %cst_210 = arith.constant 2.500000e-01 : f32
    %833 = vector.broadcast %cst_210 : f32 to vector<16x32xf32>
    %834 = arith.mulf %832, %833 : vector<16x32xf32>
    %835 = arith.truncf %834 : vector<16x32xf32> to vector<16x32xbf16>
    %836 = vector.extract_strided_slice %831 {offsets = [0, 32], sizes = [16, 32], strides = [1, 1]} : vector<16x96xf32> to vector<16x32xf32>
    %837 = arith.truncf %836 : vector<16x32xf32> to vector<16x32xbf16>
    %838 = vector.extract_strided_slice %831 {offsets = [0, 64], sizes = [16, 32], strides = [1, 1]} : vector<16x96xf32> to vector<16x32xf32>
    %839 = arith.truncf %838 : vector<16x32xf32> to vector<16x32xbf16>
    %c2_211 = arith.constant 2 : index
    %c0_212 = arith.constant 0 : index
    %c0_213 = arith.constant 0 : index
    %840 = vector.load %arg10[%c2_211, %c0_212, %c0_213] : memref<3x32x18xbf16, #tpu.memory_space<vmem>>, vector<1x32x18xbf16>
    %841 = vector.shape_cast %840 : vector<1x32x18xbf16> to vector<32x18xbf16>
    %cst_214 = arith.constant dense<0.000000e+00> : vector<16x18xf32>
    %842 = tpu.matmul %835, %841, %cst_214 {dimension_numbers = #tpu.dot_dimension_numbers<[1], [0], [0], [1], [0, 0, 1, 1], [], []>} : vector<16x32xbf16>, vector<32x18xbf16>, vector<16x18xf32> -> vector<16x18xf32>
    %843 = vector.extract_strided_slice %835 {offsets = [0, 0], sizes = [16, 16], strides = [1, 1]} : vector<16x32xbf16> to vector<16x16xbf16>
    %844 = vector.extract_strided_slice %837 {offsets = [0, 0], sizes = [16, 16], strides = [1, 1]} : vector<16x32xbf16> to vector<16x16xbf16>
    %845 = vector.extract_strided_slice %839 {offsets = [0, 0], sizes = [16, 16], strides = [1, 1]} : vector<16x32xbf16> to vector<16x16xbf16>
    %cst_215 = arith.constant dense<0.000000e+00> : vector<16x16xf32>
    %846 = tpu.matmul %843, %844, %cst_215 {dimension_numbers = #tpu.dot_dimension_numbers<[1], [1], [0], [0], [0, 0, 1, 0], [], []>} : vector<16x16xbf16>, vector<16x16xbf16>, vector<16x16xf32> -> vector<16x16xf32>
    %847 = vector.extract_strided_slice %842 {offsets = [0, 0], sizes = [16, 9], strides = [1, 1]} : vector<16x18xf32> to vector<16x9xf32>
    %848 = vector.extract_strided_slice %847 {offsets = [0, 0], sizes = [16, 1], strides = [1, 1]} : vector<16x9xf32> to vector<16x1xf32>
    %849 = vector.broadcast %848 : vector<16x1xf32> to vector<16x16xf32>
    %850 = arith.mulf %849, %27 : vector<16x16xf32>
    %851 = arith.addf %846, %850 : vector<16x16xf32>
    %852 = vector.extract_strided_slice %847 {offsets = [0, 1], sizes = [16, 1], strides = [1, 1]} : vector<16x9xf32> to vector<16x1xf32>
    %853 = vector.broadcast %852 : vector<16x1xf32> to vector<16x16xf32>
    %854 = arith.mulf %853, %31 : vector<16x16xf32>
    %855 = arith.addf %851, %854 : vector<16x16xf32>
    %856 = vector.extract_strided_slice %847 {offsets = [0, 2], sizes = [16, 1], strides = [1, 1]} : vector<16x9xf32> to vector<16x1xf32>
    %857 = vector.broadcast %856 : vector<16x1xf32> to vector<16x16xf32>
    %858 = arith.mulf %857, %35 : vector<16x16xf32>
    %859 = arith.addf %855, %858 : vector<16x16xf32>
    %860 = vector.extract_strided_slice %847 {offsets = [0, 3], sizes = [16, 1], strides = [1, 1]} : vector<16x9xf32> to vector<16x1xf32>
    %861 = vector.broadcast %860 : vector<16x1xf32> to vector<16x16xf32>
    %862 = arith.mulf %861, %39 : vector<16x16xf32>
    %863 = arith.addf %859, %862 : vector<16x16xf32>
    %864 = vector.extract_strided_slice %847 {offsets = [0, 4], sizes = [16, 1], strides = [1, 1]} : vector<16x9xf32> to vector<16x1xf32>
    %865 = vector.broadcast %864 : vector<16x1xf32> to vector<16x16xf32>
    %866 = arith.mulf %865, %43 : vector<16x16xf32>
    %867 = arith.addf %863, %866 : vector<16x16xf32>
    %868 = vector.extract_strided_slice %847 {offsets = [0, 5], sizes = [16, 1], strides = [1, 1]} : vector<16x9xf32> to vector<16x1xf32>
    %869 = vector.broadcast %868 : vector<16x1xf32> to vector<16x16xf32>
    %870 = arith.mulf %869, %47 : vector<16x16xf32>
    %871 = arith.addf %867, %870 : vector<16x16xf32>
    %872 = vector.extract_strided_slice %847 {offsets = [0, 6], sizes = [16, 1], strides = [1, 1]} : vector<16x9xf32> to vector<16x1xf32>
    %873 = vector.broadcast %872 : vector<16x1xf32> to vector<16x16xf32>
    %874 = arith.mulf %873, %51 : vector<16x16xf32>
    %875 = arith.addf %871, %874 : vector<16x16xf32>
    %876 = vector.extract_strided_slice %847 {offsets = [0, 7], sizes = [16, 1], strides = [1, 1]} : vector<16x9xf32> to vector<16x1xf32>
    %877 = vector.broadcast %876 : vector<16x1xf32> to vector<16x16xf32>
    %878 = arith.mulf %877, %55 : vector<16x16xf32>
    %879 = arith.addf %875, %878 : vector<16x16xf32>
    %880 = vector.extract_strided_slice %847 {offsets = [0, 8], sizes = [16, 1], strides = [1, 1]} : vector<16x9xf32> to vector<16x1xf32>
    %881 = vector.broadcast %880 : vector<16x1xf32> to vector<16x16xf32>
    %882 = arith.mulf %881, %59 : vector<16x16xf32>
    %883 = arith.addf %879, %882 : vector<16x16xf32>
    %884 = arith.addf %883, %18 : vector<16x16xf32>
    %cst_216 = arith.constant dense<0xFF800000> : vector<16xf32>
    %885 = vector.multi_reduction <maximumf>, %884, %cst_216 [1] : vector<16x16xf32> to vector<16xf32>
    %886 = vector.shape_cast %885 : vector<16xf32> to vector<16x1xf32>
    %887 = vector.broadcast %886 : vector<16x1xf32> to vector<16x16xf32>
    %888 = arith.subf %884, %887 : vector<16x16xf32>
    %889 = math.exp %888 : vector<16x16xf32>
    %cst_217 = arith.constant dense<0.000000e+00> : vector<16xf32>
    %890 = vector.multi_reduction <add>, %889, %cst_217 [1] : vector<16x16xf32> to vector<16xf32>
    %891 = vector.shape_cast %890 : vector<16xf32> to vector<16x1xf32>
    %892 = vector.broadcast %891 : vector<16x1xf32> to vector<16x16xf32>
    %893 = arith.divf %889, %892 : vector<16x16xf32>
    %894 = arith.truncf %893 : vector<16x16xf32> to vector<16x16xbf16>
    %cst_218 = arith.constant dense<0.000000e+00> : vector<16x16xf32>
    %895 = tpu.matmul %894, %845, %cst_218 {dimension_numbers = #tpu.dot_dimension_numbers<[1], [0], [0], [1], [0, 0, 1, 1], [], []>} : vector<16x16xbf16>, vector<16x16xbf16>, vector<16x16xf32> -> vector<16x16xf32>
    %cst_219 = arith.constant 0.000000e+00 : f32
    %896 = vector.broadcast %cst_219 : f32 to vector<16x9xf32>
    %897 = arith.mulf %893, %27 : vector<16x16xf32>
    %cst_220 = arith.constant dense<0.000000e+00> : vector<16xf32>
    %898 = vector.multi_reduction <add>, %897, %cst_220 [1] : vector<16x16xf32> to vector<16xf32>
    %899 = vector.shape_cast %898 : vector<16xf32> to vector<16x1xf32>
    %900 = vector.broadcast %899 : vector<16x1xf32> to vector<16x9xf32>
    %901 = vector.broadcast %64 : vector<1x9xf32> to vector<16x9xf32>
    %902 = arith.mulf %900, %901 : vector<16x9xf32>
    %903 = arith.addf %896, %902 : vector<16x9xf32>
    %904 = arith.mulf %893, %31 : vector<16x16xf32>
    %cst_221 = arith.constant dense<0.000000e+00> : vector<16xf32>
    %905 = vector.multi_reduction <add>, %904, %cst_221 [1] : vector<16x16xf32> to vector<16xf32>
    %906 = vector.shape_cast %905 : vector<16xf32> to vector<16x1xf32>
    %907 = vector.broadcast %906 : vector<16x1xf32> to vector<16x9xf32>
    %908 = vector.broadcast %68 : vector<1x9xf32> to vector<16x9xf32>
    %909 = arith.mulf %907, %908 : vector<16x9xf32>
    %910 = arith.addf %903, %909 : vector<16x9xf32>
    %911 = arith.mulf %893, %35 : vector<16x16xf32>
    %cst_222 = arith.constant dense<0.000000e+00> : vector<16xf32>
    %912 = vector.multi_reduction <add>, %911, %cst_222 [1] : vector<16x16xf32> to vector<16xf32>
    %913 = vector.shape_cast %912 : vector<16xf32> to vector<16x1xf32>
    %914 = vector.broadcast %913 : vector<16x1xf32> to vector<16x9xf32>
    %915 = vector.broadcast %72 : vector<1x9xf32> to vector<16x9xf32>
    %916 = arith.mulf %914, %915 : vector<16x9xf32>
    %917 = arith.addf %910, %916 : vector<16x9xf32>
    %918 = arith.mulf %893, %39 : vector<16x16xf32>
    %cst_223 = arith.constant dense<0.000000e+00> : vector<16xf32>
    %919 = vector.multi_reduction <add>, %918, %cst_223 [1] : vector<16x16xf32> to vector<16xf32>
    %920 = vector.shape_cast %919 : vector<16xf32> to vector<16x1xf32>
    %921 = vector.broadcast %920 : vector<16x1xf32> to vector<16x9xf32>
    %922 = vector.broadcast %76 : vector<1x9xf32> to vector<16x9xf32>
    %923 = arith.mulf %921, %922 : vector<16x9xf32>
    %924 = arith.addf %917, %923 : vector<16x9xf32>
    %925 = arith.mulf %893, %43 : vector<16x16xf32>
    %cst_224 = arith.constant dense<0.000000e+00> : vector<16xf32>
    %926 = vector.multi_reduction <add>, %925, %cst_224 [1] : vector<16x16xf32> to vector<16xf32>
    %927 = vector.shape_cast %926 : vector<16xf32> to vector<16x1xf32>
    %928 = vector.broadcast %927 : vector<16x1xf32> to vector<16x9xf32>
    %929 = vector.broadcast %80 : vector<1x9xf32> to vector<16x9xf32>
    %930 = arith.mulf %928, %929 : vector<16x9xf32>
    %931 = arith.addf %924, %930 : vector<16x9xf32>
    %932 = arith.mulf %893, %47 : vector<16x16xf32>
    %cst_225 = arith.constant dense<0.000000e+00> : vector<16xf32>
    %933 = vector.multi_reduction <add>, %932, %cst_225 [1] : vector<16x16xf32> to vector<16xf32>
    %934 = vector.shape_cast %933 : vector<16xf32> to vector<16x1xf32>
    %935 = vector.broadcast %934 : vector<16x1xf32> to vector<16x9xf32>
    %936 = vector.broadcast %84 : vector<1x9xf32> to vector<16x9xf32>
    %937 = arith.mulf %935, %936 : vector<16x9xf32>
    %938 = arith.addf %931, %937 : vector<16x9xf32>
    %939 = arith.mulf %893, %51 : vector<16x16xf32>
    %cst_226 = arith.constant dense<0.000000e+00> : vector<16xf32>
    %940 = vector.multi_reduction <add>, %939, %cst_226 [1] : vector<16x16xf32> to vector<16xf32>
    %941 = vector.shape_cast %940 : vector<16xf32> to vector<16x1xf32>
    %942 = vector.broadcast %941 : vector<16x1xf32> to vector<16x9xf32>
    %943 = vector.broadcast %88 : vector<1x9xf32> to vector<16x9xf32>
    %944 = arith.mulf %942, %943 : vector<16x9xf32>
    %945 = arith.addf %938, %944 : vector<16x9xf32>
    %946 = arith.mulf %893, %55 : vector<16x16xf32>
    %cst_227 = arith.constant dense<0.000000e+00> : vector<16xf32>
    %947 = vector.multi_reduction <add>, %946, %cst_227 [1] : vector<16x16xf32> to vector<16xf32>
    %948 = vector.shape_cast %947 : vector<16xf32> to vector<16x1xf32>
    %949 = vector.broadcast %948 : vector<16x1xf32> to vector<16x9xf32>
    %950 = vector.broadcast %92 : vector<1x9xf32> to vector<16x9xf32>
    %951 = arith.mulf %949, %950 : vector<16x9xf32>
    %952 = arith.addf %945, %951 : vector<16x9xf32>
    %953 = arith.mulf %893, %59 : vector<16x16xf32>
    %cst_228 = arith.constant dense<0.000000e+00> : vector<16xf32>
    %954 = vector.multi_reduction <add>, %953, %cst_228 [1] : vector<16x16xf32> to vector<16xf32>
    %955 = vector.shape_cast %954 : vector<16xf32> to vector<16x1xf32>
    %956 = vector.broadcast %955 : vector<16x1xf32> to vector<16x9xf32>
    %957 = vector.broadcast %96 : vector<1x9xf32> to vector<16x9xf32>
    %958 = arith.mulf %956, %957 : vector<16x9xf32>
    %959 = arith.addf %952, %958 : vector<16x9xf32>
    %960 = vector.extract_strided_slice %835 {offsets = [0, 16], sizes = [16, 16], strides = [1, 1]} : vector<16x32xbf16> to vector<16x16xbf16>
    %961 = vector.extract_strided_slice %837 {offsets = [0, 16], sizes = [16, 16], strides = [1, 1]} : vector<16x32xbf16> to vector<16x16xbf16>
    %962 = vector.extract_strided_slice %839 {offsets = [0, 16], sizes = [16, 16], strides = [1, 1]} : vector<16x32xbf16> to vector<16x16xbf16>
    %cst_229 = arith.constant dense<0.000000e+00> : vector<16x16xf32>
    %963 = tpu.matmul %960, %961, %cst_229 {dimension_numbers = #tpu.dot_dimension_numbers<[1], [1], [0], [0], [0, 0, 1, 0], [], []>} : vector<16x16xbf16>, vector<16x16xbf16>, vector<16x16xf32> -> vector<16x16xf32>
    %964 = vector.extract_strided_slice %842 {offsets = [0, 9], sizes = [16, 9], strides = [1, 1]} : vector<16x18xf32> to vector<16x9xf32>
    %965 = vector.extract_strided_slice %964 {offsets = [0, 0], sizes = [16, 1], strides = [1, 1]} : vector<16x9xf32> to vector<16x1xf32>
    %966 = vector.broadcast %965 : vector<16x1xf32> to vector<16x16xf32>
    %967 = arith.mulf %966, %27 : vector<16x16xf32>
    %968 = arith.addf %963, %967 : vector<16x16xf32>
    %969 = vector.extract_strided_slice %964 {offsets = [0, 1], sizes = [16, 1], strides = [1, 1]} : vector<16x9xf32> to vector<16x1xf32>
    %970 = vector.broadcast %969 : vector<16x1xf32> to vector<16x16xf32>
    %971 = arith.mulf %970, %31 : vector<16x16xf32>
    %972 = arith.addf %968, %971 : vector<16x16xf32>
    %973 = vector.extract_strided_slice %964 {offsets = [0, 2], sizes = [16, 1], strides = [1, 1]} : vector<16x9xf32> to vector<16x1xf32>
    %974 = vector.broadcast %973 : vector<16x1xf32> to vector<16x16xf32>
    %975 = arith.mulf %974, %35 : vector<16x16xf32>
    %976 = arith.addf %972, %975 : vector<16x16xf32>
    %977 = vector.extract_strided_slice %964 {offsets = [0, 3], sizes = [16, 1], strides = [1, 1]} : vector<16x9xf32> to vector<16x1xf32>
    %978 = vector.broadcast %977 : vector<16x1xf32> to vector<16x16xf32>
    %979 = arith.mulf %978, %39 : vector<16x16xf32>
    %980 = arith.addf %976, %979 : vector<16x16xf32>
    %981 = vector.extract_strided_slice %964 {offsets = [0, 4], sizes = [16, 1], strides = [1, 1]} : vector<16x9xf32> to vector<16x1xf32>
    %982 = vector.broadcast %981 : vector<16x1xf32> to vector<16x16xf32>
    %983 = arith.mulf %982, %43 : vector<16x16xf32>
    %984 = arith.addf %980, %983 : vector<16x16xf32>
    %985 = vector.extract_strided_slice %964 {offsets = [0, 5], sizes = [16, 1], strides = [1, 1]} : vector<16x9xf32> to vector<16x1xf32>
    %986 = vector.broadcast %985 : vector<16x1xf32> to vector<16x16xf32>
    %987 = arith.mulf %986, %47 : vector<16x16xf32>
    %988 = arith.addf %984, %987 : vector<16x16xf32>
    %989 = vector.extract_strided_slice %964 {offsets = [0, 6], sizes = [16, 1], strides = [1, 1]} : vector<16x9xf32> to vector<16x1xf32>
    %990 = vector.broadcast %989 : vector<16x1xf32> to vector<16x16xf32>
    %991 = arith.mulf %990, %51 : vector<16x16xf32>
    %992 = arith.addf %988, %991 : vector<16x16xf32>
    %993 = vector.extract_strided_slice %964 {offsets = [0, 7], sizes = [16, 1], strides = [1, 1]} : vector<16x9xf32> to vector<16x1xf32>
    %994 = vector.broadcast %993 : vector<16x1xf32> to vector<16x16xf32>
    %995 = arith.mulf %994, %55 : vector<16x16xf32>
    %996 = arith.addf %992, %995 : vector<16x16xf32>
    %997 = vector.extract_strided_slice %964 {offsets = [0, 8], sizes = [16, 1], strides = [1, 1]} : vector<16x9xf32> to vector<16x1xf32>
    %998 = vector.broadcast %997 : vector<16x1xf32> to vector<16x16xf32>
    %999 = arith.mulf %998, %59 : vector<16x16xf32>
    %1000 = arith.addf %996, %999 : vector<16x16xf32>
    %1001 = arith.addf %1000, %18 : vector<16x16xf32>
    %cst_230 = arith.constant dense<0xFF800000> : vector<16xf32>
    %1002 = vector.multi_reduction <maximumf>, %1001, %cst_230 [1] : vector<16x16xf32> to vector<16xf32>
    %1003 = vector.shape_cast %1002 : vector<16xf32> to vector<16x1xf32>
    %1004 = vector.broadcast %1003 : vector<16x1xf32> to vector<16x16xf32>
    %1005 = arith.subf %1001, %1004 : vector<16x16xf32>
    %1006 = math.exp %1005 : vector<16x16xf32>
    %cst_231 = arith.constant dense<0.000000e+00> : vector<16xf32>
    %1007 = vector.multi_reduction <add>, %1006, %cst_231 [1] : vector<16x16xf32> to vector<16xf32>
    %1008 = vector.shape_cast %1007 : vector<16xf32> to vector<16x1xf32>
    %1009 = vector.broadcast %1008 : vector<16x1xf32> to vector<16x16xf32>
    %1010 = arith.divf %1006, %1009 : vector<16x16xf32>
    %1011 = arith.truncf %1010 : vector<16x16xf32> to vector<16x16xbf16>
    %cst_232 = arith.constant dense<0.000000e+00> : vector<16x16xf32>
    %1012 = tpu.matmul %1011, %962, %cst_232 {dimension_numbers = #tpu.dot_dimension_numbers<[1], [0], [0], [1], [0, 0, 1, 1], [], []>} : vector<16x16xbf16>, vector<16x16xbf16>, vector<16x16xf32> -> vector<16x16xf32>
    %cst_233 = arith.constant 0.000000e+00 : f32
    %1013 = vector.broadcast %cst_233 : f32 to vector<16x9xf32>
    %1014 = arith.mulf %1010, %27 : vector<16x16xf32>
    %cst_234 = arith.constant dense<0.000000e+00> : vector<16xf32>
    %1015 = vector.multi_reduction <add>, %1014, %cst_234 [1] : vector<16x16xf32> to vector<16xf32>
    %1016 = vector.shape_cast %1015 : vector<16xf32> to vector<16x1xf32>
    %1017 = vector.broadcast %1016 : vector<16x1xf32> to vector<16x9xf32>
    %1018 = vector.broadcast %64 : vector<1x9xf32> to vector<16x9xf32>
    %1019 = arith.mulf %1017, %1018 : vector<16x9xf32>
    %1020 = arith.addf %1013, %1019 : vector<16x9xf32>
    %1021 = arith.mulf %1010, %31 : vector<16x16xf32>
    %cst_235 = arith.constant dense<0.000000e+00> : vector<16xf32>
    %1022 = vector.multi_reduction <add>, %1021, %cst_235 [1] : vector<16x16xf32> to vector<16xf32>
    %1023 = vector.shape_cast %1022 : vector<16xf32> to vector<16x1xf32>
    %1024 = vector.broadcast %1023 : vector<16x1xf32> to vector<16x9xf32>
    %1025 = vector.broadcast %68 : vector<1x9xf32> to vector<16x9xf32>
    %1026 = arith.mulf %1024, %1025 : vector<16x9xf32>
    %1027 = arith.addf %1020, %1026 : vector<16x9xf32>
    %1028 = arith.mulf %1010, %35 : vector<16x16xf32>
    %cst_236 = arith.constant dense<0.000000e+00> : vector<16xf32>
    %1029 = vector.multi_reduction <add>, %1028, %cst_236 [1] : vector<16x16xf32> to vector<16xf32>
    %1030 = vector.shape_cast %1029 : vector<16xf32> to vector<16x1xf32>
    %1031 = vector.broadcast %1030 : vector<16x1xf32> to vector<16x9xf32>
    %1032 = vector.broadcast %72 : vector<1x9xf32> to vector<16x9xf32>
    %1033 = arith.mulf %1031, %1032 : vector<16x9xf32>
    %1034 = arith.addf %1027, %1033 : vector<16x9xf32>
    %1035 = arith.mulf %1010, %39 : vector<16x16xf32>
    %cst_237 = arith.constant dense<0.000000e+00> : vector<16xf32>
    %1036 = vector.multi_reduction <add>, %1035, %cst_237 [1] : vector<16x16xf32> to vector<16xf32>
    %1037 = vector.shape_cast %1036 : vector<16xf32> to vector<16x1xf32>
    %1038 = vector.broadcast %1037 : vector<16x1xf32> to vector<16x9xf32>
    %1039 = vector.broadcast %76 : vector<1x9xf32> to vector<16x9xf32>
    %1040 = arith.mulf %1038, %1039 : vector<16x9xf32>
    %1041 = arith.addf %1034, %1040 : vector<16x9xf32>
    %1042 = arith.mulf %1010, %43 : vector<16x16xf32>
    %cst_238 = arith.constant dense<0.000000e+00> : vector<16xf32>
    %1043 = vector.multi_reduction <add>, %1042, %cst_238 [1] : vector<16x16xf32> to vector<16xf32>
    %1044 = vector.shape_cast %1043 : vector<16xf32> to vector<16x1xf32>
    %1045 = vector.broadcast %1044 : vector<16x1xf32> to vector<16x9xf32>
    %1046 = vector.broadcast %80 : vector<1x9xf32> to vector<16x9xf32>
    %1047 = arith.mulf %1045, %1046 : vector<16x9xf32>
    %1048 = arith.addf %1041, %1047 : vector<16x9xf32>
    %1049 = arith.mulf %1010, %47 : vector<16x16xf32>
    %cst_239 = arith.constant dense<0.000000e+00> : vector<16xf32>
    %1050 = vector.multi_reduction <add>, %1049, %cst_239 [1] : vector<16x16xf32> to vector<16xf32>
    %1051 = vector.shape_cast %1050 : vector<16xf32> to vector<16x1xf32>
    %1052 = vector.broadcast %1051 : vector<16x1xf32> to vector<16x9xf32>
    %1053 = vector.broadcast %84 : vector<1x9xf32> to vector<16x9xf32>
    %1054 = arith.mulf %1052, %1053 : vector<16x9xf32>
    %1055 = arith.addf %1048, %1054 : vector<16x9xf32>
    %1056 = arith.mulf %1010, %51 : vector<16x16xf32>
    %cst_240 = arith.constant dense<0.000000e+00> : vector<16xf32>
    %1057 = vector.multi_reduction <add>, %1056, %cst_240 [1] : vector<16x16xf32> to vector<16xf32>
    %1058 = vector.shape_cast %1057 : vector<16xf32> to vector<16x1xf32>
    %1059 = vector.broadcast %1058 : vector<16x1xf32> to vector<16x9xf32>
    %1060 = vector.broadcast %88 : vector<1x9xf32> to vector<16x9xf32>
    %1061 = arith.mulf %1059, %1060 : vector<16x9xf32>
    %1062 = arith.addf %1055, %1061 : vector<16x9xf32>
    %1063 = arith.mulf %1010, %55 : vector<16x16xf32>
    %cst_241 = arith.constant dense<0.000000e+00> : vector<16xf32>
    %1064 = vector.multi_reduction <add>, %1063, %cst_241 [1] : vector<16x16xf32> to vector<16xf32>
    %1065 = vector.shape_cast %1064 : vector<16xf32> to vector<16x1xf32>
    %1066 = vector.broadcast %1065 : vector<16x1xf32> to vector<16x9xf32>
    %1067 = vector.broadcast %92 : vector<1x9xf32> to vector<16x9xf32>
    %1068 = arith.mulf %1066, %1067 : vector<16x9xf32>
    %1069 = arith.addf %1062, %1068 : vector<16x9xf32>
    %1070 = arith.mulf %1010, %59 : vector<16x16xf32>
    %cst_242 = arith.constant dense<0.000000e+00> : vector<16xf32>
    %1071 = vector.multi_reduction <add>, %1070, %cst_242 [1] : vector<16x16xf32> to vector<16xf32>
    %1072 = vector.shape_cast %1071 : vector<16xf32> to vector<16x1xf32>
    %1073 = vector.broadcast %1072 : vector<16x1xf32> to vector<16x9xf32>
    %1074 = vector.broadcast %96 : vector<1x9xf32> to vector<16x9xf32>
    %1075 = arith.mulf %1073, %1074 : vector<16x9xf32>
    %1076 = arith.addf %1069, %1075 : vector<16x9xf32>
    %1077 = tpu.concatenate %895, %1012 in 1 : vector<16x16xf32>, vector<16x16xf32> -> vector<16x32xf32>
    %1078 = tpu.concatenate %959, %1076 in 1 : vector<16x9xf32>, vector<16x9xf32> -> vector<16x18xf32>
    %1079 = arith.truncf %1078 : vector<16x18xf32> to vector<16x18xbf16>
    %c2_243 = arith.constant 2 : index
    %c0_244 = arith.constant 0 : index
    %c0_245 = arith.constant 0 : index
    %1080 = vector.load %arg11[%c2_243, %c0_244, %c0_245] : memref<3x18x32xbf16, #tpu.memory_space<vmem>>, vector<1x18x32xbf16>
    %1081 = vector.shape_cast %1080 : vector<1x18x32xbf16> to vector<18x32xbf16>
    %cst_246 = arith.constant dense<0.000000e+00> : vector<16x32xf32>
    %1082 = tpu.matmul %1079, %1081, %cst_246 {dimension_numbers = #tpu.dot_dimension_numbers<[1], [0], [0], [1], [0, 0, 1, 1], [], []>} : vector<16x18xbf16>, vector<18x32xbf16>, vector<16x32xf32> -> vector<16x32xf32>
    %1083 = arith.addf %1077, %1082 : vector<16x32xf32>
    %1084 = arith.truncf %1083 : vector<16x32xf32> to vector<16x32xbf16>
    %c2_247 = arith.constant 2 : index
    %c0_248 = arith.constant 0 : index
    %c0_249 = arith.constant 0 : index
    %1085 = vector.load %arg8[%c2_247, %c0_248, %c0_249] : memref<3x32x32xbf16, #tpu.memory_space<vmem>>, vector<1x32x32xbf16>
    %1086 = vector.shape_cast %1085 : vector<1x32x32xbf16> to vector<32x32xbf16>
    %cst_250 = arith.constant dense<0.000000e+00> : vector<16x32xf32>
    %1087 = tpu.matmul %1084, %1086, %cst_250 {dimension_numbers = #tpu.dot_dimension_numbers<[1], [0], [0], [1], [0, 0, 1, 1], [], []>} : vector<16x32xbf16>, vector<32x32xbf16>, vector<16x32xf32> -> vector<16x32xf32>
    %c2_251 = arith.constant 2 : index
    %c0_252 = arith.constant 0 : index
    %c0_253 = arith.constant 0 : index
    %1088 = vector.load %arg9[%c2_251, %c0_252, %c0_253] : memref<3x1x32xf32, #tpu.memory_space<vmem>>, vector<1x1x32xf32>
    %1089 = vector.shape_cast %1088 : vector<1x1x32xf32> to vector<1x32xf32>
    %1090 = vector.broadcast %1089 : vector<1x32xf32> to vector<16x32xf32>
    %1091 = arith.addf %1087, %1090 : vector<16x32xf32>
    %1092 = arith.addf %823, %1091 : vector<16x32xf32>
    %c2_254 = arith.constant 2 : index
    %c0_255 = arith.constant 0 : index
    %c0_256 = arith.constant 0 : index
    %1093 = vector.load %arg12[%c2_254, %c0_255, %c0_256] : memref<3x1x32xf32, #tpu.memory_space<vmem>>, vector<1x1x32xf32>
    %1094 = vector.shape_cast %1093 : vector<1x1x32xf32> to vector<1x32xf32>
    %c2_257 = arith.constant 2 : index
    %c0_258 = arith.constant 0 : index
    %c0_259 = arith.constant 0 : index
    %1095 = vector.load %arg13[%c2_257, %c0_258, %c0_259] : memref<3x1x32xf32, #tpu.memory_space<vmem>>, vector<1x1x32xf32>
    %1096 = vector.shape_cast %1095 : vector<1x1x32xf32> to vector<1x32xf32>
    %cst_260 = arith.constant dense<0.000000e+00> : vector<16xf32>
    %1097 = vector.multi_reduction <add>, %1092, %cst_260 [1] : vector<16x32xf32> to vector<16xf32>
    %1098 = vector.shape_cast %1097 : vector<16xf32> to vector<16x1xf32>
    %cst_261 = arith.constant 3.200000e+01 : f32
    %1099 = vector.broadcast %cst_261 : f32 to vector<16x1xf32>
    %1100 = arith.divf %1098, %1099 : vector<16x1xf32>
    %1101 = vector.broadcast %1100 : vector<16x1xf32> to vector<16x32xf32>
    %1102 = arith.subf %1092, %1101 : vector<16x32xf32>
    %1103 = arith.mulf %1102, %1102 : vector<16x32xf32>
    %cst_262 = arith.constant dense<0.000000e+00> : vector<16xf32>
    %1104 = vector.multi_reduction <add>, %1103, %cst_262 [1] : vector<16x32xf32> to vector<16xf32>
    %1105 = vector.shape_cast %1104 : vector<16xf32> to vector<16x1xf32>
    %cst_263 = arith.constant 3.200000e+01 : f32
    %1106 = vector.broadcast %cst_263 : f32 to vector<16x1xf32>
    %1107 = arith.divf %1105, %1106 : vector<16x1xf32>
    %cst_264 = arith.constant 9.99999974E-6 : f32
    %1108 = vector.broadcast %cst_264 : f32 to vector<16x1xf32>
    %1109 = arith.addf %1107, %1108 : vector<16x1xf32>
    %1110 = math.rsqrt %1109 : vector<16x1xf32>
    %1111 = vector.broadcast %1110 : vector<16x1xf32> to vector<16x32xf32>
    %1112 = arith.mulf %1102, %1111 : vector<16x32xf32>
    %1113 = vector.broadcast %1094 : vector<1x32xf32> to vector<16x32xf32>
    %1114 = arith.mulf %1112, %1113 : vector<16x32xf32>
    %1115 = vector.broadcast %1096 : vector<1x32xf32> to vector<16x32xf32>
    %1116 = arith.addf %1114, %1115 : vector<16x32xf32>
    %1117 = vector.broadcast %6 : vector<16x1xf32> to vector<16x32xf32>
    %1118 = arith.mulf %1116, %1117 : vector<16x32xf32>
    %cst_265 = arith.constant 0.000000e+00 : f32
    %1119 = vector.broadcast %cst_265 : f32 to vector<1x32xf32>
    %1120 = vector.extract_strided_slice %1118 {offsets = [0, 0], sizes = [15, 32], strides = [1, 1]} : vector<16x32xf32> to vector<15x32xf32>
    %1121 = tpu.concatenate %1119, %1120 in 0 : vector<1x32xf32>, vector<15x32xf32> -> vector<16x32xf32>
    %cst_266 = arith.constant 0.000000e+00 : f32
    %1122 = vector.broadcast %cst_266 : f32 to vector<1x32xf32>
    %1123 = vector.extract_strided_slice %1118 {offsets = [1, 0], sizes = [15, 32], strides = [1, 1]} : vector<16x32xf32> to vector<15x32xf32>
    %1124 = tpu.concatenate %1123, %1122 in 0 : vector<15x32xf32>, vector<1x32xf32> -> vector<16x32xf32>
    %1125 = tpu.concatenate %1121, %1118, %1124 in 1 : vector<16x32xf32>, vector<16x32xf32>, vector<16x32xf32> -> vector<16x96xf32>
    %1126 = arith.truncf %1125 : vector<16x96xf32> to vector<16x96xbf16>
    %c2_267 = arith.constant 2 : index
    %c0_268 = arith.constant 0 : index
    %c0_269 = arith.constant 0 : index
    %1127 = vector.load %arg14[%c2_267, %c0_268, %c0_269] : memref<3x96x64xbf16, #tpu.memory_space<vmem>>, vector<1x96x64xbf16>
    %1128 = vector.shape_cast %1127 : vector<1x96x64xbf16> to vector<96x64xbf16>
    %cst_270 = arith.constant dense<0.000000e+00> : vector<16x64xf32>
    %1129 = tpu.matmul %1126, %1128, %cst_270 {dimension_numbers = #tpu.dot_dimension_numbers<[1], [0], [0], [1], [0, 0, 1, 1], [], []>} : vector<16x96xbf16>, vector<96x64xbf16>, vector<16x64xf32> -> vector<16x64xf32>
    %c2_271 = arith.constant 2 : index
    %c0_272 = arith.constant 0 : index
    %c0_273 = arith.constant 0 : index
    %1130 = vector.load %arg15[%c2_271, %c0_272, %c0_273] : memref<3x1x64xf32, #tpu.memory_space<vmem>>, vector<1x1x64xf32>
    %1131 = vector.shape_cast %1130 : vector<1x1x64xf32> to vector<1x64xf32>
    %1132 = vector.broadcast %1131 : vector<1x64xf32> to vector<16x64xf32>
    %1133 = arith.addf %1129, %1132 : vector<16x64xf32>
    %cst_274 = arith.constant 0.000000e+00 : f32
    %1134 = vector.broadcast %cst_274 : f32 to vector<16x64xf32>
    %1135 = arith.maximumf %1133, %1134 : vector<16x64xf32>
    %1136 = vector.broadcast %6 : vector<16x1xf32> to vector<16x64xf32>
    %1137 = arith.mulf %1135, %1136 : vector<16x64xf32>
    %cst_275 = arith.constant 0.000000e+00 : f32
    %1138 = vector.broadcast %cst_275 : f32 to vector<1x64xf32>
    %1139 = vector.extract_strided_slice %1137 {offsets = [0, 0], sizes = [15, 64], strides = [1, 1]} : vector<16x64xf32> to vector<15x64xf32>
    %1140 = tpu.concatenate %1138, %1139 in 0 : vector<1x64xf32>, vector<15x64xf32> -> vector<16x64xf32>
    %cst_276 = arith.constant 0.000000e+00 : f32
    %1141 = vector.broadcast %cst_276 : f32 to vector<1x64xf32>
    %1142 = vector.extract_strided_slice %1137 {offsets = [1, 0], sizes = [15, 64], strides = [1, 1]} : vector<16x64xf32> to vector<15x64xf32>
    %1143 = tpu.concatenate %1142, %1141 in 0 : vector<15x64xf32>, vector<1x64xf32> -> vector<16x64xf32>
    %1144 = tpu.concatenate %1140, %1137, %1143 in 1 : vector<16x64xf32>, vector<16x64xf32>, vector<16x64xf32> -> vector<16x192xf32>
    %1145 = arith.truncf %1144 : vector<16x192xf32> to vector<16x192xbf16>
    %c2_277 = arith.constant 2 : index
    %c0_278 = arith.constant 0 : index
    %c0_279 = arith.constant 0 : index
    %1146 = vector.load %arg16[%c2_277, %c0_278, %c0_279] : memref<3x192x32xbf16, #tpu.memory_space<vmem>>, vector<1x192x32xbf16>
    %1147 = vector.shape_cast %1146 : vector<1x192x32xbf16> to vector<192x32xbf16>
    %cst_280 = arith.constant dense<0.000000e+00> : vector<16x32xf32>
    %1148 = tpu.matmul %1145, %1147, %cst_280 {dimension_numbers = #tpu.dot_dimension_numbers<[1], [0], [0], [1], [0, 0, 1, 1], [], []>} : vector<16x192xbf16>, vector<192x32xbf16>, vector<16x32xf32> -> vector<16x32xf32>
    %c2_281 = arith.constant 2 : index
    %c0_282 = arith.constant 0 : index
    %c0_283 = arith.constant 0 : index
    %1149 = vector.load %arg17[%c2_281, %c0_282, %c0_283] : memref<3x1x32xf32, #tpu.memory_space<vmem>>, vector<1x1x32xf32>
    %1150 = vector.shape_cast %1149 : vector<1x1x32xf32> to vector<1x32xf32>
    %1151 = vector.broadcast %1150 : vector<1x32xf32> to vector<16x32xf32>
    %1152 = arith.addf %1148, %1151 : vector<16x32xf32>
    %1153 = vector.broadcast %6 : vector<16x1xf32> to vector<16x32xf32>
    %1154 = arith.mulf %1152, %1153 : vector<16x32xf32>
    %1155 = arith.addf %1116, %1154 : vector<16x32xf32>
    %c2_284 = arith.constant 2 : index
    %c0_285 = arith.constant 0 : index
    %c0_286 = arith.constant 0 : index
    %1156 = vector.load %arg18[%c2_284, %c0_285, %c0_286] : memref<3x1x32xf32, #tpu.memory_space<vmem>>, vector<1x1x32xf32>
    %1157 = vector.shape_cast %1156 : vector<1x1x32xf32> to vector<1x32xf32>
    %c2_287 = arith.constant 2 : index
    %c0_288 = arith.constant 0 : index
    %c0_289 = arith.constant 0 : index
    %1158 = vector.load %arg19[%c2_287, %c0_288, %c0_289] : memref<3x1x32xf32, #tpu.memory_space<vmem>>, vector<1x1x32xf32>
    %1159 = vector.shape_cast %1158 : vector<1x1x32xf32> to vector<1x32xf32>
    %cst_290 = arith.constant dense<0.000000e+00> : vector<16xf32>
    %1160 = vector.multi_reduction <add>, %1155, %cst_290 [1] : vector<16x32xf32> to vector<16xf32>
    %1161 = vector.shape_cast %1160 : vector<16xf32> to vector<16x1xf32>
    %cst_291 = arith.constant 3.200000e+01 : f32
    %1162 = vector.broadcast %cst_291 : f32 to vector<16x1xf32>
    %1163 = arith.divf %1161, %1162 : vector<16x1xf32>
    %1164 = vector.broadcast %1163 : vector<16x1xf32> to vector<16x32xf32>
    %1165 = arith.subf %1155, %1164 : vector<16x32xf32>
    %1166 = arith.mulf %1165, %1165 : vector<16x32xf32>
    %cst_292 = arith.constant dense<0.000000e+00> : vector<16xf32>
    %1167 = vector.multi_reduction <add>, %1166, %cst_292 [1] : vector<16x32xf32> to vector<16xf32>
    %1168 = vector.shape_cast %1167 : vector<16xf32> to vector<16x1xf32>
    %cst_293 = arith.constant 3.200000e+01 : f32
    %1169 = vector.broadcast %cst_293 : f32 to vector<16x1xf32>
    %1170 = arith.divf %1168, %1169 : vector<16x1xf32>
    %cst_294 = arith.constant 9.99999974E-6 : f32
    %1171 = vector.broadcast %cst_294 : f32 to vector<16x1xf32>
    %1172 = arith.addf %1170, %1171 : vector<16x1xf32>
    %1173 = math.rsqrt %1172 : vector<16x1xf32>
    %1174 = vector.broadcast %1173 : vector<16x1xf32> to vector<16x32xf32>
    %1175 = arith.mulf %1165, %1174 : vector<16x32xf32>
    %1176 = vector.broadcast %1157 : vector<1x32xf32> to vector<16x32xf32>
    %1177 = arith.mulf %1175, %1176 : vector<16x32xf32>
    %1178 = vector.broadcast %1159 : vector<1x32xf32> to vector<16x32xf32>
    %1179 = arith.addf %1177, %1178 : vector<16x32xf32>
    %1180 = vector.broadcast %6 : vector<16x1xf32> to vector<16x32xf32>
    %1181 = arith.mulf %1179, %1180 : vector<16x32xf32>
    %c0_295 = arith.constant 0 : index
    %c0_296 = arith.constant 0 : index
    %c0_297 = arith.constant 0 : index
    %1182 = vector.load %arg20[%c0_295, %c0_296, %c0_297] : memref<1x16x32xf32, #tpu.memory_space<vmem>>, vector<1x16x32xf32>
    %1183 = vector.shape_cast %1182 : vector<1x16x32xf32> to vector<16x32xf32>
    %1184 = vector.shape_cast %1181 : vector<16x32xf32> to vector<1x16x32xf32>
    tpu.vector_store %arg20[%c0_295, %c0_296, %c0_297], %1184 {strides = array<i32>} : memref<1x16x32xf32, #tpu.memory_space<vmem>>, vector<1x16x32xf32>,
    return
  }
  func.func @transform_0(%arg0: i32, %arg1: memref<2xi32, #tpu.memory_space<smem>>) -> (i32, i32, i32) {
    %c0_i32 = arith.constant 0 : i32
    %c0_i32_0 = arith.constant 0 : i32
    %c0_i32_1 = arith.constant 0 : i32
    return %arg0, %c0_i32, %c0_i32_0 : i32, i32, i32
  }
  func.func @transform_1(%arg0: i32, %arg1: memref<2xi32, #tpu.memory_space<smem>>) -> (i32, i32, i32) {
    %c0_i32 = arith.constant 0 : i32
    %c0_i32_0 = arith.constant 0 : i32
    %c0_i32_1 = arith.constant 0 : i32
    return %arg0, %c0_i32, %c0_i32_0 : i32, i32, i32
  }
  func.func @transform_2(%arg0: i32, %arg1: memref<2xi32, #tpu.memory_space<smem>>) -> (i32, i32) {
    %c0_i32 = arith.constant 0 : i32
    %c0_i32_0 = arith.constant 0 : i32
    %c0_i32_1 = arith.constant 0 : i32
    return %c0_i32, %c0_i32_0 : i32, i32
  }
  func.func @transform_3(%arg0: i32, %arg1: memref<2xi32, #tpu.memory_space<smem>>) -> (i32, i32) {
    %c0_i32 = arith.constant 0 : i32
    %c0_i32_0 = arith.constant 0 : i32
    %c0_i32_1 = arith.constant 0 : i32
    return %c0_i32, %c0_i32_0 : i32, i32
  }
  func.func @transform_4(%arg0: i32, %arg1: memref<2xi32, #tpu.memory_space<smem>>) -> (i32, i32, i32) {
    %c0_i32 = arith.constant 0 : i32
    %c0_i32_0 = arith.constant 0 : i32
    %c0_i32_1 = arith.constant 0 : i32
    %c0_i32_2 = arith.constant 0 : i32
    return %c0_i32, %c0_i32_0, %c0_i32_1 : i32, i32, i32
  }
  func.func @transform_5(%arg0: i32, %arg1: memref<2xi32, #tpu.memory_space<smem>>) -> (i32, i32, i32) {
    %c0_i32 = arith.constant 0 : i32
    %c0_i32_0 = arith.constant 0 : i32
    %c0_i32_1 = arith.constant 0 : i32
    %c0_i32_2 = arith.constant 0 : i32
    return %c0_i32, %c0_i32_0, %c0_i32_1 : i32, i32, i32
  }
  func.func @transform_6(%arg0: i32, %arg1: memref<2xi32, #tpu.memory_space<smem>>) -> (i32, i32, i32) {
    %c0_i32 = arith.constant 0 : i32
    %c0_i32_0 = arith.constant 0 : i32
    %c0_i32_1 = arith.constant 0 : i32
    %c0_i32_2 = arith.constant 0 : i32
    return %c0_i32, %c0_i32_0, %c0_i32_1 : i32, i32, i32
  }
  func.func @transform_7(%arg0: i32, %arg1: memref<2xi32, #tpu.memory_space<smem>>) -> (i32, i32, i32) {
    %c0_i32 = arith.constant 0 : i32
    %c0_i32_0 = arith.constant 0 : i32
    %c0_i32_1 = arith.constant 0 : i32
    %c0_i32_2 = arith.constant 0 : i32
    return %c0_i32, %c0_i32_0, %c0_i32_1 : i32, i32, i32
  }
  func.func @transform_8(%arg0: i32, %arg1: memref<2xi32, #tpu.memory_space<smem>>) -> (i32, i32, i32) {
    %c0_i32 = arith.constant 0 : i32
    %c0_i32_0 = arith.constant 0 : i32
    %c0_i32_1 = arith.constant 0 : i32
    %c0_i32_2 = arith.constant 0 : i32
    return %c0_i32, %c0_i32_0, %c0_i32_1 : i32, i32, i32
  }
  func.func @transform_9(%arg0: i32, %arg1: memref<2xi32, #tpu.memory_space<smem>>) -> (i32, i32, i32) {
    %c0_i32 = arith.constant 0 : i32
    %c0_i32_0 = arith.constant 0 : i32
    %c0_i32_1 = arith.constant 0 : i32
    %c0_i32_2 = arith.constant 0 : i32
    return %c0_i32, %c0_i32_0, %c0_i32_1 : i32, i32, i32
  }
  func.func @transform_10(%arg0: i32, %arg1: memref<2xi32, #tpu.memory_space<smem>>) -> (i32, i32, i32) {
    %c0_i32 = arith.constant 0 : i32
    %c0_i32_0 = arith.constant 0 : i32
    %c0_i32_1 = arith.constant 0 : i32
    %c0_i32_2 = arith.constant 0 : i32
    return %c0_i32, %c0_i32_0, %c0_i32_1 : i32, i32, i32
  }
  func.func @transform_11(%arg0: i32, %arg1: memref<2xi32, #tpu.memory_space<smem>>) -> (i32, i32, i32) {
    %c0_i32 = arith.constant 0 : i32
    %c0_i32_0 = arith.constant 0 : i32
    %c0_i32_1 = arith.constant 0 : i32
    %c0_i32_2 = arith.constant 0 : i32
    return %c0_i32, %c0_i32_0, %c0_i32_1 : i32, i32, i32
  }
  func.func @transform_12(%arg0: i32, %arg1: memref<2xi32, #tpu.memory_space<smem>>) -> (i32, i32, i32) {
    %c0_i32 = arith.constant 0 : i32
    %c0_i32_0 = arith.constant 0 : i32
    %c0_i32_1 = arith.constant 0 : i32
    %c0_i32_2 = arith.constant 0 : i32
    return %c0_i32, %c0_i32_0, %c0_i32_1 : i32, i32, i32
  }
  func.func @transform_13(%arg0: i32, %arg1: memref<2xi32, #tpu.memory_space<smem>>) -> (i32, i32, i32) {
    %c0_i32 = arith.constant 0 : i32
    %c0_i32_0 = arith.constant 0 : i32
    %c0_i32_1 = arith.constant 0 : i32
    %c0_i32_2 = arith.constant 0 : i32
    return %c0_i32, %c0_i32_0, %c0_i32_1 : i32, i32, i32
  }
  func.func @transform_14(%arg0: i32, %arg1: memref<2xi32, #tpu.memory_space<smem>>) -> (i32, i32, i32) {
    %c0_i32 = arith.constant 0 : i32
    %c0_i32_0 = arith.constant 0 : i32
    %c0_i32_1 = arith.constant 0 : i32
    %c0_i32_2 = arith.constant 0 : i32
    return %c0_i32, %c0_i32_0, %c0_i32_1 : i32, i32, i32
  }
  func.func @transform_15(%arg0: i32, %arg1: memref<2xi32, #tpu.memory_space<smem>>) -> (i32, i32, i32) {
    %c0_i32 = arith.constant 0 : i32
    %c0_i32_0 = arith.constant 0 : i32
    %c0_i32_1 = arith.constant 0 : i32
    %c0_i32_2 = arith.constant 0 : i32
    return %c0_i32, %c0_i32_0, %c0_i32_1 : i32, i32, i32
  }
  func.func @transform_16(%arg0: i32, %arg1: memref<2xi32, #tpu.memory_space<smem>>) -> (i32, i32, i32) {
    %c0_i32 = arith.constant 0 : i32
    %c0_i32_0 = arith.constant 0 : i32
    %c0_i32_1 = arith.constant 0 : i32
    %c0_i32_2 = arith.constant 0 : i32
    return %c0_i32, %c0_i32_0, %c0_i32_1 : i32, i32, i32
  }
  func.func @transform_17(%arg0: i32, %arg1: memref<2xi32, #tpu.memory_space<smem>>) -> (i32, i32, i32) {
    %c0_i32 = arith.constant 0 : i32
    %c0_i32_0 = arith.constant 0 : i32
    %c0_i32_1 = arith.constant 0 : i32
    %c0_i32_2 = arith.constant 0 : i32
    return %c0_i32, %c0_i32_0, %c0_i32_1 : i32, i32, i32
  }
  func.func @transform_18(%arg0: i32, %arg1: memref<2xi32, #tpu.memory_space<smem>>) -> (i32, i32, i32) {
    %c0_i32 = arith.constant 0 : i32
    %c0_i32_0 = arith.constant 0 : i32
    %c0_i32_1 = arith.constant 0 : i32
    return %arg0, %c0_i32, %c0_i32_0 : i32, i32, i32
  }
}

</mosaic_0001>

<llo_original>
// kernel: w2v_encoder_forward.1
$region0: #{w2v_encoder_forward.1}
  #allocation0 [shape = 'u32[]', space=smem, size = 0x4, offset = 0x4, fixed_abs, tag = 'smem constant byte address 0x4 - core index']
  #allocation1 [shape = 'u32[72,128]{1,0:T(1,128)}', space=vmem, size = 0x9000, scoped, tag = 'internal scratch']
  #allocation2 [shape = 's32[1]{0}', space=sflag, size = 0x4, scoped, tag = 'scoped memory for w2v_encoder_forward.1']
  #allocation3 [shape = 'u8[512]{0}', space=smem, size = 0x200, scoped, tag = 'prefetched SMEM operand 0']
  %s0 = inlined_call_operand.vmem [shape: s32[2], index: 0, kind: input, shape index: {}]
  %s1 = inlined_call_operand.vmem [shape: f32[2,16,32], index: 1, kind: input, shape index: {}]
  %s2 = inlined_call_operand.vmem [shape: f32[2,1,256], index: 2, kind: input, shape index: {}]
  %s3 = inlined_call_operand.vmem [shape: bf16[256,32], index: 3, kind: input, shape index: {}]
  %s4 = inlined_call_operand.vmem [shape: f32[1,32], index: 4, kind: input, shape index: {}]
  %s5 = inlined_call_operand.vmem [shape: bf16[3,32,96], index: 5, kind: input, shape index: {}]
  %s6 = inlined_call_operand.vmem [shape: f32[3,1,96], index: 6, kind: input, shape index: {}]
  %s7 = inlined_call_operand.vmem [shape: bf16[3,32,32], index: 7, kind: input, shape index: {}]
  %s8 = inlined_call_operand.vmem [shape: f32[3,1,32], index: 8, kind: input, shape index: {}]
  %s9 = inlined_call_operand.vmem [shape: bf16[3,32,18], index: 9, kind: input, shape index: {}]
  %s10 = inlined_call_operand.vmem [shape: bf16[3,18,32], index: 10, kind: input, shape index: {}]
  %s11 = inlined_call_operand.vmem [shape: f32[3,1,32], index: 11, kind: input, shape index: {}]
  %s12 = inlined_call_operand.vmem [shape: f32[3,1,32], index: 12, kind: input, shape index: {}]
  %s13 = inlined_call_operand.vmem [shape: bf16[3,96,64], index: 13, kind: input, shape index: {}]
  %s14 = inlined_call_operand.vmem [shape: f32[3,1,64], index: 14, kind: input, shape index: {}]
  %s15 = inlined_call_operand.vmem [shape: bf16[3,192,32], index: 15, kind: input, shape index: {}]
  %s16 = inlined_call_operand.vmem [shape: f32[3,1,32], index: 16, kind: input, shape index: {}]
  %s17 = inlined_call_operand.vmem [shape: f32[3,1,32], index: 17, kind: input, shape index: {}]
  %s18 = inlined_call_operand.vmem [shape: f32[3,1,32], index: 18, kind: input, shape index: {}]
  %s19 = inlined_call_operand.hbm [shape: f32[2,16,32], index: 19, kind: output, shape index: {}]
  %s20 = sld [smem:[#allocation0]]
  $region105: #{w2v_encoder_forward.1} parent=0
    _
  %s22 = ssub.s32 1, %s20
  %s23 = scalar_select 0, %s22, %s20
  %s25 = sshll.u32 %s0, 4
  %s26 = int_to_ptr.vmem [resolvable:$true] %s25
  %28 = dma.vmem_to_smem %s26, 16, [#allocation3], [#allocation2]
  %30 = dma.done [#allocation2], 16
  %31 = sfence
  $region1: #{w2v_encoder_forward.1} parent=0
    #allocation4 [shape = 'u8[16384]{0}', space=vmem, size = 0x4000, scoped, tag = 'output window, operand 0']
    #allocation5 [shape = 's32[2]{0}', space=sflag, size = 0x8, scoped, tag = 'scoped memory for w2v_encoder_forward.1']
    %32 = vsyncpa [#allocation5], 0
    %s33 = scalar_lea.sflag [#allocation5], 1
    %34 = vsyncpa %s33, 0
    loop: start=0, step=1, limit=4
    $region2: #{w2v_encoder_forward.1} parent=1 // loop_pre_header
      _
    $region3: #{w2v_encoder_forward.1} parent=1 // loop_header
      %s36 = sphi 0, %s40
      %p37 = scmp.ge.s32.totalorder %s36, 4
      %s46 = sphi 0, %s48
      %s49 = sphi 0, %s46
      %s50 = sphi 0, %s49
      %s66 = sphi 0, %s50
      %s72 = sphi 0, %s74
      %s75 = sphi 0, %s72
      %s76 = sphi 0, %s75
      %s92 = sphi 0, %s76
      %s96 = sphi 0, %s96
      %s98 = sphi 0, %s96
      %s99 = sphi 0, %s98
      %s113 = sphi 0, %s99
      %s117 = sphi 0, %s117
      %s119 = sphi 0, %s117
      %s120 = sphi 0, %s119
      %s134 = sphi 0, %s120
      %s138 = sphi 0, %s138
      %s140 = sphi 0, %s138
      %s141 = sphi 0, %s140
      %s155 = sphi 0, %s141
      %s159 = sphi 0, %s159
      %s161 = sphi 0, %s159
      %s162 = sphi 0, %s161
      %s176 = sphi 0, %s162
      %s180 = sphi 0, %s180
      %s182 = sphi 0, %s180
      %s183 = sphi 0, %s182
      %s197 = sphi 0, %s183
      %s201 = sphi 0, %s201
      %s203 = sphi 0, %s201
      %s204 = sphi 0, %s203
      %s218 = sphi 0, %s204
      %s222 = sphi 0, %s222
      %s224 = sphi 0, %s222
      %s225 = sphi 0, %s224
      %s239 = sphi 0, %s225
      %s243 = sphi 0, %s243
      %s245 = sphi 0, %s243
      %s246 = sphi 0, %s245
      %s260 = sphi 0, %s246
      %s264 = sphi 0, %s264
      %s266 = sphi 0, %s264
      %s267 = sphi 0, %s266
      %s281 = sphi 0, %s267
      %s285 = sphi 0, %s285
      %s287 = sphi 0, %s285
      %s288 = sphi 0, %s287
      %s302 = sphi 0, %s288
      %s306 = sphi 0, %s306
      %s308 = sphi 0, %s306
      %s309 = sphi 0, %s308
      %s323 = sphi 0, %s309
      %s327 = sphi 0, %s327
      %s329 = sphi 0, %s327
      %s330 = sphi 0, %s329
      %s344 = sphi 0, %s330
      %s348 = sphi 0, %s348
      %s350 = sphi 0, %s348
      %s351 = sphi 0, %s350
      %s365 = sphi 0, %s351
      %s369 = sphi 0, %s369
      %s371 = sphi 0, %s369
      %s372 = sphi 0, %s371
      %s386 = sphi 0, %s372
      %s390 = sphi 0, %s390
      %s392 = sphi 0, %s390
      %s393 = sphi 0, %s392
      %s407 = sphi 0, %s393
      %s411 = sphi 0, %s411
      %s413 = sphi 0, %s411
      %s414 = sphi 0, %s413
      %s428 = sphi 0, %s414
      %s434 = sphi 0, %s436
      %s437 = sphi 0, %s434
      %s438 = sphi 0, %s437
      %s454 = sphi 0, %s438
    $region4: #{w2v_encoder_forward.1} parent=1 // loop_header_branch
      %39 = sbr.rel (%p37) target = $region8
    $region5: #{w2v_encoder_forward.1} parent=1 // loop_body
      %s41 = ssub.s32 %s36, 1
      %s42 = ssub.s32 %s36, 2
      %s43 = sadd.s32 %s36, 1
      %s44 = ssub.s32 %s36, %s43
      %p45 = scmp.eq.s32.totalorder %s44, 0
      %s47 = sadd.s32 %s46, 1
      %s48 = scalar_select %p45, %s46, %s47
      %p51 = pneg %p45
      %p52 = scmp.eq.s32.totalorder %s36, 1
      %p53 = por %p51, %p52
      %p54 = scmp.ne.s32.totalorder %s46, %s49
      %p55 = scmp.eq.s32.totalorder %s36, 0
      %p56 = por %p54, %p55
      %p57 = scmp.ne.s32.totalorder %s46, %s49
      %p58 = scmp.eq.s32.totalorder %s41, 1
      %p59 = por %p57, %p58
      %p60 = scmp.ne.s32.totalorder %s49, %s50
      %p61 = scmp.eq.s32.totalorder %s41, 0
      %p62 = por %p60, %p61
      %p63 = scmp.ne.s32.totalorder %s49, %s50
      %p64 = scmp.eq.s32.totalorder %s42, 1
      %p65 = por %p63, %p64
      %p67 = scmp.ne.s32.totalorder %s50, %s66
      %p68 = scmp.eq.s32.totalorder %s42, 0
      %p69 = por %p67, %p68
      %s70 = ssub.s32 %s36, %s43
      %p71 = scmp.eq.s32.totalorder %s70, 0
      %s73 = sadd.s32 %s72, 1
      %s74 = scalar_select %p71, %s72, %s73
      %p77 = pneg %p71
      %p78 = scmp.eq.s32.totalorder %s36, 1
      %p79 = por %p77, %p78
      %p80 = scmp.ne.s32.totalorder %s72, %s75
      %p81 = scmp.eq.s32.totalorder %s36, 0
      %p82 = por %p80, %p81
      %p83 = scmp.ne.s32.totalorder %s72, %s75
      %p84 = scmp.eq.s32.totalorder %s41, 1
      %p85 = por %p83, %p84
      %p86 = scmp.ne.s32.totalorder %s75, %s76
      %p87 = scmp.eq.s32.totalorder %s41, 0
      %p88 = por %p86, %p87
      %p89 = scmp.ne.s32.totalorder %s75, %s76
      %p90 = scmp.eq.s32.totalorder %s42, 1
      %p91 = por %p89, %p90
      %p93 = scmp.ne.s32.totalorder %s76, %s92
      %p94 = scmp.eq.s32.totalorder %s42, 0
      %p95 = por %p93, %p94
      %s97 = sadd.s32 %s96, 1
      %p100 = scmp.eq.s32.totalorder %s36, 1
      %p101 = scmp.ne.s32.totalorder %s96, %s98
      %p102 = scmp.eq.s32.totalorder %s36, 0
      %p103 = por %p101, %p102
      %p104 = scmp.ne.s32.totalorder %s96, %s98
      %p105 = scmp.eq.s32.totalorder %s41, 1
      %p106 = por %p104, %p105
      %p107 = scmp.ne.s32.totalorder %s98, %s99
      %p108 = scmp.eq.s32.totalorder %s41, 0
      %p109 = por %p107, %p108
      %p110 = scmp.ne.s32.totalorder %s98, %s99
      %p111 = scmp.eq.s32.totalorder %s42, 1
      %p112 = por %p110, %p111
      %p114 = scmp.ne.s32.totalorder %s99, %s113
      %p115 = scmp.eq.s32.totalorder %s42, 0
      %p116 = por %p114, %p115
      %s118 = sadd.s32 %s117, 1
      %p121 = scmp.eq.s32.totalorder %s36, 1
      %p122 = scmp.ne.s32.totalorder %s117, %s119
      %p123 = scmp.eq.s32.totalorder %s36, 0
      %p124 = por %p122, %p123
      %p125 = scmp.ne.s32.totalorder %s117, %s119
      %p126 = scmp.eq.s32.totalorder %s41, 1
      %p127 = por %p125, %p126
      %p128 = scmp.ne.s32.totalorder %s119, %s120
      %p129 = scmp.eq.s32.totalorder %s41, 0
      %p130 = por %p128, %p129
      %p131 = scmp.ne.s32.totalorder %s119, %s120
      %p132 = scmp.eq.s32.totalorder %s42, 1
      %p133 = por %p131, %p132
      %p135 = scmp.ne.s32.totalorder %s120, %s134
      %p136 = scmp.eq.s32.totalorder %s42, 0
      %p137 = por %p135, %p136
      %s139 = sadd.s32 %s138, 1
      %p142 = scmp.eq.s32.totalorder %s36, 1
      %p143 = scmp.ne.s32.totalorder %s138, %s140
      %p144 = scmp.eq.s32.totalorder %s36, 0
      %p145 = por %p143, %p144
      %p146 = scmp.ne.s32.totalorder %s138, %s140
      %p147 = scmp.eq.s32.totalorder %s41, 1
      %p148 = por %p146, %p147
      %p149 = scmp.ne.s32.totalorder %s140, %s141
      %p150 = scmp.eq.s32.totalorder %s41, 0
      %p151 = por %p149, %p150
      %p152 = scmp.ne.s32.totalorder %s140, %s141
      %p153 = scmp.eq.s32.totalorder %s42, 1
      %p154 = por %p152, %p153
      %p156 = scmp.ne.s32.totalorder %s141, %s155
      %p157 = scmp.eq.s32.totalorder %s42, 0
      %p158 = por %p156, %p157
      %s160 = sadd.s32 %s159, 1
      %p163 = scmp.eq.s32.totalorder %s36, 1
      %p164 = scmp.ne.s32.totalorder %s159, %s161
      %p165 = scmp.eq.s32.totalorder %s36, 0
      %p166 = por %p164, %p165
      %p167 = scmp.ne.s32.totalorder %s159, %s161
      %p168 = scmp.eq.s32.totalorder %s41, 1
      %p169 = por %p167, %p168
      %p170 = scmp.ne.s32.totalorder %s161, %s162
      %p171 = scmp.eq.s32.totalorder %s41, 0
      %p172 = por %p170, %p171
      %p173 = scmp.ne.s32.totalorder %s161, %s162
      %p174 = scmp.eq.s32.totalorder %s42, 1
      %p175 = por %p173, %p174
      %p177 = scmp.ne.s32.totalorder %s162, %s176
      %p178 = scmp.eq.s32.totalorder %s42, 0
      %p179 = por %p177, %p178
      %s181 = sadd.s32 %s180, 1
      %p184 = scmp.eq.s32.totalorder %s36, 1
      %p185 = scmp.ne.s32.totalorder %s180, %s182
      %p186 = scmp.eq.s32.totalorder %s36, 0
      %p187 = por %p185, %p186
      %p188 = scmp.ne.s32.totalorder %s180, %s182
      %p189 = scmp.eq.s32.totalorder %s41, 1
      %p190 = por %p188, %p189
      %p191 = scmp.ne.s32.totalorder %s182, %s183
      %p192 = scmp.eq.s32.totalorder %s41, 0
      %p193 = por %p191, %p192
      %p194 = scmp.ne.s32.totalorder %s182, %s183
      %p195 = scmp.eq.s32.totalorder %s42, 1
      %p196 = por %p194, %p195
      %p198 = scmp.ne.s32.totalorder %s183, %s197
      %p199 = scmp.eq.s32.totalorder %s42, 0
      %p200 = por %p198, %p199
      %s202 = sadd.s32 %s201, 1
      %p205 = scmp.eq.s32.totalorder %s36, 1
      %p206 = scmp.ne.s32.totalorder %s201, %s203
      %p207 = scmp.eq.s32.totalorder %s36, 0
      %p208 = por %p206, %p207
      %p209 = scmp.ne.s32.totalorder %s201, %s203
      %p210 = scmp.eq.s32.totalorder %s41, 1
      %p211 = por %p209, %p210
      %p212 = scmp.ne.s32.totalorder %s203, %s204
      %p213 = scmp.eq.s32.totalorder %s41, 0
      %p214 = por %p212, %p213
      %p215 = scmp.ne.s32.totalorder %s203, %s204
      %p216 = scmp.eq.s32.totalorder %s42, 1
      %p217 = por %p215, %p216
      %p219 = scmp.ne.s32.totalorder %s204, %s218
      %p220 = scmp.eq.s32.totalorder %s42, 0
      %p221 = por %p219, %p220
      %s223 = sadd.s32 %s222, 1
      %p226 = scmp.eq.s32.totalorder %s36, 1
      %p227 = scmp.ne.s32.totalorder %s222, %s224
      %p228 = scmp.eq.s32.totalorder %s36, 0
      %p229 = por %p227, %p228
      %p230 = scmp.ne.s32.totalorder %s222, %s224
      %p231 = scmp.eq.s32.totalorder %s41, 1
      %p232 = por %p230, %p231
      %p233 = scmp.ne.s32.totalorder %s224, %s225
      %p234 = scmp.eq.s32.totalorder %s41, 0
      %p235 = por %p233, %p234
      %p236 = scmp.ne.s32.totalorder %s224, %s225
      %p237 = scmp.eq.s32.totalorder %s42, 1
      %p238 = por %p236, %p237
      %p240 = scmp.ne.s32.totalorder %s225, %s239
      %p241 = scmp.eq.s32.totalorder %s42, 0
      %p242 = por %p240, %p241
      %s244 = sadd.s32 %s243, 1
      %p247 = scmp.eq.s32.totalorder %s36, 1
      %p248 = scmp.ne.s32.totalorder %s243, %s245
      %p249 = scmp.eq.s32.totalorder %s36, 0
      %p250 = por %p248, %p249
      %p251 = scmp.ne.s32.totalorder %s243, %s245
      %p252 = scmp.eq.s32.totalorder %s41, 1
      %p253 = por %p251, %p252
      %p254 = scmp.ne.s32.totalorder %s245, %s246
      %p255 = scmp.eq.s32.totalorder %s41, 0
      %p256 = por %p254, %p255
      %p257 = scmp.ne.s32.totalorder %s245, %s246
      %p258 = scmp.eq.s32.totalorder %s42, 1
      %p259 = por %p257, %p258
      %p261 = scmp.ne.s32.totalorder %s246, %s260
      %p262 = scmp.eq.s32.totalorder %s42, 0
      %p263 = por %p261, %p262
      %s265 = sadd.s32 %s264, 1
      %p268 = scmp.eq.s32.totalorder %s36, 1
      %p269 = scmp.ne.s32.totalorder %s264, %s266
      %p270 = scmp.eq.s32.totalorder %s36, 0
      %p271 = por %p269, %p270
      %p272 = scmp.ne.s32.totalorder %s264, %s266
      %p273 = scmp.eq.s32.totalorder %s41, 1
      %p274 = por %p272, %p273
      %p275 = scmp.ne.s32.totalorder %s266, %s267
      %p276 = scmp.eq.s32.totalorder %s41, 0
      %p277 = por %p275, %p276
      %p278 = scmp.ne.s32.totalorder %s266, %s267
      %p279 = scmp.eq.s32.totalorder %s42, 1
      %p280 = por %p278, %p279
      %p282 = scmp.ne.s32.totalorder %s267, %s281
      %p283 = scmp.eq.s32.totalorder %s42, 0
      %p284 = por %p282, %p283
      %s286 = sadd.s32 %s285, 1
      %p289 = scmp.eq.s32.totalorder %s36, 1
      %p290 = scmp.ne.s32.totalorder %s285, %s287
      %p291 = scmp.eq.s32.totalorder %s36, 0
      %p292 = por %p290, %p291
      %p293 = scmp.ne.s32.totalorder %s285, %s287
      %p294 = scmp.eq.s32.totalorder %s41, 1
      %p295 = por %p293, %p294
      %p296 = scmp.ne.s32.totalorder %s287, %s288
      %p297 = scmp.eq.s32.totalorder %s41, 0
      %p298 = por %p296, %p297
      %p299 = scmp.ne.s32.totalorder %s287, %s288
      %p300 = scmp.eq.s32.totalorder %s42, 1
      %p301 = por %p299, %p300
      %p303 = scmp.ne.s32.totalorder %s288, %s302
      %p304 = scmp.eq.s32.totalorder %s42, 0
      %p305 = por %p303, %p304
      %s307 = sadd.s32 %s306, 1
      %p310 = scmp.eq.s32.totalorder %s36, 1
      %p311 = scmp.ne.s32.totalorder %s306, %s308
      %p312 = scmp.eq.s32.totalorder %s36, 0
      %p313 = por %p311, %p312
      %p314 = scmp.ne.s32.totalorder %s306, %s308
      %p315 = scmp.eq.s32.totalorder %s41, 1
      %p316 = por %p314, %p315
      %p317 = scmp.ne.s32.totalorder %s308, %s309
      %p318 = scmp.eq.s32.totalorder %s41, 0
      %p319 = por %p317, %p318
      %p320 = scmp.ne.s32.totalorder %s308, %s309
      %p321 = scmp.eq.s32.totalorder %s42, 1
      %p322 = por %p320, %p321
      %p324 = scmp.ne.s32.totalorder %s309, %s323
      %p325 = scmp.eq.s32.totalorder %s42, 0
      %p326 = por %p324, %p325
      %s328 = sadd.s32 %s327, 1
      %p331 = scmp.eq.s32.totalorder %s36, 1
      %p332 = scmp.ne.s32.totalorder %s327, %s329
      %p333 = scmp.eq.s32.totalorder %s36, 0
      %p334 = por %p332, %p333
      %p335 = scmp.ne.s32.totalorder %s327, %s329
      %p336 = scmp.eq.s32.totalorder %s41, 1
      %p337 = por %p335, %p336
      %p338 = scmp.ne.s32.totalorder %s329, %s330
      %p339 = scmp.eq.s32.totalorder %s41, 0
      %p340 = por %p338, %p339
      %p341 = scmp.ne.s32.totalorder %s329, %s330
      %p342 = scmp.eq.s32.totalorder %s42, 1
      %p343 = por %p341, %p342
      %p345 = scmp.ne.s32.totalorder %s330, %s344
      %p346 = scmp.eq.s32.totalorder %s42, 0
      %p347 = por %p345, %p346
      %s349 = sadd.s32 %s348, 1
      %p352 = scmp.eq.s32.totalorder %s36, 1
      %p353 = scmp.ne.s32.totalorder %s348, %s350
      %p354 = scmp.eq.s32.totalorder %s36, 0
      %p355 = por %p353, %p354
      %p356 = scmp.ne.s32.totalorder %s348, %s350
      %p357 = scmp.eq.s32.totalorder %s41, 1
      %p358 = por %p356, %p357
      %p359 = scmp.ne.s32.totalorder %s350, %s351
      %p360 = scmp.eq.s32.totalorder %s41, 0
      %p361 = por %p359, %p360
      %p362 = scmp.ne.s32.totalorder %s350, %s351
      %p363 = scmp.eq.s32.totalorder %s42, 1
      %p364 = por %p362, %p363
      %p366 = scmp.ne.s32.totalorder %s351, %s365
      %p367 = scmp.eq.s32.totalorder %s42, 0
      %p368 = por %p366, %p367
      %s370 = sadd.s32 %s369, 1
      %p373 = scmp.eq.s32.totalorder %s36, 1
      %p374 = scmp.ne.s32.totalorder %s369, %s371
      %p375 = scmp.eq.s32.totalorder %s36, 0
      %p376 = por %p374, %p375
      %p377 = scmp.ne.s32.totalorder %s369, %s371
      %p378 = scmp.eq.s32.totalorder %s41, 1
      %p379 = por %p377, %p378
      %p380 = scmp.ne.s32.totalorder %s371, %s372
      %p381 = scmp.eq.s32.totalorder %s41, 0
      %p382 = por %p380, %p381
      %p383 = scmp.ne.s32.totalorder %s371, %s372
      %p384 = scmp.eq.s32.totalorder %s42, 1
      %p385 = por %p383, %p384
      %p387 = scmp.ne.s32.totalorder %s372, %s386
      %p388 = scmp.eq.s32.totalorder %s42, 0
      %p389 = por %p387, %p388
      %s391 = sadd.s32 %s390, 1
      %p394 = scmp.eq.s32.totalorder %s36, 1
      %p395 = scmp.ne.s32.totalorder %s390, %s392
      %p396 = scmp.eq.s32.totalorder %s36, 0
      %p397 = por %p395, %p396
      %p398 = scmp.ne.s32.totalorder %s390, %s392
      %p399 = scmp.eq.s32.totalorder %s41, 1
      %p400 = por %p398, %p399
      %p401 = scmp.ne.s32.totalorder %s392, %s393
      %p402 = scmp.eq.s32.totalorder %s41, 0
      %p403 = por %p401, %p402
      %p404 = scmp.ne.s32.totalorder %s392, %s393
      %p405 = scmp.eq.s32.totalorder %s42, 1
      %p406 = por %p404, %p405
      %p408 = scmp.ne.s32.totalorder %s393, %s407
      %p409 = scmp.eq.s32.totalorder %s42, 0
      %p410 = por %p408, %p409
      %s412 = sadd.s32 %s411, 1
      %p415 = scmp.eq.s32.totalorder %s36, 1
      %p416 = scmp.ne.s32.totalorder %s411, %s413
      %p417 = scmp.eq.s32.totalorder %s36, 0
      %p418 = por %p416, %p417
      %p419 = scmp.ne.s32.totalorder %s411, %s413
      %p420 = scmp.eq.s32.totalorder %s41, 1
      %p421 = por %p419, %p420
      %p422 = scmp.ne.s32.totalorder %s413, %s414
      %p423 = scmp.eq.s32.totalorder %s41, 0
      %p424 = por %p422, %p423
      %p425 = scmp.ne.s32.totalorder %s413, %s414
      %p426 = scmp.eq.s32.totalorder %s42, 1
      %p427 = por %p425, %p426
      %p429 = scmp.ne.s32.totalorder %s414, %s428
      %p430 = scmp.eq.s32.totalorder %s42, 0
      %p431 = por %p429, %p430
      %s432 = ssub.s32 %s36, %s43
      %p433 = scmp.eq.s32.totalorder %s432, 0
      %s435 = sadd.s32 %s434, 1
      %s436 = scalar_select %p433, %s434, %s435
      %p439 = pneg %p433
      %p440 = scmp.eq.s32.totalorder %s36, 1
      %p441 = por %p439, %p440
      %p442 = scmp.ne.s32.totalorder %s434, %s437
      %p443 = scmp.eq.s32.totalorder %s36, 0
      %p444 = por %p442, %p443
      %p445 = scmp.ne.s32.totalorder %s434, %s437
      %p446 = scmp.eq.s32.totalorder %s41, 1
      %p447 = por %p445, %p446
      %p448 = scmp.ne.s32.totalorder %s437, %s438
      %p449 = scmp.eq.s32.totalorder %s41, 0
      %p450 = por %p448, %p449
      %p451 = scmp.ne.s32.totalorder %s437, %s438
      %p452 = scmp.eq.s32.totalorder %s42, 1
      %p453 = por %p451, %p452
      %p455 = scmp.ne.s32.totalorder %s438, %s454
      %p456 = scmp.eq.s32.totalorder %s42, 0
      %p457 = por %p455, %p456
      %p458 = scmp.le.s32.totalorder 1, %s36
      %p459 = scmp.lt.s32.totalorder %s36, 3
      %p460 = pnand %p458, %p459
      %p461 = pneg %p460
      // Predicated region
      $region9: #{w2v_encoder_forward.1} parent=5 // pred_check
        _
      $region10: #{w2v_encoder_forward.1} parent=5 // pred_check_branch
        %463 = sbr.rel (%p460) target = $region12
      $region11: #{w2v_encoder_forward.1} parent=5 // pred_region
        %s464 = ssub.s32 %s36, 1
        // Predicated region
        $region13: #{w2v_encoder_forward.1} parent=11 // pred_check
          %p465 = pneg %p109
        $region14: #{w2v_encoder_forward.1} parent=11 // pred_check_branch
          %467 = sbr.rel (%p465) target = $region16
        $region15: #{w2v_encoder_forward.1} parent=11 // pred_region
          _
        $region16: #{w2v_encoder_forward.1} parent=11 // pred_fallthru
          _
        // Predicated region
        $region17: #{w2v_encoder_forward.1} parent=11 // pred_check
          %p468 = pneg %p130
        $region18: #{w2v_encoder_forward.1} parent=11 // pred_check_branch
          %470 = sbr.rel (%p468) target = $region20
        $region19: #{w2v_encoder_forward.1} parent=11 // pred_region
          _
        $region20: #{w2v_encoder_forward.1} parent=11 // pred_fallthru
          _
        // Predicated region
        $region21: #{w2v_encoder_forward.1} parent=11 // pred_check
          %p471 = pneg %p151
        $region22: #{w2v_encoder_forward.1} parent=11 // pred_check_branch
          %473 = sbr.rel (%p471) target = $region24
        $region23: #{w2v_encoder_forward.1} parent=11 // pred_region
          _
        $region24: #{w2v_encoder_forward.1} parent=11 // pred_fallthru
          _
        // Predicated region
        $region25: #{w2v_encoder_forward.1} parent=11 // pred_check
          %p474 = pneg %p172
        $region26: #{w2v_encoder_forward.1} parent=11 // pred_check_branch
          %476 = sbr.rel (%p474) target = $region28
        $region27: #{w2v_encoder_forward.1} parent=11 // pred_region
          _
        $region28: #{w2v_encoder_forward.1} parent=11 // pred_fallthru
          _
        // Predicated region
        $region29: #{w2v_encoder_forward.1} parent=11 // pred_check
          %p477 = pneg %p193
        $region30: #{w2v_encoder_forward.1} parent=11 // pred_check_branch
          %479 = sbr.rel (%p477) target = $region32
        $region31: #{w2v_encoder_forward.1} parent=11 // pred_region
          _
        $region32: #{w2v_encoder_forward.1} parent=11 // pred_fallthru
          _
        // Predicated region
        $region33: #{w2v_encoder_forward.1} parent=11 // pred_check
          %p480 = pneg %p214
        $region34: #{w2v_encoder_forward.1} parent=11 // pred_check_branch
          %482 = sbr.rel (%p480) target = $region36
        $region35: #{w2v_encoder_forward.1} parent=11 // pred_region
          _
        $region36: #{w2v_encoder_forward.1} parent=11 // pred_fallthru
          _
        // Predicated region
        $region37: #{w2v_encoder_forward.1} parent=11 // pred_check
          %p483 = pneg %p235
        $region38: #{w2v_encoder_forward.1} parent=11 // pred_check_branch
          %485 = sbr.rel (%p483) target = $region40
        $region39: #{w2v_encoder_forward.1} parent=11 // pred_region
          _
        $region40: #{w2v_encoder_forward.1} parent=11 // pred_fallthru
          _
        // Predicated region
        $region41: #{w2v_encoder_forward.1} parent=11 // pred_check
          %p486 = pneg %p256
        $region42: #{w2v_encoder_forward.1} parent=11 // pred_check_branch
          %488 = sbr.rel (%p486) target = $region44
        $region43: #{w2v_encoder_forward.1} parent=11 // pred_region
          _
        $region44: #{w2v_encoder_forward.1} parent=11 // pred_fallthru
          _
        // Predicated region
        $region45: #{w2v_encoder_forward.1} parent=11 // pred_check
          %p489 = pneg %p277
        $region46: #{w2v_encoder_forward.1} parent=11 // pred_check_branch
          %491 = sbr.rel (%p489) target = $region48
        $region47: #{w2v_encoder_forward.1} parent=11 // pred_region
          _
        $region48: #{w2v_encoder_forward.1} parent=11 // pred_fallthru
          _
        // Predicated region
        $region49: #{w2v_encoder_forward.1} parent=11 // pred_check
          %p492 = pneg %p298
        $region50: #{w2v_encoder_forward.1} parent=11 // pred_check_branch
          %494 = sbr.rel (%p492) target = $region52
        $region51: #{w2v_encoder_forward.1} parent=11 // pred_region
          _
        $region52: #{w2v_encoder_forward.1} parent=11 // pred_fallthru
          _
        // Predicated region
        $region53: #{w2v_encoder_forward.1} parent=11 // pred_check
          %p495 = pneg %p319
        $region54: #{w2v_encoder_forward.1} parent=11 // pred_check_branch
          %497 = sbr.rel (%p495) target = $region56
        $region55: #{w2v_encoder_forward.1} parent=11 // pred_region
          _
        $region56: #{w2v_encoder_forward.1} parent=11 // pred_fallthru
          _
        // Predicated region
        $region57: #{w2v_encoder_forward.1} parent=11 // pred_check
          %p498 = pneg %p340
        $region58: #{w2v_encoder_forward.1} parent=11 // pred_check_branch
          %500 = sbr.rel (%p498) target = $region60
        $region59: #{w2v_encoder_forward.1} parent=11 // pred_region
          _
        $region60: #{w2v_encoder_forward.1} parent=11 // pred_fallthru
          _
        // Predicated region
        $region61: #{w2v_encoder_forward.1} parent=11 // pred_check
          %p501 = pneg %p361
        $region62: #{w2v_encoder_forward.1} parent=11 // pred_check_branch
          %503 = sbr.rel (%p501) target = $region64
        $region63: #{w2v_encoder_forward.1} parent=11 // pred_region
          _
        $region64: #{w2v_encoder_forward.1} parent=11 // pred_fallthru
          _
        // Predicated region
        $region65: #{w2v_encoder_forward.1} parent=11 // pred_check
          %p504 = pneg %p382
        $region66: #{w2v_encoder_forward.1} parent=11 // pred_check_branch
          %506 = sbr.rel (%p504) target = $region68
        $region67: #{w2v_encoder_forward.1} parent=11 // pred_region
          _
        $region68: #{w2v_encoder_forward.1} parent=11 // pred_fallthru
          _
        // Predicated region
        $region69: #{w2v_encoder_forward.1} parent=11 // pred_check
          %p507 = pneg %p403
        $region70: #{w2v_encoder_forward.1} parent=11 // pred_check_branch
          %509 = sbr.rel (%p507) target = $region72
        $region71: #{w2v_encoder_forward.1} parent=11 // pred_region
          _
        $region72: #{w2v_encoder_forward.1} parent=11 // pred_fallthru
          _
        // Predicated region
        $region73: #{w2v_encoder_forward.1} parent=11 // pred_check
          %p510 = pneg %p424
        $region74: #{w2v_encoder_forward.1} parent=11 // pred_check_branch
          %512 = sbr.rel (%p510) target = $region76
        $region75: #{w2v_encoder_forward.1} parent=11 // pred_region
          _
        $region76: #{w2v_encoder_forward.1} parent=11 // pred_fallthru
          _
      $region12: #{w2v_encoder_forward.1} parent=5 // pred_fallthru
        _
      %p513 = scmp.lt.s32.totalorder %s36, 2
      // Predicated region
      $region77: #{w2v_encoder_forward.1} parent=5 // pred_check
        %p514 = pneg %p513
      $region78: #{w2v_encoder_forward.1} parent=5 // pred_check_branch
        %516 = sbr.rel (%p514) target = $region80
      $region79: #{w2v_encoder_forward.1} parent=5 // pred_region
        // Predicated region
        $region81: #{w2v_encoder_forward.1} parent=79 // pred_check
          %p517 = pneg %p56
        $region82: #{w2v_encoder_forward.1} parent=79 // pred_check_branch
          %519 = sbr.rel (%p517) target = $region84
        $region83: #{w2v_encoder_forward.1} parent=79 // pred_region
          %p520 = scmp.lt.s32.totalorder %s36, 1
          %s521 = scalar_select %p520, %s36, 1
          %s522 = smul.addr %s521, 2
          %s523 = smul.addr %s522, 8
          %s524 = scalar_lea.vmem %s1, %s523
        $region84: #{w2v_encoder_forward.1} parent=79 // pred_fallthru
          _
        // Predicated region
        $region85: #{w2v_encoder_forward.1} parent=79 // pred_check
          %p525 = pneg %p82
        $region86: #{w2v_encoder_forward.1} parent=79 // pred_check_branch
          %527 = sbr.rel (%p525) target = $region88
        $region87: #{w2v_encoder_forward.1} parent=79 // pred_region
          %p528 = scmp.lt.s32.totalorder %s36, 1
          %s529 = scalar_select %p528, %s36, 1
          %s530 = smul.addr %s529, 2
          %s531 = scalar_lea.vmem %s2, %s530
        $region88: #{w2v_encoder_forward.1} parent=79 // pred_fallthru
          _
      $region80: #{w2v_encoder_forward.1} parent=5 // pred_fallthru
        _
      %p532 = scmp.le.s32.totalorder 1, %s36
      %p533 = scmp.lt.s32.totalorder %s36, 3
      %p534 = pnand %p532, %p533
      %p535 = pneg %p534
      // Predicated region
      $region89: #{w2v_encoder_forward.1} parent=5 // pred_check
        _
      $region90: #{w2v_encoder_forward.1} parent=5 // pred_check_branch
        %537 = sbr.rel (%p534) target = $region92
      $region91: #{w2v_encoder_forward.1} parent=5 // pred_region
        %s538 = ssub.s32 %s36, 1
        %p539 = scmp.lt.s32.totalorder %s41, 1
        %s540 = scalar_select %p539, %s41, 1
        %s541 = smul.addr %s540, 2
        %s542 = smul.addr %s541, 8
        %s543 = scalar_lea.vmem %s1, %s542
        %p544 = pneg %p62
        %p545 = pneg %p59
        %p546 = scmp.lt.s32.totalorder %s41, 1
        %s547 = scalar_select %p546, %s41, 1
        %s548 = smul.addr %s547, 2
        %s549 = scalar_lea.vmem %s2, %s548
        %p550 = pneg %p88
        %p551 = pneg %p85
        %p552 = pneg %p109
        %p553 = pneg %p106
        %p554 = pneg %p130
        %p555 = pneg %p127
        %p556 = pneg %p151
        %p557 = pneg %p148
        %p558 = pneg %p172
        %p559 = pneg %p169
        %p560 = pneg %p193
        %p561 = pneg %p190
        %p562 = pneg %p214
        %p563 = pneg %p211
        %p564 = pneg %p235
        %p565 = pneg %p232
        %p566 = pneg %p256
        %p567 = pneg %p253
        %p568 = pneg %p277
        %p569 = pneg %p274
        %p570 = pneg %p298
        %p571 = pneg %p295
        %p572 = pneg %p319
        %p573 = pneg %p316
        %p574 = pneg %p340
        %p575 = pneg %p337
        %p576 = pneg %p361
        %p577 = pneg %p358
        %p578 = pneg %p382
        %p579 = pneg %p379
        %p580 = pneg %p403
        %p581 = pneg %p400
        %p582 = pneg %p424
        %p583 = pneg %p421
        %p584 = pneg %p450
        %p585 = pneg %p447
        %s586 = sand.u32 %s437, 1
        %s587 = scalar_lea.sflag [#allocation5], %s586
        %s588 = sand.u32 %s437, 1
        %s589 = smul.addr %s588, 16
        %s590 = scalar_lea.vmem [#allocation4], %s589
        %p591 = scmp.lt.s32.totalorder %s41, 1
        %s592 = scalar_select %p591, %s41, 1
        %s593 = smul.addr %s592, 2
        %s594 = smul.addr %s593, 8
        %s595 = scalar_lea.vmem %s1, %s594
        %p596 = scmp.lt.s32.totalorder %s41, 1
        %s597 = scalar_select %p596, %s41, 1
        %s598 = smul.addr %s597, 2
        %s599 = scalar_lea.vmem %s2, %s598
        %s601 = sld [smem:[#allocation3 + %s41]]
        %v602 = vlaneseq
        %v603 = vshrl.u32 %v602, 7
        %v604 = vadd.s32 %v603, 8
        %v605 = vstv %s601
        %vm606 = vcmp.lt.s32.totalorder %v603, %v605
        %vm607 = vcmp.lt.s32.totalorder %v604, %v605
        %v608 = vsel %vm606, 1, 0
        %v609 = vsel %vm607, 1, 0
        %v610 = vcvt.s32.f32 %v608
        %v611 = vcvt.s32.f32 %v609
        %v612 = vlaneseq
        %v613 = vand.u32 %v612, 127
        %vm614 = vcmp.lt.s32.totalorder %v613, %v605
        %v615 = vsel %vm614, 1, 0
        %v616 = vcvt.s32.f32 %v615
        %v617 = vmul.f32 %v610, %v616
        %v618 = vmul.f32 %v611, %v616
        %v619 = vsub.f32 %v617, 1.0
        %v620 = vsub.f32 %v618, 1.0
        %v621 = vmul.f32 %v619, 10000.0
        %v622 = vmul.f32 %v620, 10000.0
        %v623 = vsub.s32 %v613, %v603
        %v624 = vsub.s32 %v613, %v604
        %v625 = vadd.s32 %v623, 4
        %v626 = vadd.s32 %v624, 4
        %vm627 = vcmp.eq.s32.totalorder %v625, 0
        %vm628 = vcmp.eq.s32.totalorder %v626, 0
        %v629 = vsel %vm627, 1, 0
        %v630 = vsel %vm628, 1, 0
        %v631 = vcvt.s32.f32 %v629
        %v632 = vcvt.s32.f32 %v630
        %vm633 = vcmp.eq.s32.totalorder %v625, 1
        %vm634 = vcmp.eq.s32.totalorder %v626, 1
        %v635 = vsel %vm633, 1, 0
        %v636 = vsel %vm634, 1, 0
        %v637 = vcvt.s32.f32 %v635
        %v638 = vcvt.s32.f32 %v636
        %vm639 = vcmp.eq.s32.totalorder %v625, 2
        %vm640 = vcmp.eq.s32.totalorder %v626, 2
        %v641 = vsel %vm639, 1, 0
        %v642 = vsel %vm640, 1, 0
        %v643 = vcvt.s32.f32 %v641
        %v644 = vcvt.s32.f32 %v642
        %vm645 = vcmp.eq.s32.totalorder %v625, 3
        %vm646 = vcmp.eq.s32.totalorder %v626, 3
        %v647 = vsel %vm645, 1, 0
        %v648 = vsel %vm646, 1, 0
        %v649 = vcvt.s32.f32 %v647
        %v650 = vcvt.s32.f32 %v648
        %vm651 = vcmp.eq.s32.totalorder %v625, 4
        %vm652 = vcmp.eq.s32.totalorder %v626, 4
        %v653 = vsel %vm651, 1, 0
        %v654 = vsel %vm652, 1, 0
        %v655 = vcvt.s32.f32 %v653
        %v656 = vcvt.s32.f32 %v654
        %vm657 = vcmp.eq.s32.totalorder %v625, 5
        %vm658 = vcmp.eq.s32.totalorder %v626, 5
        %v659 = vsel %vm657, 1, 0
        %v660 = vsel %vm658, 1, 0
        %v661 = vcvt.s32.f32 %v659
        %v662 = vcvt.s32.f32 %v660
        %vm663 = vcmp.eq.s32.totalorder %v625, 6
        %vm664 = vcmp.eq.s32.totalorder %v626, 6
        %v665 = vsel %vm663, 1, 0
        %v666 = vsel %vm664, 1, 0
        %v667 = vcvt.s32.f32 %v665
        %v668 = vcvt.s32.f32 %v666
        %vm669 = vcmp.eq.s32.totalorder %v625, 7
        %vm670 = vcmp.eq.s32.totalorder %v626, 7
        %v671 = vsel %vm669, 1, 0
        %v672 = vsel %vm670, 1, 0
        %v673 = vcvt.s32.f32 %v671
        %v674 = vcvt.s32.f32 %v672
        %vm675 = vcmp.eq.s32.totalorder %v625, 8
        %vm676 = vcmp.eq.s32.totalorder %v626, 8
        %v677 = vsel %vm675, 1, 0
        %v678 = vsel %vm676, 1, 0
        %v679 = vcvt.s32.f32 %v677
        %v680 = vcvt.s32.f32 %v678
        %vm681 = vcmp.eq.s32.totalorder %v613, 0
        %v682 = vsel %vm681, 1, 0
        %v683 = vcvt.s32.f32 %v682
        %vm684 = vcmp.eq.s32.totalorder %v613, 1
        %v685 = vsel %vm684, 1, 0
        %v686 = vcvt.s32.f32 %v685
        %vm687 = vcmp.eq.s32.totalorder %v613, 2
        %v688 = vsel %vm687, 1, 0
        %v689 = vcvt.s32.f32 %v688
        %vm690 = vcmp.eq.s32.totalorder %v613, 3
        %v691 = vsel %vm690, 1, 0
        %v692 = vcvt.s32.f32 %v691
        %vm693 = vcmp.eq.s32.totalorder %v613, 4
        %v694 = vsel %vm693, 1, 0
        %v695 = vcvt.s32.f32 %v694
        %vm696 = vcmp.eq.s32.totalorder %v613, 5
        %v697 = vsel %vm696, 1, 0
        %v698 = vcvt.s32.f32 %v697
        %vm699 = vcmp.eq.s32.totalorder %v613, 6
        %v700 = vsel %vm699, 1, 0
        %v701 = vcvt.s32.f32 %v700
        %vm702 = vcmp.eq.s32.totalorder %v613, 7
        %v703 = vsel %vm702, 1, 0
        %v704 = vcvt.s32.f32 %v703
        %vm705 = vcmp.eq.s32.totalorder %v613, 8
        %v706 = vsel %vm705, 1, 0
        %v707 = vcvt.s32.f32 %v706
        %v708 = vld [vmem:[%s599] sm:$0x3]
        %v710 = vperm.slane %v708, 0
        %v711 = vperm.slane %v708, 1
        %v714 = vpack.c.bf16 %v710, %v710
        %v715 = vpack.c.bf16 %v711, %v711
        %v716 = vld [vmem:[%s3] sm:$0xf]
        %v717 = vld [vmem:[%s3 + $0x4] sm:$0xf]
        %v718 = vld [vmem:[%s3 + $0x8] sm:$0xf]
        %v719 = vld [vmem:[%s3 + $0xc] sm:$0xf]
        %v720 = vld [vmem:[%s3 + $0x10] sm:$0xf]
        %v721 = vld [vmem:[%s3 + $0x14] sm:$0xf]
        %v722 = vld [vmem:[%s3 + $0x18] sm:$0xf]
        %v723 = vld [vmem:[%s3 + $0x1c] sm:$0xf]
        %v724 = vld [vmem:[%s3 + $0x20] sm:$0xf]
        %v725 = vld [vmem:[%s3 + $0x24] sm:$0xf]
        %v726 = vld [vmem:[%s3 + $0x28] sm:$0xf]
        %v727 = vld [vmem:[%s3 + $0x2c] sm:$0xf]
        %v728 = vld [vmem:[%s3 + $0x30] sm:$0xf]
        %v729 = vld [vmem:[%s3 + $0x34] sm:$0xf]
        %v730 = vld [vmem:[%s3 + $0x38] sm:$0xf]
        %v731 = vld [vmem:[%s3 + $0x3c] sm:$0xf]
        %v732 = vld [vmem:[%s3 + $0x40] sm:$0xf]
        %v733 = vld [vmem:[%s3 + $0x44] sm:$0xf]
        %v734 = vld [vmem:[%s3 + $0x48] sm:$0xf]
        %v735 = vld [vmem:[%s3 + $0x4c] sm:$0xf]
        %v736 = vld [vmem:[%s3 + $0x50] sm:$0xf]
        %v737 = vld [vmem:[%s3 + $0x54] sm:$0xf]
        %v738 = vld [vmem:[%s3 + $0x58] sm:$0xf]
        %v739 = vld [vmem:[%s3 + $0x5c] sm:$0xf]
        %v740 = vld [vmem:[%s3 + $0x60] sm:$0xf]
        %v741 = vld [vmem:[%s3 + $0x64] sm:$0xf]
        %v742 = vld [vmem:[%s3 + $0x68] sm:$0xf]
        %v743 = vld [vmem:[%s3 + $0x6c] sm:$0xf]
        %v744 = vld [vmem:[%s3 + $0x70] sm:$0xf]
        %v745 = vld [vmem:[%s3 + $0x74] sm:$0xf]
        %v746 = vld [vmem:[%s3 + $0x78] sm:$0xf]
        %v747 = vld [vmem:[%s3 + $0x7c] sm:$0xf]
        %v748 = vld [vmem:[%s4] sm:$0x1]
        %v781 = vunpack.c.l.b16 %v716
        %v782 = vunpack.c.l.b16 %v717
        %v783 = vunpack.c.l.b16 %v718
        %v784 = vunpack.c.l.b16 %v719
        %v785 = vunpack.c.l.b16 %v720
        %v786 = vunpack.c.l.b16 %v721
        %v787 = vunpack.c.l.b16 %v722
        %v788 = vunpack.c.l.b16 %v723
        %v789 = vunpack.c.l.b16 %v724
        %v790 = vunpack.c.l.b16 %v725
        %v791 = vunpack.c.l.b16 %v726
        %v792 = vunpack.c.l.b16 %v727
        %v793 = vunpack.c.l.b16 %v728
        %v794 = vunpack.c.l.b16 %v729
        %v795 = vunpack.c.l.b16 %v730
        %v796 = vunpack.c.l.b16 %v731
        %v797 = vunpack.c.l.b16 %v732
        %v798 = vunpack.c.l.b16 %v733
        %v799 = vunpack.c.l.b16 %v734
        %v800 = vunpack.c.l.b16 %v735
        %v801 = vunpack.c.l.b16 %v736
        %v802 = vunpack.c.l.b16 %v737
        %v803 = vunpack.c.l.b16 %v738
        %v804 = vunpack.c.l.b16 %v739
        %v805 = vunpack.c.l.b16 %v740
        %v806 = vunpack.c.l.b16 %v741
        %v807 = vunpack.c.l.b16 %v742
        %v808 = vunpack.c.l.b16 %v743
        %v809 = vunpack.c.l.b16 %v744
        %v810 = vunpack.c.l.b16 %v745
        %v811 = vunpack.c.l.b16 %v746
        %v812 = vunpack.c.l.b16 %v747
        %v813 = vpack.c.b16 %v782, %v781
        %v814 = vpack.c.b16 %v784, %v783
        %v815 = vpack.c.b16 %v786, %v785
        %v816 = vpack.c.b16 %v788, %v787
        %v817 = vpack.c.b16 %v790, %v789
        %v818 = vpack.c.b16 %v792, %v791
        %v819 = vpack.c.b16 %v794, %v793
        %v820 = vpack.c.b16 %v796, %v795
        %v821 = vpack.c.b16 %v798, %v797
        %v822 = vpack.c.b16 %v800, %v799
        %v823 = vpack.c.b16 %v802, %v801
        %v824 = vpack.c.b16 %v804, %v803
        %v825 = vpack.c.b16 %v806, %v805
        %v826 = vpack.c.b16 %v808, %v807
        %v827 = vpack.c.b16 %v810, %v809
        %v828 = vpack.c.b16 %v812, %v811
        %845 = vmatpush.bf16.msra.mxu0 %v820
        %846 = vmatpush.bf16.msra.mxu0 %v819
        %847 = vmatpush.bf16.msra.mxu0 %v818
        %848 = vmatpush.bf16.msra.mxu0 %v817
        %849 = vmatpush.bf16.msra.mxu0 %v816
        %850 = vmatpush.bf16.msra.mxu0 %v815
        %851 = vmatpush.bf16.msra.mxu0 %v814
        %852 = vmatpush.bf16.msra.mxu0 %v813
        %853 = vmatmul.bf16.gmra.mxu0 %v714
        %v854 = vpop.f32.mrf.mxu0
        %v855 = vadd.f32 %v748, %v854
        %v856 = vpop.f32.mrf.mxu0
        %857 = vdwg.mxu0
        %858 = vmatpush.bf16.msra.mxu0 %v828
        %859 = vmatpush.bf16.msra.mxu0 %v827
        %860 = vmatpush.bf16.msra.mxu0 %v826
        %861 = vmatpush.bf16.msra.mxu0 %v825
        %862 = vmatpush.bf16.msra.mxu0 %v824
        %863 = vmatpush.bf16.msra.mxu0 %v823
        %864 = vmatpush.bf16.msra.mxu0 %v822
        %865 = vmatpush.bf16.msra.mxu0 %v821
        %866 = vmatmul.bf16.gmra.mxu0 %v715
        %v867 = vpop.f32.mrf.mxu0
        %v868 = vadd.f32 %v855, %v867
        %v869 = vpop.f32.mrf.mxu0
        %870 = vdwg.mxu0
        %v871 = vld [vmem:[%s595] sm:$0xff]
        %v872 = vld [vmem:[%s595 + $0x8] sm:$0xff]
        %v873 = vperm.slane %v868, 0
        %v874 = vadd.f32 %v871, %v873
        %v875 = vadd.f32 %v872, %v873
        %v876 = vmul.f32 %v874, %v610
        %v877 = vmul.f32 %v875, %v611
        %v878 = vpack.c.bf16 %v877, %v876
        %v879 = vld [vmem:[%s5] sm:$0xf]
        %v880 = vld [vmem:[%s5 + $0x4] sm:$0xf]
        %v881 = vld [vmem:[%s5 + $0x8] sm:$0xf]
        %v882 = vld [vmem:[%s5 + $0xc] sm:$0xf]
        %v883 = vld [vmem:[%s6] sm:$0x1]
        %v885 = vperm.slane %v883, 0
        %v891 = vunpack.c.l.b16 %v879
        %v892 = vunpack.c.l.b16 %v880
        %v893 = vunpack.c.l.b16 %v881
        %v894 = vunpack.c.l.b16 %v882
        %v895 = vpack.c.b16 %v892, %v891
        %v896 = vpack.c.b16 %v894, %v893
        %vm899 = vcmask 261120
        %v901 = vsel %vm899, %v878, 0
        %903 = vmatpush.bf16.msra.mxu0 0
        %904 = vmatpush.bf16.msra.mxu0 0
        %905 = vmatpush.bf16.msra.mxu0 0
        %906 = vmatpush.bf16.msra.mxu0 0
        %907 = vmatpush.bf16.msra.mxu0 0
        %908 = vmatpush.bf16.msra.mxu0 0
        %909 = vmatpush.bf16.msra.mxu0 %v896
        %910 = vmatpush.bf16.msra.mxu0 %v895
        %911 = vmatmul.bf16.gmra.mxu0 %v901
        %v912 = vpop.f32.mrf.mxu0
        %v913 = vadd.f32 %v885, %v912
        %v914 = vpop.f32.mrf.mxu0
        %v915 = vadd.f32 %v885, %v914
        %916 = vdwg.mxu0
        %v917 = vmul.f32 %v913, 0.25
        %v918 = vmul.f32 %v915, 0.25
        %v919 = vpack.c.bf16 %v917, %v917
        %v920 = vpack.c.bf16 %v918, %v918
        %v921 = vpack.c.bf16 %v913, %v913
        %v922 = vpack.c.bf16 %v915, %v915
        %v923 = vld [vmem:[%s9] sm:$0xf]
        %v924 = vld [vmem:[%s9 + $0x4] sm:$0xf]
        %v925 = vld [vmem:[%s9 + $0x8] sm:$0xf]
        %v926 = vld [vmem:[%s9 + $0xc] sm:$0xf]
        %v929 = vunpack.c.l.b16 %v919
        %v930 = vunpack.c.l.b16 %v920
        %v931 = vpack.c.b16 %v930, %v929
        %v936 = vunpack.c.l.b16 %v923
        %v937 = vunpack.c.l.b16 %v924
        %v938 = vunpack.c.l.b16 %v925
        %v939 = vunpack.c.l.b16 %v926
        %v940 = vpack.c.b16 %v937, %v936
        %v941 = vpack.c.b16 %v939, %v938
        %v945 = vsel %vm899, %v931, 0
        %947 = vmatpush.bf16.msra.mxu0 0
        %948 = vmatpush.bf16.msra.mxu0 0
        %949 = vmatpush.bf16.msra.mxu0 0
        %950 = vmatpush.bf16.msra.mxu0 0
        %951 = vmatpush.bf16.msra.mxu0 0
        %952 = vmatpush.bf16.msra.mxu0 0
        %953 = vmatpush.bf16.msra.mxu0 %v941
        %954 = vmatpush.bf16.msra.mxu0 %v940
        %955 = vmatmul.bf16.gmra.mxu0 %v945
        %v956 = vpop.f32.mrf.mxu0
        %v957 = vadd.f32 0.0, %v956
        %v958 = vpop.f32.mrf.mxu0
        %v959 = vadd.f32 0.0, %v958
        %960 = vdwg.mxu0
        %962 = vset.pattern.permute.xlu0 0
        %963 = vperm.xlu0 %962, %v957
        %v964 = vpop.permute.xlu0 %963
        %967 = vset.pattern.permute.xlu0 0
        %968 = vperm.xlu0 %967, %v959
        %v969 = vpop.permute.xlu0 %968
        %v971 = vmul.f32 %v964, %v631
        %v972 = vmul.f32 %v969, %v632
        %v975 = vunpack.c.l.b16 %v921
        %v976 = vunpack.c.l.b16 %v922
        %v977 = vpack.c.b16 %v976, %v975
        %978 = vrot.lane.b32.xlu0 %v977, 96
        %v979 = vpop.permute.xlu0 %978
        %vm980 = vcmask 130048
        %v981 = vsel %vm980, %v931, 0
        %v984 = vsel %vm980, %v979, 0
        %986 = vmatpush.bf16.xpose.msra.mxu0 0
        %987 = vmatpush.bf16.xpose.msra.mxu0 0
        %988 = vmatpush.bf16.xpose.msra.mxu0 0
        %989 = vmatpush.bf16.xpose.msra.mxu0 0
        %990 = vmatpush.bf16.xpose.msra.mxu0 0
        %991 = vmatpush.bf16.xpose.msra.mxu0 0
        %992 = vmatpush.bf16.xpose.msra.mxu0 0
        %993 = vmatpush.bf16.xpose.msra.mxu0 %v984
        %994 = vmatmul.bf16.gmra.mxu0 %v981
        %v995 = vpop.f32.mrf.mxu0
        %v996 = vadd.f32 %v971, %v995
        %v997 = vpop.f32.mrf.mxu0
        %v998 = vadd.f32 %v972, %v997
        %999 = vdwg.mxu0
        %1000 = vset.pattern.permute.xlu0 1
        %1001 = vperm.xlu0 %1000, %v957
        %v1002 = vpop.permute.xlu0 %1001
        %1004 = vset.pattern.permute.xlu0 1
        %1005 = vperm.xlu0 %1004, %v959
        %v1006 = vpop.permute.xlu0 %1005
        %v1008 = vmul.f32 %v1002, %v637
        %v1009 = vmul.f32 %v1006, %v638
        %v1010 = vadd.f32 %v996, %v1008
        %v1011 = vadd.f32 %v998, %v1009
        %1012 = vset.pattern.permute.xlu0 2
        %1013 = vperm.xlu0 %1012, %v957
        %v1014 = vpop.permute.xlu0 %1013
        %1016 = vset.pattern.permute.xlu0 2
        %1017 = vperm.xlu0 %1016, %v959
        %v1018 = vpop.permute.xlu0 %1017
        %v1020 = vmul.f32 %v1014, %v643
        %v1021 = vmul.f32 %v1018, %v644
        %v1022 = vadd.f32 %v1010, %v1020
        %v1023 = vadd.f32 %v1011, %v1021
        %1024 = vset.pattern.permute.xlu0 3
        %1025 = vperm.xlu0 %1024, %v957
        %v1026 = vpop.permute.xlu0 %1025
        %1028 = vset.pattern.permute.xlu0 3
        %1029 = vperm.xlu0 %1028, %v959
        %v1030 = vpop.permute.xlu0 %1029
        %v1032 = vmul.f32 %v1026, %v649
        %v1033 = vmul.f32 %v1030, %v650
        %v1034 = vadd.f32 %v1022, %v1032
        %v1035 = vadd.f32 %v1023, %v1033
        %1036 = vset.pattern.permute.xlu0 4
        %1037 = vperm.xlu0 %1036, %v957
        %v1038 = vpop.permute.xlu0 %1037
        %1040 = vset.pattern.permute.xlu0 4
        %1041 = vperm.xlu0 %1040, %v959
        %v1042 = vpop.permute.xlu0 %1041
        %v1044 = vmul.f32 %v1038, %v655
        %v1045 = vmul.f32 %v1042, %v656
        %v1046 = vadd.f32 %v1034, %v1044
        %v1047 = vadd.f32 %v1035, %v1045
        %1048 = vset.pattern.permute.xlu0 5
        %1049 = vperm.xlu0 %1048, %v957
        %v1050 = vpop.permute.xlu0 %1049
        %1052 = vset.pattern.permute.xlu0 5
        %1053 = vperm.xlu0 %1052, %v959
        %v1054 = vpop.permute.xlu0 %1053
        %v1056 = vmul.f32 %v1050, %v661
        %v1057 = vmul.f32 %v1054, %v662
        %v1058 = vadd.f32 %v1046, %v1056
        %v1059 = vadd.f32 %v1047, %v1057
        %1060 = vset.pattern.permute.xlu0 6
        %1061 = vperm.xlu0 %1060, %v957
        %v1062 = vpop.permute.xlu0 %1061
        %1064 = vset.pattern.permute.xlu0 6
        %1065 = vperm.xlu0 %1064, %v959
        %v1066 = vpop.permute.xlu0 %1065
        %v1068 = vmul.f32 %v1062, %v667
        %v1069 = vmul.f32 %v1066, %v668
        %v1070 = vadd.f32 %v1058, %v1068
        %v1071 = vadd.f32 %v1059, %v1069
        %1072 = vset.pattern.permute.xlu0 7
        %1073 = vperm.xlu0 %1072, %v957
        %v1074 = vpop.permute.xlu0 %1073
        %1076 = vset.pattern.permute.xlu0 7
        %1077 = vperm.xlu0 %1076, %v959
        %v1078 = vpop.permute.xlu0 %1077
        %v1080 = vmul.f32 %v1074, %v673
        %v1081 = vmul.f32 %v1078, %v674
        %v1082 = vadd.f32 %v1070, %v1080
        %v1083 = vadd.f32 %v1071, %v1081
        %1084 = vset.pattern.permute.xlu0 8
        %1085 = vperm.xlu0 %1084, %v957
        %v1086 = vpop.permute.xlu0 %1085
        %1088 = vset.pattern.permute.xlu0 8
        %1089 = vperm.xlu0 %1088, %v959
        %v1090 = vpop.permute.xlu0 %1089
        %v1092 = vmul.f32 %v1086, %v679
        %v1093 = vmul.f32 %v1090, %v680
        %v1094 = vadd.f32 %v1082, %v1092
        %v1095 = vadd.f32 %v1083, %v1093
        %v1096 = vadd.f32 %v1094, %v621
        %v1097 = vadd.f32 %v1095, %v622
        %v1098 = vsel %vm980, %v1096, -inf
        %1099 = vmax.xlane.f32.xlu0 %v1098
        %v1100 = vpop.xlane.xlu0 %1099
        %v1101 = vsel %vm980, %v1097, -inf
        %1102 = vmax.xlane.f32.xlu0 %v1101
        %v1103 = vpop.xlane.xlu0 %1102
        %v1104 = vsub.f32 %v1096, %v1100
        %v1105 = vsub.f32 %v1097, %v1103
        %v1106 = vmul.f32 %v1104, 1.442695
        %v1107 = vpow.pop %v1106
        %v1108 = vmul.f32 %v1105, 1.442695
        %v1109 = vpow.pop %v1108
        %v1110 = vsel %vm980, %v1107, 0.0
        %1111 = vadd.xlane.f32.xlu0 %v1110
        %v1112 = vpop.xlane.xlu0 %1111
        %v1113 = vsel %vm980, %v1109, 0.0
        %1114 = vadd.xlane.f32.xlu0 %v1113
        %v1115 = vpop.xlane.xlu0 %1114
        %v1116 = vrcp.pop %v1112
        %v1117 = vmul.f32 %v1112, %v1116
        %v1118 = vsub.f32 1.0, %v1117
        %v1119 = vmul.f32 %v1116, %v1118
        %v1120 = vadd.f32 %v1116, %v1119
        %vm1121 = vweird.f32 %v1112
        %vm1122 = vweird.f32 %v1116
        %vm1123 = vmor %vm1121, %vm1122
        %v1124 = vsel %vm1123, %v1116, %v1120
        %v1125 = vand.u32 2147483647, %v1112
        %vm1126 = vcmp.eq.f32.partialorder %v1125, 8.507059e+37
        %v1127 = vand.u32 %v1112, 2147483648
        %v1128 = vor.u32 1.1754944e-38, %v1127
        %v1129 = vsel %vm1126, %v1128, %v1124
        %v1130 = vmul.f32 %v1107, %v1129
        %v1131 = vrcp.pop %v1115
        %v1132 = vmul.f32 %v1115, %v1131
        %v1133 = vsub.f32 1.0, %v1132
        %v1134 = vmul.f32 %v1131, %v1133
        %v1135 = vadd.f32 %v1131, %v1134
        %vm1136 = vweird.f32 %v1115
        %vm1137 = vweird.f32 %v1131
        %vm1138 = vmor %vm1136, %vm1137
        %v1139 = vsel %vm1138, %v1131, %v1135
        %v1140 = vand.u32 2147483647, %v1115
        %vm1141 = vcmp.eq.f32.partialorder %v1140, 8.507059e+37
        %v1142 = vand.u32 %v1115, 2147483648
        %v1143 = vor.u32 1.1754944e-38, %v1142
        %v1144 = vsel %vm1141, %v1143, %v1139
        %v1145 = vmul.f32 %v1109, %v1144
        %v1146 = vpack.c.bf16 %v1145, %v1130
        %1147 = vrot.lane.b32.xlu0 %v977, 64
        %v1148 = vpop.permute.xlu0 %1147
        %v1151 = vsel %vm980, %v1146, 0
        %1153 = vmatpush.bf16.msra.mxu0 0
        %1154 = vmatpush.bf16.msra.mxu0 0
        %1155 = vmatpush.bf16.msra.mxu0 0
        %1156 = vmatpush.bf16.msra.mxu0 0
        %1157 = vmatpush.bf16.msra.mxu0 0
        %1158 = vmatpush.bf16.msra.mxu0 0
        %1159 = vmatpush.bf16.msra.mxu0 0
        %1160 = vmatpush.bf16.msra.mxu0 %v1148
        %1161 = vmatmul.bf16.gmra.mxu0 %v1151
        %v1162 = vpop.f32.mrf.mxu0
        %v1163 = vadd.f32 0.0, %v1162
        %v1164 = vpop.f32.mrf.mxu0
        %v1165 = vadd.f32 0.0, %v1164
        %1166 = vdwg.mxu0
        %v1167 = vmul.f32 %v1130, %v631
        %v1168 = vmul.f32 %v1145, %v632
        %v1169 = vsel %vm980, %v1167, 0.0
        %1170 = vadd.xlane.f32.xlu0 %v1169
        %v1171 = vpop.xlane.xlu0 %1170
        %v1172 = vsel %vm980, %v1168, 0.0
        %1173 = vadd.xlane.f32.xlu0 %v1172
        %v1174 = vpop.xlane.xlu0 %1173
        %v1175 = vmul.f32 %v1171, %v683
        %v1176 = vmul.f32 %v1174, %v683
        %v1177 = vadd.f32 %v1175, 0.0
        %v1178 = vadd.f32 %v1176, 0.0
        %v1179 = vmul.f32 %v1130, %v637
        %v1180 = vmul.f32 %v1145, %v638
        %v1181 = vsel %vm980, %v1179, 0.0
        %1182 = vadd.xlane.f32.xlu0 %v1181
        %v1183 = vpop.xlane.xlu0 %1182
        %v1184 = vsel %vm980, %v1180, 0.0
        %1185 = vadd.xlane.f32.xlu0 %v1184
        %v1186 = vpop.xlane.xlu0 %1185
        %v1187 = vmul.f32 %v1183, %v686
        %v1188 = vmul.f32 %v1186, %v686
        %v1189 = vadd.f32 %v1177, %v1187
        %v1190 = vadd.f32 %v1178, %v1188
        %v1191 = vmul.f32 %v1130, %v643
        %v1192 = vmul.f32 %v1145, %v644
        %v1193 = vsel %vm980, %v1191, 0.0
        %1194 = vadd.xlane.f32.xlu0 %v1193
        %v1195 = vpop.xlane.xlu0 %1194
        %v1196 = vsel %vm980, %v1192, 0.0
        %1197 = vadd.xlane.f32.xlu0 %v1196
        %v1198 = vpop.xlane.xlu0 %1197
        %v1199 = vmul.f32 %v1195, %v689
        %v1200 = vmul.f32 %v1198, %v689
        %v1201 = vadd.f32 %v1189, %v1199
        %v1202 = vadd.f32 %v1190, %v1200
        %v1203 = vmul.f32 %v1130, %v649
        %v1204 = vmul.f32 %v1145, %v650
        %v1205 = vsel %vm980, %v1203, 0.0
        %1206 = vadd.xlane.f32.xlu0 %v1205
        %v1207 = vpop.xlane.xlu0 %1206
        %v1208 = vsel %vm980, %v1204, 0.0
        %1209 = vadd.xlane.f32.xlu0 %v1208
        %v1210 = vpop.xlane.xlu0 %1209
        %v1211 = vmul.f32 %v1207, %v692
        %v1212 = vmul.f32 %v1210, %v692
        %v1213 = vadd.f32 %v1201, %v1211
        %v1214 = vadd.f32 %v1202, %v1212
        %v1215 = vmul.f32 %v1130, %v655
        %v1216 = vmul.f32 %v1145, %v656
        %v1217 = vsel %vm980, %v1215, 0.0
        %1218 = vadd.xlane.f32.xlu0 %v1217
        %v1219 = vpop.xlane.xlu0 %1218
        %v1220 = vsel %vm980, %v1216, 0.0
        %1221 = vadd.xlane.f32.xlu0 %v1220
        %v1222 = vpop.xlane.xlu0 %1221
        %v1223 = vmul.f32 %v1219, %v695
        %v1224 = vmul.f32 %v1222, %v695
        %v1225 = vadd.f32 %v1213, %v1223
        %v1226 = vadd.f32 %v1214, %v1224
        %v1227 = vmul.f32 %v1130, %v661
        %v1228 = vmul.f32 %v1145, %v662
        %v1229 = vsel %vm980, %v1227, 0.0
        %1230 = vadd.xlane.f32.xlu0 %v1229
        %v1231 = vpop.xlane.xlu0 %1230
        %v1232 = vsel %vm980, %v1228, 0.0
        %1233 = vadd.xlane.f32.xlu0 %v1232
        %v1234 = vpop.xlane.xlu0 %1233
        %v1235 = vmul.f32 %v1231, %v698
        %v1236 = vmul.f32 %v1234, %v698
        %v1237 = vadd.f32 %v1225, %v1235
        %v1238 = vadd.f32 %v1226, %v1236
        %v1239 = vmul.f32 %v1130, %v667
        %v1240 = vmul.f32 %v1145, %v668
        %v1241 = vsel %vm980, %v1239, 0.0
        %1242 = vadd.xlane.f32.xlu0 %v1241
        %v1243 = vpop.xlane.xlu0 %1242
        %v1244 = vsel %vm980, %v1240, 0.0
        %1245 = vadd.xlane.f32.xlu0 %v1244
        %v1246 = vpop.xlane.xlu0 %1245
        %v1247 = vmul.f32 %v1243, %v701
        %v1248 = vmul.f32 %v1246, %v701
        %v1249 = vadd.f32 %v1237, %v1247
        %v1250 = vadd.f32 %v1238, %v1248
        %v1251 = vmul.f32 %v1130, %v673
        %v1252 = vmul.f32 %v1145, %v674
        %v1253 = vsel %vm980, %v1251, 0.0
        %1254 = vadd.xlane.f32.xlu0 %v1253
        %v1255 = vpop.xlane.xlu0 %1254
        %v1256 = vsel %vm980, %v1252, 0.0
        %1257 = vadd.xlane.f32.xlu0 %v1256
        %v1258 = vpop.xlane.xlu0 %1257
        %v1259 = vmul.f32 %v1255, %v704
        %v1260 = vmul.f32 %v1258, %v704
        %v1261 = vadd.f32 %v1249, %v1259
        %v1262 = vadd.f32 %v1250, %v1260
        %v1263 = vmul.f32 %v1130, %v679
        %v1264 = vmul.f32 %v1145, %v680
        %v1265 = vsel %vm980, %v1263, 0.0
        %1266 = vadd.xlane.f32.xlu0 %v1265
        %v1267 = vpop.xlane.xlu0 %1266
        %v1268 = vsel %vm980, %v1264, 0.0
        %1269 = vadd.xlane.f32.xlu0 %v1268
        %v1270 = vpop.xlane.xlu0 %1269
        %v1271 = vmul.f32 %v1267, %v707
        %v1272 = vmul.f32 %v1270, %v707
        %v1273 = vadd.f32 %v1261, %v1271
        %v1274 = vadd.f32 %v1262, %v1272
        %1275 = vset.pattern.permute.xlu0 9
        %1276 = vperm.xlu0 %1275, %v957
        %v1277 = vpop.permute.xlu0 %1276
        %1279 = vset.pattern.permute.xlu0 9
        %1280 = vperm.xlu0 %1279, %v959
        %v1281 = vpop.permute.xlu0 %1280
        %v1283 = vmul.f32 %v1277, %v631
        %v1284 = vmul.f32 %v1281, %v632
        %1285 = vrot.lane.b32.xlu0 %v931, 112
        %v1286 = vpop.permute.xlu0 %1285
        %1287 = vrot.lane.b32.xlu0 %v977, 80
        %v1288 = vpop.permute.xlu0 %1287
        %v1290 = vsel %vm980, %v1286, 0
        %v1293 = vsel %vm980, %v1288, 0
        %1295 = vmatpush.bf16.xpose.msra.mxu0 0
        %1296 = vmatpush.bf16.xpose.msra.mxu0 0
        %1297 = vmatpush.bf16.xpose.msra.mxu0 0
        %1298 = vmatpush.bf16.xpose.msra.mxu0 0
        %1299 = vmatpush.bf16.xpose.msra.mxu0 0
        %1300 = vmatpush.bf16.xpose.msra.mxu0 0
        %1301 = vmatpush.bf16.xpose.msra.mxu0 0
        %1302 = vmatpush.bf16.xpose.msra.mxu0 %v1293
        %1303 = vmatmul.bf16.gmra.mxu0 %v1290
        %v1304 = vpop.f32.mrf.mxu0
        %v1305 = vadd.f32 %v1283, %v1304
        %v1306 = vpop.f32.mrf.mxu0
        %v1307 = vadd.f32 %v1284, %v1306
        %1308 = vdwg.mxu0
        %1309 = vset.pattern.permute.xlu0 10
        %1310 = vperm.xlu0 %1309, %v957
        %v1311 = vpop.permute.xlu0 %1310
        %1313 = vset.pattern.permute.xlu0 10
        %1314 = vperm.xlu0 %1313, %v959
        %v1315 = vpop.permute.xlu0 %1314
        %v1317 = vmul.f32 %v1311, %v637
        %v1318 = vmul.f32 %v1315, %v638
        %v1319 = vadd.f32 %v1305, %v1317
        %v1320 = vadd.f32 %v1307, %v1318
        %1321 = vset.pattern.permute.xlu0 11
        %1322 = vperm.xlu0 %1321, %v957
        %v1323 = vpop.permute.xlu0 %1322
        %1325 = vset.pattern.permute.xlu0 11
        %1326 = vperm.xlu0 %1325, %v959
        %v1327 = vpop.permute.xlu0 %1326
        %v1329 = vmul.f32 %v1323, %v643
        %v1330 = vmul.f32 %v1327, %v644
        %v1331 = vadd.f32 %v1319, %v1329
        %v1332 = vadd.f32 %v1320, %v1330
        %1333 = vset.pattern.permute.xlu0 12
        %1334 = vperm.xlu0 %1333, %v957
        %v1335 = vpop.permute.xlu0 %1334
        %1337 = vset.pattern.permute.xlu0 12
        %1338 = vperm.xlu0 %1337, %v959
        %v1339 = vpop.permute.xlu0 %1338
        %v1341 = vmul.f32 %v1335, %v649
        %v1342 = vmul.f32 %v1339, %v650
        %v1343 = vadd.f32 %v1331, %v1341
        %v1344 = vadd.f32 %v1332, %v1342
        %1345 = vset.pattern.permute.xlu0 13
        %1346 = vperm.xlu0 %1345, %v957
        %v1347 = vpop.permute.xlu0 %1346
        %1349 = vset.pattern.permute.xlu0 13
        %1350 = vperm.xlu0 %1349, %v959
        %v1351 = vpop.permute.xlu0 %1350
        %v1353 = vmul.f32 %v1347, %v655
        %v1354 = vmul.f32 %v1351, %v656
        %v1355 = vadd.f32 %v1343, %v1353
        %v1356 = vadd.f32 %v1344, %v1354
        %1357 = vset.pattern.permute.xlu0 14
        %1358 = vperm.xlu0 %1357, %v957
        %v1359 = vpop.permute.xlu0 %1358
        %1361 = vset.pattern.permute.xlu0 14
        %1362 = vperm.xlu0 %1361, %v959
        %v1363 = vpop.permute.xlu0 %1362
        %v1365 = vmul.f32 %v1359, %v661
        %v1366 = vmul.f32 %v1363, %v662
        %v1367 = vadd.f32 %v1355, %v1365
        %v1368 = vadd.f32 %v1356, %v1366
        %1369 = vset.pattern.permute.xlu0 15
        %1370 = vperm.xlu0 %1369, %v957
        %v1371 = vpop.permute.xlu0 %1370
        %1373 = vset.pattern.permute.xlu0 15
        %1374 = vperm.xlu0 %1373, %v959
        %v1375 = vpop.permute.xlu0 %1374
        %v1377 = vmul.f32 %v1371, %v667
        %v1378 = vmul.f32 %v1375, %v668
        %v1379 = vadd.f32 %v1367, %v1377
        %v1380 = vadd.f32 %v1368, %v1378
        %1381 = vset.pattern.permute.xlu0 16
        %1382 = vperm.xlu0 %1381, %v957
        %v1383 = vpop.permute.xlu0 %1382
        %1385 = vset.pattern.permute.xlu0 16
        %1386 = vperm.xlu0 %1385, %v959
        %v1387 = vpop.permute.xlu0 %1386
        %v1389 = vmul.f32 %v1383, %v673
        %v1390 = vmul.f32 %v1387, %v674
        %v1391 = vadd.f32 %v1379, %v1389
        %v1392 = vadd.f32 %v1380, %v1390
        %1393 = vset.pattern.permute.xlu0 17
        %1394 = vperm.xlu0 %1393, %v957
        %v1395 = vpop.permute.xlu0 %1394
        %1397 = vset.pattern.permute.xlu0 17
        %1398 = vperm.xlu0 %1397, %v959
        %v1399 = vpop.permute.xlu0 %1398
        %v1401 = vmul.f32 %v1395, %v679
        %v1402 = vmul.f32 %v1399, %v680
        %v1403 = vadd.f32 %v1391, %v1401
        %v1404 = vadd.f32 %v1392, %v1402
        %v1405 = vadd.f32 %v1403, %v621
        %v1406 = vadd.f32 %v1404, %v622
        %v1407 = vsel %vm980, %v1405, -inf
        %1408 = vmax.xlane.f32.xlu0 %v1407
        %v1409 = vpop.xlane.xlu0 %1408
        %v1410 = vsel %vm980, %v1406, -inf
        %1411 = vmax.xlane.f32.xlu0 %v1410
        %v1412 = vpop.xlane.xlu0 %1411
        %v1413 = vsub.f32 %v1405, %v1409
        %v1414 = vsub.f32 %v1406, %v1412
        %v1415 = vmul.f32 %v1413, 1.442695
        %v1416 = vpow.pop %v1415
        %v1417 = vmul.f32 %v1414, 1.442695
        %v1418 = vpow.pop %v1417
        %v1419 = vsel %vm980, %v1416, 0.0
        %1420 = vadd.xlane.f32.xlu0 %v1419
        %v1421 = vpop.xlane.xlu0 %1420
        %v1422 = vsel %vm980, %v1418, 0.0
        %1423 = vadd.xlane.f32.xlu0 %v1422
        %v1424 = vpop.xlane.xlu0 %1423
        %v1425 = vrcp.pop %v1421
        %v1426 = vmul.f32 %v1421, %v1425
        %v1427 = vsub.f32 1.0, %v1426
        %v1428 = vmul.f32 %v1425, %v1427
        %v1429 = vadd.f32 %v1425, %v1428
        %vm1430 = vweird.f32 %v1421
        %vm1431 = vweird.f32 %v1425
        %vm1432 = vmor %vm1430, %vm1431
        %v1433 = vsel %vm1432, %v1425, %v1429
        %v1434 = vand.u32 2147483647, %v1421
        %vm1435 = vcmp.eq.f32.partialorder %v1434, 8.507059e+37
        %v1436 = vand.u32 %v1421, 2147483648
        %v1437 = vor.u32 1.1754944e-38, %v1436
        %v1438 = vsel %vm1435, %v1437, %v1433
        %v1439 = vmul.f32 %v1416, %v1438
        %v1440 = vrcp.pop %v1424
        %v1441 = vmul.f32 %v1424, %v1440
        %v1442 = vsub.f32 1.0, %v1441
        %v1443 = vmul.f32 %v1440, %v1442
        %v1444 = vadd.f32 %v1440, %v1443
        %vm1445 = vweird.f32 %v1424
        %vm1446 = vweird.f32 %v1440
        %vm1447 = vmor %vm1445, %vm1446
        %v1448 = vsel %vm1447, %v1440, %v1444
        %v1449 = vand.u32 2147483647, %v1424
        %vm1450 = vcmp.eq.f32.partialorder %v1449, 8.507059e+37
        %v1451 = vand.u32 %v1424, 2147483648
        %v1452 = vor.u32 1.1754944e-38, %v1451
        %v1453 = vsel %vm1450, %v1452, %v1448
        %v1454 = vmul.f32 %v1418, %v1453
        %v1455 = vpack.c.bf16 %v1454, %v1439
        %1456 = vrot.lane.b32.xlu0 %v977, 48
        %v1457 = vpop.permute.xlu0 %1456
        %v1460 = vsel %vm980, %v1455, 0
        %1462 = vmatpush.bf16.msra.mxu0 0
        %1463 = vmatpush.bf16.msra.mxu0 0
        %1464 = vmatpush.bf16.msra.mxu0 0
        %1465 = vmatpush.bf16.msra.mxu0 0
        %1466 = vmatpush.bf16.msra.mxu0 0
        %1467 = vmatpush.bf16.msra.mxu0 0
        %1468 = vmatpush.bf16.msra.mxu0 0
        %1469 = vmatpush.bf16.msra.mxu0 %v1457
        %1470 = vmatmul.bf16.gmra.mxu0 %v1460
        %v1471 = vpop.f32.mrf.mxu0
        %v1472 = vadd.f32 0.0, %v1471
        %v1473 = vpop.f32.mrf.mxu0
        %v1474 = vadd.f32 0.0, %v1473
        %1475 = vdwg.mxu0
        %v1476 = vmul.f32 %v1439, %v631
        %v1477 = vmul.f32 %v1454, %v632
        %v1478 = vsel %vm980, %v1476, 0.0
        %1479 = vadd.xlane.f32.xlu0 %v1478
        %v1480 = vpop.xlane.xlu0 %1479
        %v1481 = vsel %vm980, %v1477, 0.0
        %1482 = vadd.xlane.f32.xlu0 %v1481
        %v1483 = vpop.xlane.xlu0 %1482
        %v1484 = vmul.f32 %v1480, %v683
        %v1485 = vmul.f32 %v1483, %v683
        %v1486 = vadd.f32 %v1484, 0.0
        %v1487 = vadd.f32 %v1485, 0.0
        %v1488 = vmul.f32 %v1439, %v637
        %v1489 = vmul.f32 %v1454, %v638
        %v1490 = vsel %vm980, %v1488, 0.0
        %1491 = vadd.xlane.f32.xlu0 %v1490
        %v1492 = vpop.xlane.xlu0 %1491
        %v1493 = vsel %vm980, %v1489, 0.0
        %1494 = vadd.xlane.f32.xlu0 %v1493
        %v1495 = vpop.xlane.xlu0 %1494
        %v1496 = vmul.f32 %v1492, %v686
        %v1497 = vmul.f32 %v1495, %v686
        %v1498 = vadd.f32 %v1486, %v1496
        %v1499 = vadd.f32 %v1487, %v1497
        %v1500 = vmul.f32 %v1439, %v643
        %v1501 = vmul.f32 %v1454, %v644
        %v1502 = vsel %vm980, %v1500, 0.0
        %1503 = vadd.xlane.f32.xlu0 %v1502
        %v1504 = vpop.xlane.xlu0 %1503
        %v1505 = vsel %vm980, %v1501, 0.0
        %1506 = vadd.xlane.f32.xlu0 %v1505
        %v1507 = vpop.xlane.xlu0 %1506
        %v1508 = vmul.f32 %v1504, %v689
        %v1509 = vmul.f32 %v1507, %v689
        %v1510 = vadd.f32 %v1498, %v1508
        %v1511 = vadd.f32 %v1499, %v1509
        %v1512 = vmul.f32 %v1439, %v649
        %v1513 = vmul.f32 %v1454, %v650
        %v1514 = vsel %vm980, %v1512, 0.0
        %1515 = vadd.xlane.f32.xlu0 %v1514
        %v1516 = vpop.xlane.xlu0 %1515
        %v1517 = vsel %vm980, %v1513, 0.0
        %1518 = vadd.xlane.f32.xlu0 %v1517
        %v1519 = vpop.xlane.xlu0 %1518
        %v1520 = vmul.f32 %v1516, %v692
        %v1521 = vmul.f32 %v1519, %v692
        %v1522 = vadd.f32 %v1510, %v1520
        %v1523 = vadd.f32 %v1511, %v1521
        %v1524 = vmul.f32 %v1439, %v655
        %v1525 = vmul.f32 %v1454, %v656
        %v1526 = vsel %vm980, %v1524, 0.0
        %1527 = vadd.xlane.f32.xlu0 %v1526
        %v1528 = vpop.xlane.xlu0 %1527
        %v1529 = vsel %vm980, %v1525, 0.0
        %1530 = vadd.xlane.f32.xlu0 %v1529
        %v1531 = vpop.xlane.xlu0 %1530
        %v1532 = vmul.f32 %v1528, %v695
        %v1533 = vmul.f32 %v1531, %v695
        %v1534 = vadd.f32 %v1522, %v1532
        %v1535 = vadd.f32 %v1523, %v1533
        %v1536 = vmul.f32 %v1439, %v661
        %v1537 = vmul.f32 %v1454, %v662
        %v1538 = vsel %vm980, %v1536, 0.0
        %1539 = vadd.xlane.f32.xlu0 %v1538
        %v1540 = vpop.xlane.xlu0 %1539
        %v1541 = vsel %vm980, %v1537, 0.0
        %1542 = vadd.xlane.f32.xlu0 %v1541
        %v1543 = vpop.xlane.xlu0 %1542
        %v1544 = vmul.f32 %v1540, %v698
        %v1545 = vmul.f32 %v1543, %v698
        %v1546 = vadd.f32 %v1534, %v1544
        %v1547 = vadd.f32 %v1535, %v1545
        %v1548 = vmul.f32 %v1439, %v667
        %v1549 = vmul.f32 %v1454, %v668
        %v1550 = vsel %vm980, %v1548, 0.0
        %1551 = vadd.xlane.f32.xlu0 %v1550
        %v1552 = vpop.xlane.xlu0 %1551
        %v1553 = vsel %vm980, %v1549, 0.0
        %1554 = vadd.xlane.f32.xlu0 %v1553
        %v1555 = vpop.xlane.xlu0 %1554
        %v1556 = vmul.f32 %v1552, %v701
        %v1557 = vmul.f32 %v1555, %v701
        %v1558 = vadd.f32 %v1546, %v1556
        %v1559 = vadd.f32 %v1547, %v1557
        %v1560 = vmul.f32 %v1439, %v673
        %v1561 = vmul.f32 %v1454, %v674
        %v1562 = vsel %vm980, %v1560, 0.0
        %1563 = vadd.xlane.f32.xlu0 %v1562
        %v1564 = vpop.xlane.xlu0 %1563
        %v1565 = vsel %vm980, %v1561, 0.0
        %1566 = vadd.xlane.f32.xlu0 %v1565
        %v1567 = vpop.xlane.xlu0 %1566
        %v1568 = vmul.f32 %v1564, %v704
        %v1569 = vmul.f32 %v1567, %v704
        %v1570 = vadd.f32 %v1558, %v1568
        %v1571 = vadd.f32 %v1559, %v1569
        %v1572 = vmul.f32 %v1439, %v679
        %v1573 = vmul.f32 %v1454, %v680
        %v1574 = vsel %vm980, %v1572, 0.0
        %1575 = vadd.xlane.f32.xlu0 %v1574
        %v1576 = vpop.xlane.xlu0 %1575
        %v1577 = vsel %vm980, %v1573, 0.0
        %1578 = vadd.xlane.f32.xlu0 %v1577
        %v1579 = vpop.xlane.xlu0 %1578
        %v1580 = vmul.f32 %v1576, %v707
        %v1581 = vmul.f32 %v1579, %v707
        %v1582 = vadd.f32 %v1570, %v1580
        %v1583 = vadd.f32 %v1571, %v1581
        %1586 = vrot.lane.b32.xlu0 %v1472, 16
        %v1587 = vpop.permute.xlu0 %1586
        %1588 = vrot.lane.b32.xlu0 %v1474, 16
        %v1589 = vpop.permute.xlu0 %1588
        %v1592 = vsel %vm980, %v1163, %v1587
        %v1593 = vsel %vm980, %v1165, %v1589
        %1596 = vrot.lane.b32.xlu0 %v1582, 9
        %v1597 = vpop.permute.xlu0 %1596
        %1598 = vrot.lane.b32.xlu0 %v1583, 9
        %v1599 = vpop.permute.xlu0 %1598
        %vm1602 = vcmask 72704
        %v1603 = vsel %vm1602, %v1273, %v1597
        %v1604 = vsel %vm1602, %v1274, %v1599
        %v1605 = vpack.c.bf16 %v1604, %v1603
        %v1606 = vld [vmem:[%s10] sm:$0xf]
        %v1607 = vld [vmem:[%s10 + $0x4] sm:$0xf]
        %v1608 = vld [vmem:[%s10 + $0x8] sm:$0x1]
        %v1612 = vunpack.c.l.b16 %v1606
        %v1613 = vunpack.c.l.b16 %v1607
        %v1614 = vunpack.c.l.b16 %v1608
        %v1615 = vpack.c.b16 %v1613, %v1612
        %v1616 = vpack.c.b16 %v1614, %v1614
        %vm1618 = vcmask 146432
        %v1620 = vsel %vm1618, %v1605, 0
        %vm1622 = vcmask 1040384
        %v1624 = vsel %vm1622, %v1616, 0
        %1626 = vmatpush.bf16.msra.mxu0 0
        %1627 = vmatpush.bf16.msra.mxu0 0
        %1628 = vmatpush.bf16.msra.mxu0 0
        %1629 = vmatpush.bf16.msra.mxu0 0
        %1630 = vmatpush.bf16.msra.mxu0 0
        %1631 = vmatpush.bf16.msra.mxu0 0
        %1632 = vmatpush.bf16.msra.mxu0 %v1624
        %1633 = vmatpush.bf16.msra.mxu0 %v1615
        %1634 = vmatmul.bf16.gmra.mxu0 %v1620
        %v1635 = vpop.f32.mrf.mxu0
        %v1636 = vadd.f32 0.0, %v1635
        %v1637 = vpop.f32.mrf.mxu0
        %v1638 = vadd.f32 0.0, %v1637
        %1639 = vdwg.mxu0
        %v1640 = vadd.f32 %v1592, %v1636
        %v1641 = vadd.f32 %v1593, %v1638
        %v1642 = vpack.c.bf16 %v1641, %v1640
        %v1643 = vld [vmem:[%s7] sm:$0xf]
        %v1644 = vld [vmem:[%s7 + $0x4] sm:$0xf]
        %v1645 = vld [vmem:[%s7 + $0x8] sm:$0xf]
        %v1646 = vld [vmem:[%s7 + $0xc] sm:$0xf]
        %v1647 = vld [vmem:[%s8] sm:$0x1]
        %v1649 = vperm.slane %v1647, 0
        %v1655 = vunpack.c.l.b16 %v1643
        %v1656 = vunpack.c.l.b16 %v1644
        %v1657 = vunpack.c.l.b16 %v1645
        %v1658 = vunpack.c.l.b16 %v1646
        %v1659 = vpack.c.b16 %v1656, %v1655
        %v1660 = vpack.c.b16 %v1658, %v1657
        %v1664 = vsel %vm899, %v1642, 0
        %1666 = vmatpush.bf16.msra.mxu0 0
        %1667 = vmatpush.bf16.msra.mxu0 0
        %1668 = vmatpush.bf16.msra.mxu0 0
        %1669 = vmatpush.bf16.msra.mxu0 0
        %1670 = vmatpush.bf16.msra.mxu0 0
        %1671 = vmatpush.bf16.msra.mxu0 0
        %1672 = vmatpush.bf16.msra.mxu0 %v1660
        %1673 = vmatpush.bf16.msra.mxu0 %v1659
        %1674 = vmatmul.bf16.gmra.mxu0 %v1664
        %v1675 = vpop.f32.mrf.mxu0
        %v1676 = vadd.f32 %v1649, %v1675
        %v1677 = vpop.f32.mrf.mxu0
        %v1678 = vadd.f32 %v1649, %v1677
        %1679 = vdwg.mxu0
        %v1680 = vadd.f32 %v876, %v1676
        %v1681 = vadd.f32 %v877, %v1678
        %v1682 = vld [vmem:[%s11] sm:$0x1]
        %v1683 = vld [vmem:[%s12] sm:$0x1]
        %v1684 = vsel %vm899, %v1680, 0.0
        %1685 = vadd.xlane.f32.xlu0 %v1684
        %v1686 = vpop.xlane.xlu0 %1685
        %v1687 = vsel %vm899, %v1681, 0.0
        %1688 = vadd.xlane.f32.xlu0 %v1687
        %v1689 = vpop.xlane.xlu0 %1688
        %v1690 = vrcp.pop 32.0
        %v1691 = vmul.f32 32.0, %v1690
        %v1692 = vsub.f32 1.0, %v1691
        %v1693 = vmul.f32 %v1690, %v1692
        %v1694 = vadd.f32 %v1690, %v1693
        %vm1695 = vweird.f32 %v1690
        %v1696 = vsel %vm1695, %v1690, %v1694
        %v1697 = vmul.f32 %v1686, %v1696
        %v1698 = vmul.f32 %v1689, %v1696
        %v1699 = vsub.f32 %v1680, %v1697
        %v1700 = vsub.f32 %v1681, %v1698
        %v1701 = vmul.f32 %v1699, %v1699
        %v1702 = vmul.f32 %v1700, %v1700
        %v1703 = vsel %vm899, %v1701, 0.0
        %1704 = vadd.xlane.f32.xlu0 %v1703
        %v1705 = vpop.xlane.xlu0 %1704
        %v1706 = vsel %vm899, %v1702, 0.0
        %1707 = vadd.xlane.f32.xlu0 %v1706
        %v1708 = vpop.xlane.xlu0 %1707
        %v1709 = vmul.f32 %v1705, %v1696
        %v1710 = vmul.f32 %v1708, %v1696
        %v1711 = vadd.f32 %v1709, 1e-05
        %v1712 = vadd.f32 %v1710, 1e-05
        %v1713 = vrsqrt.pop %v1711
        %v1714 = vmul.f32 %v1713, %v1711
        %v1715 = vmul.f32 %v1714, %v1713
        %v1716 = vmul.f32 0.5, %v1715
        %v1717 = vsub.f32 1.5, %v1716
        %v1718 = vmul.f32 %v1713, %v1717
        %vm1719 = vweird.f32 %v1711
        %vm1720 = vweird.f32 %v1713
        %vm1721 = vmor %vm1719, %vm1720
        %v1722 = vsel %vm1721, %v1713, %v1718
        %v1723 = vrsqrt.pop %v1712
        %v1724 = vmul.f32 %v1723, %v1712
        %v1725 = vmul.f32 %v1724, %v1723
        %v1726 = vmul.f32 0.5, %v1725
        %v1727 = vsub.f32 1.5, %v1726
        %v1728 = vmul.f32 %v1723, %v1727
        %vm1729 = vweird.f32 %v1712
        %vm1730 = vweird.f32 %v1723
        %vm1731 = vmor %vm1729, %vm1730
        %v1732 = vsel %vm1731, %v1723, %v1728
        %v1733 = vmul.f32 %v1699, %v1722
        %v1734 = vmul.f32 %v1700, %v1732
        %v1736 = vperm.slane %v1682, 0
        %v1738 = vmul.f32 %v1733, %v1736
        %v1739 = vmul.f32 %v1734, %v1736
        %v1741 = vperm.slane %v1683, 0
        %v1743 = vadd.f32 %v1738, %v1741
        %v1744 = vadd.f32 %v1739, %v1741
        %v1745 = vmul.f32 %v1743, %v610
        %v1746 = vmul.f32 %v1744, %v611
        %v1749 = vrot.slane %v1745, 7
        %v1750 = vrot.slane %v1746, 7
        %v1751 = vsel %vm1622, %v1749, %v1750
        %v1754 = vsel %vm1622, 0.0, %v1749
        %vm1755 = vcmask 1046528
        %v1756 = vrot.slane %v1745, 1
        %v1757 = vrot.slane %v1746, 1
        %v1758 = vsel %vm1755, %v1756, %v1757
        %v1760 = vsel %vm1755, %v1757, 0.0
        %1761 = vrot.lane.b32.xlu0 %v1745, 32
        %v1762 = vpop.permute.xlu0 %1761
        %1763 = vrot.lane.b32.xlu0 %v1746, 32
        %v1764 = vpop.permute.xlu0 %1763
        %1768 = vrot.lane.b32.xlu0 %v1758, 64
        %v1769 = vpop.permute.xlu0 %1768
        %1770 = vrot.lane.b32.xlu0 %v1760, 64
        %v1771 = vpop.permute.xlu0 %1770
        %v1774 = vsel %vm899, %v1754, %v1762
        %v1775 = vsel %vm899, %v1751, %v1764
        %vm1776 = vcmask 523264
        %v1777 = vsel %vm1776, %v1774, %v1769
        %v1778 = vsel %vm1776, %v1775, %v1771
        %v1779 = vpack.c.bf16 %v1778, %v1777
        %v1780 = vld [vmem:[%s13] sm:$0xf]
        %v1781 = vld [vmem:[%s13 + $0x4] sm:$0xf]
        %v1782 = vld [vmem:[%s13 + $0x8] sm:$0xf]
        %v1783 = vld [vmem:[%s13 + $0xc] sm:$0xf]
        %v1784 = vld [vmem:[%s13 + $0x10] sm:$0xf]
        %v1785 = vld [vmem:[%s13 + $0x14] sm:$0xf]
        %v1786 = vld [vmem:[%s13 + $0x18] sm:$0xf]
        %v1787 = vld [vmem:[%s13 + $0x1c] sm:$0xf]
        %v1788 = vld [vmem:[%s13 + $0x20] sm:$0xf]
        %v1789 = vld [vmem:[%s13 + $0x24] sm:$0xf]
        %v1790 = vld [vmem:[%s13 + $0x28] sm:$0xf]
        %v1791 = vld [vmem:[%s13 + $0x2c] sm:$0xf]
        %v1792 = vld [vmem:[%s14] sm:$0x1]
        %v1794 = vperm.slane %v1792, 0
        %v1808 = vunpack.c.l.b16 %v1780
        %v1809 = vunpack.c.l.b16 %v1781
        %v1810 = vunpack.c.l.b16 %v1782
        %v1811 = vunpack.c.l.b16 %v1783
        %v1812 = vunpack.c.l.b16 %v1784
        %v1813 = vunpack.c.l.b16 %v1785
        %v1814 = vunpack.c.l.b16 %v1786
        %v1815 = vunpack.c.l.b16 %v1787
        %v1816 = vunpack.c.l.b16 %v1788
        %v1817 = vunpack.c.l.b16 %v1789
        %v1818 = vunpack.c.l.b16 %v1790
        %v1819 = vunpack.c.l.b16 %v1791
        %v1820 = vpack.c.b16 %v1809, %v1808
        %v1821 = vpack.c.b16 %v1811, %v1810
        %v1822 = vpack.c.b16 %v1813, %v1812
        %v1823 = vpack.c.b16 %v1815, %v1814
        %v1824 = vpack.c.b16 %v1817, %v1816
        %v1825 = vpack.c.b16 %v1819, %v1818
        %vm1832 = vcmask 785408
        %v1834 = vsel %vm1832, %v1779, 0
        %1836 = vmatpush.bf16.msra.mxu0 0
        %1837 = vmatpush.bf16.msra.mxu0 0
        %1838 = vmatpush.bf16.msra.mxu0 %v1825
        %1839 = vmatpush.bf16.msra.mxu0 %v1824
        %1840 = vmatpush.bf16.msra.mxu0 %v1823
        %1841 = vmatpush.bf16.msra.mxu0 %v1822
        %1842 = vmatpush.bf16.msra.mxu0 %v1821
        %1843 = vmatpush.bf16.msra.mxu0 %v1820
        %1844 = vmatmul.bf16.gmra.mxu0 %v1834
        %v1845 = vpop.f32.mrf.mxu0
        %v1846 = vadd.f32 %v1794, %v1845
        %v1847 = vpop.f32.mrf.mxu0
        %v1848 = vadd.f32 %v1794, %v1847
        %1849 = vdwg.mxu0
        %v1850 = vmax.f32 %v1846, 0.0
        %v1851 = vmax.f32 %v1848, 0.0
        %v1852 = vmul.f32 %v1850, %v610
        %v1853 = vmul.f32 %v1851, %v611
        %v1856 = vrot.slane %v1852, 7
        %v1857 = vrot.slane %v1853, 7
        %v1858 = vsel %vm1622, %v1856, %v1857
        %v1861 = vsel %vm1622, 0.0, %v1856
        %v1862 = vrot.slane %v1852, 1
        %v1863 = vrot.slane %v1853, 1
        %v1864 = vsel %vm1755, %v1862, %v1863
        %v1867 = vsel %vm1755, %v1863, 0.0
        %1868 = vrot.lane.b32.xlu0 %v1852, 64
        %v1869 = vpop.permute.xlu0 %1868
        %1870 = vrot.lane.b32.xlu0 %v1853, 64
        %v1871 = vpop.permute.xlu0 %1870
        %v1874 = vsel %vm1776, %v1861, %v1869
        %v1875 = vsel %vm1776, %v1858, %v1871
        %v1876 = vpack.c.bf16 %v1875, %v1874
        %v1877 = vpack.c.bf16 %v1867, %v1864
        %v1878 = vld [vmem:[%s15] sm:$0xf]
        %v1879 = vld [vmem:[%s15 + $0x4] sm:$0xf]
        %v1880 = vld [vmem:[%s15 + $0x8] sm:$0xf]
        %v1881 = vld [vmem:[%s15 + $0xc] sm:$0xf]
        %v1882 = vld [vmem:[%s15 + $0x10] sm:$0xf]
        %v1883 = vld [vmem:[%s15 + $0x14] sm:$0xf]
        %v1884 = vld [vmem:[%s15 + $0x18] sm:$0xf]
        %v1885 = vld [vmem:[%s15 + $0x1c] sm:$0xf]
        %v1886 = vld [vmem:[%s15 + $0x20] sm:$0xf]
        %v1887 = vld [vmem:[%s15 + $0x24] sm:$0xf]
        %v1888 = vld [vmem:[%s15 + $0x28] sm:$0xf]
        %v1889 = vld [vmem:[%s15 + $0x2c] sm:$0xf]
        %v1890 = vld [vmem:[%s15 + $0x30] sm:$0xf]
        %v1891 = vld [vmem:[%s15 + $0x34] sm:$0xf]
        %v1892 = vld [vmem:[%s15 + $0x38] sm:$0xf]
        %v1893 = vld [vmem:[%s15 + $0x3c] sm:$0xf]
        %v1894 = vld [vmem:[%s15 + $0x40] sm:$0xf]
        %v1895 = vld [vmem:[%s15 + $0x44] sm:$0xf]
        %v1896 = vld [vmem:[%s15 + $0x48] sm:$0xf]
        %v1897 = vld [vmem:[%s15 + $0x4c] sm:$0xf]
        %v1898 = vld [vmem:[%s15 + $0x50] sm:$0xf]
        %v1899 = vld [vmem:[%s15 + $0x54] sm:$0xf]
        %v1900 = vld [vmem:[%s15 + $0x58] sm:$0xf]
        %v1901 = vld [vmem:[%s15 + $0x5c] sm:$0xf]
        %v1902 = vld [vmem:[%s16] sm:$0x1]
        %v1904 = vperm.slane %v1902, 0
        %v1930 = vunpack.c.l.b16 %v1878
        %v1931 = vunpack.c.l.b16 %v1879
        %v1932 = vunpack.c.l.b16 %v1880
        %v1933 = vunpack.c.l.b16 %v1881
        %v1934 = vunpack.c.l.b16 %v1882
        %v1935 = vunpack.c.l.b16 %v1883
        %v1936 = vunpack.c.l.b16 %v1884
        %v1937 = vunpack.c.l.b16 %v1885
        %v1938 = vunpack.c.l.b16 %v1886
        %v1939 = vunpack.c.l.b16 %v1887
        %v1940 = vunpack.c.l.b16 %v1888
        %v1941 = vunpack.c.l.b16 %v1889
        %v1942 = vunpack.c.l.b16 %v1890
        %v1943 = vunpack.c.l.b16 %v1891
        %v1944 = vunpack.c.l.b16 %v1892
        %v1945 = vunpack.c.l.b16 %v1893
        %v1946 = vunpack.c.l.b16 %v1894
        %v1947 = vunpack.c.l.b16 %v1895
        %v1948 = vunpack.c.l.b16 %v1896
        %v1949 = vunpack.c.l.b16 %v1897
        %v1950 = vunpack.c.l.b16 %v1898
        %v1951 = vunpack.c.l.b16 %v1899
        %v1952 = vunpack.c.l.b16 %v1900
        %v1953 = vunpack.c.l.b16 %v1901
        %v1954 = vpack.c.b16 %v1931, %v1930
        %v1955 = vpack.c.b16 %v1933, %v1932
        %v1956 = vpack.c.b16 %v1935, %v1934
        %v1957 = vpack.c.b16 %v1937, %v1936
        %v1958 = vpack.c.b16 %v1939, %v1938
        %v1959 = vpack.c.b16 %v1941, %v1940
        %v1960 = vpack.c.b16 %v1943, %v1942
        %v1961 = vpack.c.b16 %v1945, %v1944
        %v1962 = vpack.c.b16 %v1947, %v1946
        %v1963 = vpack.c.b16 %v1949, %v1948
        %v1964 = vpack.c.b16 %v1951, %v1950
        %v1965 = vpack.c.b16 %v1953, %v1952
        %v1979 = vsel %vm1776, %v1877, 0
        %1981 = vmatpush.bf16.msra.mxu0 %v1961
        %1982 = vmatpush.bf16.msra.mxu0 %v1960
        %1983 = vmatpush.bf16.msra.mxu0 %v1959
        %1984 = vmatpush.bf16.msra.mxu0 %v1958
        %1985 = vmatpush.bf16.msra.mxu0 %v1957
        %1986 = vmatpush.bf16.msra.mxu0 %v1956
        %1987 = vmatpush.bf16.msra.mxu0 %v1955
        %1988 = vmatpush.bf16.msra.mxu0 %v1954
        %1989 = vmatmul.bf16.gmra.mxu0 %v1876
        %v1990 = vpop.f32.mrf.mxu0
        %v1991 = vadd.f32 %v1904, %v1990
        %v1992 = vpop.f32.mrf.mxu0
        %v1993 = vadd.f32 %v1904, %v1992
        %1994 = vdwg.mxu0
        %1995 = vmatpush.bf16.msra.mxu0 0
        %1996 = vmatpush.bf16.msra.mxu0 0
        %1997 = vmatpush.bf16.msra.mxu0 0
        %1998 = vmatpush.bf16.msra.mxu0 0
        %1999 = vmatpush.bf16.msra.mxu0 %v1965
        %2000 = vmatpush.bf16.msra.mxu0 %v1964
        %2001 = vmatpush.bf16.msra.mxu0 %v1963
        %2002 = vmatpush.bf16.msra.mxu0 %v1962
        %2003 = vmatmul.bf16.gmra.mxu0 %v1979
        %v2004 = vpop.f32.mrf.mxu0
        %v2005 = vadd.f32 %v1991, %v2004
        %v2006 = vpop.f32.mrf.mxu0
        %v2007 = vadd.f32 %v1993, %v2006
        %2008 = vdwg.mxu0
        %v2009 = vmul.f32 %v2005, %v610
        %v2010 = vmul.f32 %v2007, %v611
        %v2011 = vadd.f32 %v1743, %v2009
        %v2012 = vadd.f32 %v1744, %v2010
        %v2013 = vld [vmem:[%s17] sm:$0x1]
        %v2014 = vld [vmem:[%s18] sm:$0x1]
        %v2015 = vsel %vm899, %v2011, 0.0
        %2016 = vadd.xlane.f32.xlu0 %v2015
        %v2017 = vpop.xlane.xlu0 %2016
        %v2018 = vsel %vm899, %v2012, 0.0
        %2019 = vadd.xlane.f32.xlu0 %v2018
        %v2020 = vpop.xlane.xlu0 %2019
        %v2021 = vmul.f32 %v2017, %v1696
        %v2022 = vmul.f32 %v2020, %v1696
        %v2023 = vsub.f32 %v2011, %v2021
        %v2024 = vsub.f32 %v2012, %v2022
        %v2025 = vmul.f32 %v2023, %v2023
        %v2026 = vmul.f32 %v2024, %v2024
        %v2027 = vsel %vm899, %v2025, 0.0
        %2028 = vadd.xlane.f32.xlu0 %v2027
        %v2029 = vpop.xlane.xlu0 %2028
        %v2030 = vsel %vm899, %v2026, 0.0
        %2031 = vadd.xlane.f32.xlu0 %v2030
        %v2032 = vpop.xlane.xlu0 %2031
        %v2033 = vmul.f32 %v2029, %v1696
        %v2034 = vmul.f32 %v2032, %v1696
        %v2035 = vadd.f32 %v2033, 1e-05
        %v2036 = vadd.f32 %v2034, 1e-05
        %v2037 = vrsqrt.pop %v2035
        %v2038 = vmul.f32 %v2037, %v2035
        %v2039 = vmul.f32 %v2038, %v2037
        %v2040 = vmul.f32 0.5, %v2039
        %v2041 = vsub.f32 1.5, %v2040
        %v2042 = vmul.f32 %v2037, %v2041
        %vm2043 = vweird.f32 %v2035
        %vm2044 = vweird.f32 %v2037
        %vm2045 = vmor %vm2043, %vm2044
        %v2046 = vsel %vm2045, %v2037, %v2042
        %v2047 = vrsqrt.pop %v2036
        %v2048 = vmul.f32 %v2047, %v2036
        %v2049 = vmul.f32 %v2048, %v2047
        %v2050 = vmul.f32 0.5, %v2049
        %v2051 = vsub.f32 1.5, %v2050
        %v2052 = vmul.f32 %v2047, %v2051
        %vm2053 = vweird.f32 %v2036
        %vm2054 = vweird.f32 %v2047
        %vm2055 = vmor %vm2053, %vm2054
        %v2056 = vsel %vm2055, %v2047, %v2052
        %v2057 = vmul.f32 %v2023, %v2046
        %v2058 = vmul.f32 %v2024, %v2056
        %v2060 = vperm.slane %v2013, 0
        %v2062 = vmul.f32 %v2057, %v2060
        %v2063 = vmul.f32 %v2058, %v2060
        %v2065 = vperm.slane %v2014, 0
        %v2067 = vadd.f32 %v2062, %v2065
        %v2068 = vadd.f32 %v2063, %v2065
        %v2069 = vpack.c.bf16 %v2068, %v2067
        %s2070 = scalar_lea.vmem %s5, 16
        %v2071 = vld [vmem:[%s2070] sm:$0xf]
        %v2072 = vld [vmem:[%s2070 + $0x4] sm:$0xf]
        %v2073 = vld [vmem:[%s2070 + $0x8] sm:$0xf]
        %v2074 = vld [vmem:[%s2070 + $0xc] sm:$0xf]
        %s2075 = scalar_lea.vmem %s6, 1
        %v2076 = vld [vmem:[%s2075] sm:$0x1]
        %v2078 = vperm.slane %v2076, 0
        %v2084 = vunpack.c.l.b16 %v2071
        %v2085 = vunpack.c.l.b16 %v2072
        %v2086 = vunpack.c.l.b16 %v2073
        %v2087 = vunpack.c.l.b16 %v2074
        %v2088 = vpack.c.b16 %v2085, %v2084
        %v2089 = vpack.c.b16 %v2087, %v2086
        %v2093 = vsel %vm899, %v2069, 0
        %2095 = vmatpush.bf16.msra.mxu0 0
        %2096 = vmatpush.bf16.msra.mxu0 0
        %2097 = vmatpush.bf16.msra.mxu0 0
        %2098 = vmatpush.bf16.msra.mxu0 0
        %2099 = vmatpush.bf16.msra.mxu0 0
        %2100 = vmatpush.bf16.msra.mxu0 0
        %2101 = vmatpush.bf16.msra.mxu0 %v2089
        %2102 = vmatpush.bf16.msra.mxu0 %v2088
        %2103 = vmatmul.bf16.gmra.mxu0 %v2093
        %v2104 = vpop.f32.mrf.mxu0
        %v2105 = vadd.f32 %v2078, %v2104
        %v2106 = vpop.f32.mrf.mxu0
        %v2107 = vadd.f32 %v2078, %v2106
        %2108 = vdwg.mxu0
        %v2109 = vmul.f32 %v2105, 0.25
        %v2110 = vmul.f32 %v2107, 0.25
        %v2111 = vpack.c.bf16 %v2109, %v2109
        %v2112 = vpack.c.bf16 %v2110, %v2110
        %v2113 = vpack.c.bf16 %v2105, %v2105
        %v2114 = vpack.c.bf16 %v2107, %v2107
        %s2115 = scalar_lea.vmem %s9, 16
        %v2116 = vld [vmem:[%s2115] sm:$0xf]
        %v2117 = vld [vmem:[%s2115 + $0x4] sm:$0xf]
        %v2118 = vld [vmem:[%s2115 + $0x8] sm:$0xf]
        %v2119 = vld [vmem:[%s2115 + $0xc] sm:$0xf]
        %v2122 = vunpack.c.l.b16 %v2111
        %v2123 = vunpack.c.l.b16 %v2112
        %v2124 = vpack.c.b16 %v2123, %v2122
        %v2129 = vunpack.c.l.b16 %v2116
        %v2130 = vunpack.c.l.b16 %v2117
        %v2131 = vunpack.c.l.b16 %v2118
        %v2132 = vunpack.c.l.b16 %v2119
        %v2133 = vpack.c.b16 %v2130, %v2129
        %v2134 = vpack.c.b16 %v2132, %v2131
        %v2138 = vsel %vm899, %v2124, 0
        %2140 = vmatpush.bf16.msra.mxu0 0
        %2141 = vmatpush.bf16.msra.mxu0 0
        %2142 = vmatpush.bf16.msra.mxu0 0
        %2143 = vmatpush.bf16.msra.mxu0 0
        %2144 = vmatpush.bf16.msra.mxu0 0
        %2145 = vmatpush.bf16.msra.mxu0 0
        %2146 = vmatpush.bf16.msra.mxu0 %v2134
        %2147 = vmatpush.bf16.msra.mxu0 %v2133
        %2148 = vmatmul.bf16.gmra.mxu0 %v2138
        %v2149 = vpop.f32.mrf.mxu0
        %v2150 = vadd.f32 0.0, %v2149
        %v2151 = vpop.f32.mrf.mxu0
        %v2152 = vadd.f32 0.0, %v2151
        %2153 = vdwg.mxu0
        %2155 = vset.pattern.permute.xlu0 0
        %2156 = vperm.xlu0 %2155, %v2150
        %v2157 = vpop.permute.xlu0 %2156
        %2160 = vset.pattern.permute.xlu0 0
        %2161 = vperm.xlu0 %2160, %v2152
        %v2162 = vpop.permute.xlu0 %2161
        %v2164 = vmul.f32 %v2157, %v631
        %v2165 = vmul.f32 %v2162, %v632
        %v2168 = vunpack.c.l.b16 %v2113
        %v2169 = vunpack.c.l.b16 %v2114
        %v2170 = vpack.c.b16 %v2169, %v2168
        %2171 = vrot.lane.b32.xlu0 %v2170, 96
        %v2172 = vpop.permute.xlu0 %2171
        %v2173 = vsel %vm980, %v2124, 0
        %v2176 = vsel %vm980, %v2172, 0
        %2178 = vmatpush.bf16.xpose.msra.mxu0 0
        %2179 = vmatpush.bf16.xpose.msra.mxu0 0
        %2180 = vmatpush.bf16.xpose.msra.mxu0 0
        %2181 = vmatpush.bf16.xpose.msra.mxu0 0
        %2182 = vmatpush.bf16.xpose.msra.mxu0 0
        %2183 = vmatpush.bf16.xpose.msra.mxu0 0
        %2184 = vmatpush.bf16.xpose.msra.mxu0 0
        %2185 = vmatpush.bf16.xpose.msra.mxu0 %v2176
        %2186 = vmatmul.bf16.gmra.mxu0 %v2173
        %v2187 = vpop.f32.mrf.mxu0
        %v2188 = vadd.f32 %v2164, %v2187
        %v2189 = vpop.f32.mrf.mxu0
        %v2190 = vadd.f32 %v2165, %v2189
        %2191 = vdwg.mxu0
        %2192 = vset.pattern.permute.xlu0 1
        %2193 = vperm.xlu0 %2192, %v2150
        %v2194 = vpop.permute.xlu0 %2193
        %2196 = vset.pattern.permute.xlu0 1
        %2197 = vperm.xlu0 %2196, %v2152
        %v2198 = vpop.permute.xlu0 %2197
        %v2200 = vmul.f32 %v2194, %v637
        %v2201 = vmul.f32 %v2198, %v638
        %v2202 = vadd.f32 %v2188, %v2200
        %v2203 = vadd.f32 %v2190, %v2201
        %2204 = vset.pattern.permute.xlu0 2
        %2205 = vperm.xlu0 %2204, %v2150
        %v2206 = vpop.permute.xlu0 %2205
        %2208 = vset.pattern.permute.xlu0 2
        %2209 = vperm.xlu0 %2208, %v2152
        %v2210 = vpop.permute.xlu0 %2209
        %v2212 = vmul.f32 %v2206, %v643
        %v2213 = vmul.f32 %v2210, %v644
        %v2214 = vadd.f32 %v2202, %v2212
        %v2215 = vadd.f32 %v2203, %v2213
        %2216 = vset.pattern.permute.xlu0 3
        %2217 = vperm.xlu0 %2216, %v2150
        %v2218 = vpop.permute.xlu0 %2217
        %2220 = vset.pattern.permute.xlu0 3
        %2221 = vperm.xlu0 %2220, %v2152
        %v2222 = vpop.permute.xlu0 %2221
        %v2224 = vmul.f32 %v2218, %v649
        %v2225 = vmul.f32 %v2222, %v650
        %v2226 = vadd.f32 %v2214, %v2224
        %v2227 = vadd.f32 %v2215, %v2225
        %2228 = vset.pattern.permute.xlu0 4
        %2229 = vperm.xlu0 %2228, %v2150
        %v2230 = vpop.permute.xlu0 %2229
        %2232 = vset.pattern.permute.xlu0 4
        %2233 = vperm.xlu0 %2232, %v2152
        %v2234 = vpop.permute.xlu0 %2233
        %v2236 = vmul.f32 %v2230, %v655
        %v2237 = vmul.f32 %v2234, %v656
        %v2238 = vadd.f32 %v2226, %v2236
        %v2239 = vadd.f32 %v2227, %v2237
        %2240 = vset.pattern.permute.xlu0 5
        %2241 = vperm.xlu0 %2240, %v2150
        %v2242 = vpop.permute.xlu0 %2241
        %2244 = vset.pattern.permute.xlu0 5
        %2245 = vperm.xlu0 %2244, %v2152
        %v2246 = vpop.permute.xlu0 %2245
        %v2248 = vmul.f32 %v2242, %v661
        %v2249 = vmul.f32 %v2246, %v662
        %v2250 = vadd.f32 %v2238, %v2248
        %v2251 = vadd.f32 %v2239, %v2249
        %2252 = vset.pattern.permute.xlu0 6
        %2253 = vperm.xlu0 %2252, %v2150
        %v2254 = vpop.permute.xlu0 %2253
        %2256 = vset.pattern.permute.xlu0 6
        %2257 = vperm.xlu0 %2256, %v2152
        %v2258 = vpop.permute.xlu0 %2257
        %v2260 = vmul.f32 %v2254, %v667
        %v2261 = vmul.f32 %v2258, %v668
        %v2262 = vadd.f32 %v2250, %v2260
        %v2263 = vadd.f32 %v2251, %v2261
        %2264 = vset.pattern.permute.xlu0 7
        %2265 = vperm.xlu0 %2264, %v2150
        %v2266 = vpop.permute.xlu0 %2265
        %2268 = vset.pattern.permute.xlu0 7
        %2269 = vperm.xlu0 %2268, %v2152
        %v2270 = vpop.permute.xlu0 %2269
        %v2272 = vmul.f32 %v2266, %v673
        %v2273 = vmul.f32 %v2270, %v674
        %v2274 = vadd.f32 %v2262, %v2272
        %v2275 = vadd.f32 %v2263, %v2273
        %2276 = vset.pattern.permute.xlu0 8
        %2277 = vperm.xlu0 %2276, %v2150
        %v2278 = vpop.permute.xlu0 %2277
        %2280 = vset.pattern.permute.xlu0 8
        %2281 = vperm.xlu0 %2280, %v2152
        %v2282 = vpop.permute.xlu0 %2281
        %v2284 = vmul.f32 %v2278, %v679
        %v2285 = vmul.f32 %v2282, %v680
        %v2286 = vadd.f32 %v2274, %v2284
        %v2287 = vadd.f32 %v2275, %v2285
        %v2288 = vadd.f32 %v2286, %v621
        %v2289 = vadd.f32 %v2287, %v622
        %v2290 = vsel %vm980, %v2288, -inf
        %2291 = vmax.xlane.f32.xlu0 %v2290
        %v2292 = vpop.xlane.xlu0 %2291
        %v2293 = vsel %vm980, %v2289, -inf
        %2294 = vmax.xlane.f32.xlu0 %v2293
        %v2295 = vpop.xlane.xlu0 %2294
        %v2296 = vsub.f32 %v2288, %v2292
        %v2297 = vsub.f32 %v2289, %v2295
        %v2298 = vmul.f32 %v2296, 1.442695
        %v2299 = vpow.pop %v2298
        %v2300 = vmul.f32 %v2297, 1.442695
        %v2301 = vpow.pop %v2300
        %v2302 = vsel %vm980, %v2299, 0.0
        %2303 = vadd.xlane.f32.xlu0 %v2302
        %v2304 = vpop.xlane.xlu0 %2303
        %v2305 = vsel %vm980, %v2301, 0.0
        %2306 = vadd.xlane.f32.xlu0 %v2305
        %v2307 = vpop.xlane.xlu0 %2306
        %v2308 = vrcp.pop %v2304
        %v2309 = vmul.f32 %v2304, %v2308
        %v2310 = vsub.f32 1.0, %v2309
        %v2311 = vmul.f32 %v2308, %v2310
        %v2312 = vadd.f32 %v2308, %v2311
        %vm2313 = vweird.f32 %v2304
        %vm2314 = vweird.f32 %v2308
        %vm2315 = vmor %vm2313, %vm2314
        %v2316 = vsel %vm2315, %v2308, %v2312
        %v2317 = vand.u32 2147483647, %v2304
        %vm2318 = vcmp.eq.f32.partialorder %v2317, 8.507059e+37
        %v2319 = vand.u32 %v2304, 2147483648
        %v2320 = vor.u32 1.1754944e-38, %v2319
        %v2321 = vsel %vm2318, %v2320, %v2316
        %v2322 = vmul.f32 %v2299, %v2321
        %v2323 = vrcp.pop %v2307
        %v2324 = vmul.f32 %v2307, %v2323
        %v2325 = vsub.f32 1.0, %v2324
        %v2326 = vmul.f32 %v2323, %v2325
        %v2327 = vadd.f32 %v2323, %v2326
        %vm2328 = vweird.f32 %v2307
        %vm2329 = vweird.f32 %v2323
        %vm2330 = vmor %vm2328, %vm2329
        %v2331 = vsel %vm2330, %v2323, %v2327
        %v2332 = vand.u32 2147483647, %v2307
        %vm2333 = vcmp.eq.f32.partialorder %v2332, 8.507059e+37
        %v2334 = vand.u32 %v2307, 2147483648
        %v2335 = vor.u32 1.1754944e-38, %v2334
        %v2336 = vsel %vm2333, %v2335, %v2331
        %v2337 = vmul.f32 %v2301, %v2336
        %v2338 = vpack.c.bf16 %v2337, %v2322
        %2339 = vrot.lane.b32.xlu0 %v2170, 64
        %v2340 = vpop.permute.xlu0 %2339
        %v2343 = vsel %vm980, %v2338, 0
        %2345 = vmatpush.bf16.msra.mxu0 0
        %2346 = vmatpush.bf16.msra.mxu0 0
        %2347 = vmatpush.bf16.msra.mxu0 0
        %2348 = vmatpush.bf16.msra.mxu0 0
        %2349 = vmatpush.bf16.msra.mxu0 0
        %2350 = vmatpush.bf16.msra.mxu0 0
        %2351 = vmatpush.bf16.msra.mxu0 0
        %2352 = vmatpush.bf16.msra.mxu0 %v2340
        %2353 = vmatmul.bf16.gmra.mxu0 %v2343
        %v2354 = vpop.f32.mrf.mxu0
        %v2355 = vadd.f32 0.0, %v2354
        %v2356 = vpop.f32.mrf.mxu0
        %v2357 = vadd.f32 0.0, %v2356
        %2358 = vdwg.mxu0
        %v2359 = vmul.f32 %v2322, %v631
        %v2360 = vmul.f32 %v2337, %v632
        %v2361 = vsel %vm980, %v2359, 0.0
        %2362 = vadd.xlane.f32.xlu0 %v2361
        %v2363 = vpop.xlane.xlu0 %2362
        %v2364 = vsel %vm980, %v2360, 0.0
        %2365 = vadd.xlane.f32.xlu0 %v2364
        %v2366 = vpop.xlane.xlu0 %2365
        %v2367 = vmul.f32 %v2363, %v683
        %v2368 = vmul.f32 %v2366, %v683
        %v2369 = vadd.f32 %v2367, 0.0
        %v2370 = vadd.f32 %v2368, 0.0
        %v2371 = vmul.f32 %v2322, %v637
        %v2372 = vmul.f32 %v2337, %v638
        %v2373 = vsel %vm980, %v2371, 0.0
        %2374 = vadd.xlane.f32.xlu0 %v2373
        %v2375 = vpop.xlane.xlu0 %2374
        %v2376 = vsel %vm980, %v2372, 0.0
        %2377 = vadd.xlane.f32.xlu0 %v2376
        %v2378 = vpop.xlane.xlu0 %2377
        %v2379 = vmul.f32 %v2375, %v686
        %v2380 = vmul.f32 %v2378, %v686
        %v2381 = vadd.f32 %v2369, %v2379
        %v2382 = vadd.f32 %v2370, %v2380
        %v2383 = vmul.f32 %v2322, %v643
        %v2384 = vmul.f32 %v2337, %v644
        %v2385 = vsel %vm980, %v2383, 0.0
        %2386 = vadd.xlane.f32.xlu0 %v2385
        %v2387 = vpop.xlane.xlu0 %2386
        %v2388 = vsel %vm980, %v2384, 0.0
        %2389 = vadd.xlane.f32.xlu0 %v2388
        %v2390 = vpop.xlane.xlu0 %2389
        %v2391 = vmul.f32 %v2387, %v689
        %v2392 = vmul.f32 %v2390, %v689
        %v2393 = vadd.f32 %v2381, %v2391
        %v2394 = vadd.f32 %v2382, %v2392
        %v2395 = vmul.f32 %v2322, %v649
        %v2396 = vmul.f32 %v2337, %v650
        %v2397 = vsel %vm980, %v2395, 0.0
        %2398 = vadd.xlane.f32.xlu0 %v2397
        %v2399 = vpop.xlane.xlu0 %2398
        %v2400 = vsel %vm980, %v2396, 0.0
        %2401 = vadd.xlane.f32.xlu0 %v2400
        %v2402 = vpop.xlane.xlu0 %2401
        %v2403 = vmul.f32 %v2399, %v692
        %v2404 = vmul.f32 %v2402, %v692
        %v2405 = vadd.f32 %v2393, %v2403
        %v2406 = vadd.f32 %v2394, %v2404
        %v2407 = vmul.f32 %v2322, %v655
        %v2408 = vmul.f32 %v2337, %v656
        %v2409 = vsel %vm980, %v2407, 0.0
        %2410 = vadd.xlane.f32.xlu0 %v2409
        %v2411 = vpop.xlane.xlu0 %2410
        %v2412 = vsel %vm980, %v2408, 0.0
        %2413 = vadd.xlane.f32.xlu0 %v2412
        %v2414 = vpop.xlane.xlu0 %2413
        %v2415 = vmul.f32 %v2411, %v695
        %v2416 = vmul.f32 %v2414, %v695
        %v2417 = vadd.f32 %v2405, %v2415
        %v2418 = vadd.f32 %v2406, %v2416
        %v2419 = vmul.f32 %v2322, %v661
        %v2420 = vmul.f32 %v2337, %v662
        %v2421 = vsel %vm980, %v2419, 0.0
        %2422 = vadd.xlane.f32.xlu0 %v2421
        %v2423 = vpop.xlane.xlu0 %2422
        %v2424 = vsel %vm980, %v2420, 0.0
        %2425 = vadd.xlane.f32.xlu0 %v2424
        %v2426 = vpop.xlane.xlu0 %2425
        %v2427 = vmul.f32 %v2423, %v698
        %v2428 = vmul.f32 %v2426, %v698
        %v2429 = vadd.f32 %v2417, %v2427
        %v2430 = vadd.f32 %v2418, %v2428
        %v2431 = vmul.f32 %v2322, %v667
        %v2432 = vmul.f32 %v2337, %v668
        %v2433 = vsel %vm980, %v2431, 0.0
        %2434 = vadd.xlane.f32.xlu0 %v2433
        %v2435 = vpop.xlane.xlu0 %2434
        %v2436 = vsel %vm980, %v2432, 0.0
        %2437 = vadd.xlane.f32.xlu0 %v2436
        %v2438 = vpop.xlane.xlu0 %2437
        %v2439 = vmul.f32 %v2435, %v701
        %v2440 = vmul.f32 %v2438, %v701
        %v2441 = vadd.f32 %v2429, %v2439
        %v2442 = vadd.f32 %v2430, %v2440
        %v2443 = vmul.f32 %v2322, %v673
        %v2444 = vmul.f32 %v2337, %v674
        %v2445 = vsel %vm980, %v2443, 0.0
        %2446 = vadd.xlane.f32.xlu0 %v2445
        %v2447 = vpop.xlane.xlu0 %2446
        %v2448 = vsel %vm980, %v2444, 0.0
        %2449 = vadd.xlane.f32.xlu0 %v2448
        %v2450 = vpop.xlane.xlu0 %2449
        %v2451 = vmul.f32 %v2447, %v704
        %v2452 = vmul.f32 %v2450, %v704
        %v2453 = vadd.f32 %v2441, %v2451
        %v2454 = vadd.f32 %v2442, %v2452
        %v2455 = vmul.f32 %v2322, %v679
        %v2456 = vmul.f32 %v2337, %v680
        %v2457 = vsel %vm980, %v2455, 0.0
        %2458 = vadd.xlane.f32.xlu0 %v2457
        %v2459 = vpop.xlane.xlu0 %2458
        %v2460 = vsel %vm980, %v2456, 0.0
        %2461 = vadd.xlane.f32.xlu0 %v2460
        %v2462 = vpop.xlane.xlu0 %2461
        %v2463 = vmul.f32 %v2459, %v707
        %v2464 = vmul.f32 %v2462, %v707
        %v2465 = vadd.f32 %v2453, %v2463
        %v2466 = vadd.f32 %v2454, %v2464
        %2467 = vset.pattern.permute.xlu0 9
        %2468 = vperm.xlu0 %2467, %v2150
        %v2469 = vpop.permute.xlu0 %2468
        %2471 = vset.pattern.permute.xlu0 9
        %2472 = vperm.xlu0 %2471, %v2152
        %v2473 = vpop.permute.xlu0 %2472
        %v2475 = vmul.f32 %v2469, %v631
        %v2476 = vmul.f32 %v2473, %v632
        %2477 = vrot.lane.b32.xlu0 %v2124, 112
        %v2478 = vpop.permute.xlu0 %2477
        %2479 = vrot.lane.b32.xlu0 %v2170, 80
        %v2480 = vpop.permute.xlu0 %2479
        %v2482 = vsel %vm980, %v2478, 0
        %v2485 = vsel %vm980, %v2480, 0
        %2487 = vmatpush.bf16.xpose.msra.mxu0 0
        %2488 = vmatpush.bf16.xpose.msra.mxu0 0
        %2489 = vmatpush.bf16.xpose.msra.mxu0 0
        %2490 = vmatpush.bf16.xpose.msra.mxu0 0
        %2491 = vmatpush.bf16.xpose.msra.mxu0 0
        %2492 = vmatpush.bf16.xpose.msra.mxu0 0
        %2493 = vmatpush.bf16.xpose.msra.mxu0 0
        %2494 = vmatpush.bf16.xpose.msra.mxu0 %v2485
        %2495 = vmatmul.bf16.gmra.mxu0 %v2482
        %v2496 = vpop.f32.mrf.mxu0
        %v2497 = vadd.f32 %v2475, %v2496
        %v2498 = vpop.f32.mrf.mxu0
        %v2499 = vadd.f32 %v2476, %v2498
        %2500 = vdwg.mxu0
        %2501 = vset.pattern.permute.xlu0 10
        %2502 = vperm.xlu0 %2501, %v2150
        %v2503 = vpop.permute.xlu0 %2502
        %2505 = vset.pattern.permute.xlu0 10
        %2506 = vperm.xlu0 %2505, %v2152
        %v2507 = vpop.permute.xlu0 %2506
        %v2509 = vmul.f32 %v2503, %v637
        %v2510 = vmul.f32 %v2507, %v638
        %v2511 = vadd.f32 %v2497, %v2509
        %v2512 = vadd.f32 %v2499, %v2510
        %2513 = vset.pattern.permute.xlu0 11
        %2514 = vperm.xlu0 %2513, %v2150
        %v2515 = vpop.permute.xlu0 %2514
        %2517 = vset.pattern.permute.xlu0 11
        %2518 = vperm.xlu0 %2517, %v2152
        %v2519 = vpop.permute.xlu0 %2518
        %v2521 = vmul.f32 %v2515, %v643
        %v2522 = vmul.f32 %v2519, %v644
        %v2523 = vadd.f32 %v2511, %v2521
        %v2524 = vadd.f32 %v2512, %v2522
        %2525 = vset.pattern.permute.xlu0 12
        %2526 = vperm.xlu0 %2525, %v2150
        %v2527 = vpop.permute.xlu0 %2526
        %2529 = vset.pattern.permute.xlu0 12
        %2530 = vperm.xlu0 %2529, %v2152
        %v2531 = vpop.permute.xlu0 %2530
        %v2533 = vmul.f32 %v2527, %v649
        %v2534 = vmul.f32 %v2531, %v650
        %v2535 = vadd.f32 %v2523, %v2533
        %v2536 = vadd.f32 %v2524, %v2534
        %2537 = vset.pattern.permute.xlu0 13
        %2538 = vperm.xlu0 %2537, %v2150
        %v2539 = vpop.permute.xlu0 %2538
        %2541 = vset.pattern.permute.xlu0 13
        %2542 = vperm.xlu0 %2541, %v2152
        %v2543 = vpop.permute.xlu0 %2542
        %v2545 = vmul.f32 %v2539, %v655
        %v2546 = vmul.f32 %v2543, %v656
        %v2547 = vadd.f32 %v2535, %v2545
        %v2548 = vadd.f32 %v2536, %v2546
        %2549 = vset.pattern.permute.xlu0 14
        %2550 = vperm.xlu0 %2549, %v2150
        %v2551 = vpop.permute.xlu0 %2550
        %2553 = vset.pattern.permute.xlu0 14
        %2554 = vperm.xlu0 %2553, %v2152
        %v2555 = vpop.permute.xlu0 %2554
        %v2557 = vmul.f32 %v2551, %v661
        %v2558 = vmul.f32 %v2555, %v662
        %v2559 = vadd.f32 %v2547, %v2557
        %v2560 = vadd.f32 %v2548, %v2558
        %2561 = vset.pattern.permute.xlu0 15
        %2562 = vperm.xlu0 %2561, %v2150
        %v2563 = vpop.permute.xlu0 %2562
        %2565 = vset.pattern.permute.xlu0 15
        %2566 = vperm.xlu0 %2565, %v2152
        %v2567 = vpop.permute.xlu0 %2566
        %v2569 = vmul.f32 %v2563, %v667
        %v2570 = vmul.f32 %v2567, %v668
        %v2571 = vadd.f32 %v2559, %v2569
        %v2572 = vadd.f32 %v2560, %v2570
        %2573 = vset.pattern.permute.xlu0 16
        %2574 = vperm.xlu0 %2573, %v2150
        %v2575 = vpop.permute.xlu0 %2574
        %2577 = vset.pattern.permute.xlu0 16
        %2578 = vperm.xlu0 %2577, %v2152
        %v2579 = vpop.permute.xlu0 %2578
        %v2581 = vmul.f32 %v2575, %v673
        %v2582 = vmul.f32 %v2579, %v674
        %v2583 = vadd.f32 %v2571, %v2581
        %v2584 = vadd.f32 %v2572, %v2582
        %2585 = vset.pattern.permute.xlu0 17
        %2586 = vperm.xlu0 %2585, %v2150
        %v2587 = vpop.permute.xlu0 %2586
        %2589 = vset.pattern.permute.xlu0 17
        %2590 = vperm.xlu0 %2589, %v2152
        %v2591 = vpop.permute.xlu0 %2590
        %v2593 = vmul.f32 %v2587, %v679
        %v2594 = vmul.f32 %v2591, %v680
        %v2595 = vadd.f32 %v2583, %v2593
        %v2596 = vadd.f32 %v2584, %v2594
        %v2597 = vadd.f32 %v2595, %v621
        %v2598 = vadd.f32 %v2596, %v622
        %v2599 = vsel %vm980, %v2597, -inf
        %2600 = vmax.xlane.f32.xlu0 %v2599
        %v2601 = vpop.xlane.xlu0 %2600
        %v2602 = vsel %vm980, %v2598, -inf
        %2603 = vmax.xlane.f32.xlu0 %v2602
        %v2604 = vpop.xlane.xlu0 %2603
        %v2605 = vsub.f32 %v2597, %v2601
        %v2606 = vsub.f32 %v2598, %v2604
        %v2607 = vmul.f32 %v2605, 1.442695
        %v2608 = vpow.pop %v2607
        %v2609 = vmul.f32 %v2606, 1.442695
        %v2610 = vpow.pop %v2609
        %v2611 = vsel %vm980, %v2608, 0.0
        %2612 = vadd.xlane.f32.xlu0 %v2611
        %v2613 = vpop.xlane.xlu0 %2612
        %v2614 = vsel %vm980, %v2610, 0.0
        %2615 = vadd.xlane.f32.xlu0 %v2614
        %v2616 = vpop.xlane.xlu0 %2615
        %v2617 = vrcp.pop %v2613
        %v2618 = vmul.f32 %v2613, %v2617
        %v2619 = vsub.f32 1.0, %v2618
        %v2620 = vmul.f32 %v2617, %v2619
        %v2621 = vadd.f32 %v2617, %v2620
        %vm2622 = vweird.f32 %v2613
        %vm2623 = vweird.f32 %v2617
        %vm2624 = vmor %vm2622, %vm2623
        %v2625 = vsel %vm2624, %v2617, %v2621
        %v2626 = vand.u32 2147483647, %v2613
        %vm2627 = vcmp.eq.f32.partialorder %v2626, 8.507059e+37
        %v2628 = vand.u32 %v2613, 2147483648
        %v2629 = vor.u32 1.1754944e-38, %v2628
        %v2630 = vsel %vm2627, %v2629, %v2625
        %v2631 = vmul.f32 %v2608, %v2630
        %v2632 = vrcp.pop %v2616
        %v2633 = vmul.f32 %v2616, %v2632
        %v2634 = vsub.f32 1.0, %v2633
        %v2635 = vmul.f32 %v2632, %v2634
        %v2636 = vadd.f32 %v2632, %v2635
        %vm2637 = vweird.f32 %v2616
        %vm2638 = vweird.f32 %v2632
        %vm2639 = vmor %vm2637, %vm2638
        %v2640 = vsel %vm2639, %v2632, %v2636
        %v2641 = vand.u32 2147483647, %v2616
        %vm2642 = vcmp.eq.f32.partialorder %v2641, 8.507059e+37
        %v2643 = vand.u32 %v2616, 2147483648
        %v2644 = vor.u32 1.1754944e-38, %v2643
        %v2645 = vsel %vm2642, %v2644, %v2640
        %v2646 = vmul.f32 %v2610, %v2645
        %v2647 = vpack.c.bf16 %v2646, %v2631
        %2648 = vrot.lane.b32.xlu0 %v2170, 48
        %v2649 = vpop.permute.xlu0 %2648
        %v2652 = vsel %vm980, %v2647, 0
        %2654 = vmatpush.bf16.msra.mxu0 0
        %2655 = vmatpush.bf16.msra.mxu0 0
        %2656 = vmatpush.bf16.msra.mxu0 0
        %2657 = vmatpush.bf16.msra.mxu0 0
        %2658 = vmatpush.bf16.msra.mxu0 0
        %2659 = vmatpush.bf16.msra.mxu0 0
        %2660 = vmatpush.bf16.msra.mxu0 0
        %2661 = vmatpush.bf16.msra.mxu0 %v2649
        %2662 = vmatmul.bf16.gmra.mxu0 %v2652
        %v2663 = vpop.f32.mrf.mxu0
        %v2664 = vadd.f32 0.0, %v2663
        %v2665 = vpop.f32.mrf.mxu0
        %v2666 = vadd.f32 0.0, %v2665
        %2667 = vdwg.mxu0
        %v2668 = vmul.f32 %v2631, %v631
        %v2669 = vmul.f32 %v2646, %v632
        %v2670 = vsel %vm980, %v2668, 0.0
        %2671 = vadd.xlane.f32.xlu0 %v2670
        %v2672 = vpop.xlane.xlu0 %2671
        %v2673 = vsel %vm980, %v2669, 0.0
        %2674 = vadd.xlane.f32.xlu0 %v2673
        %v2675 = vpop.xlane.xlu0 %2674
        %v2676 = vmul.f32 %v2672, %v683
        %v2677 = vmul.f32 %v2675, %v683
        %v2678 = vadd.f32 %v2676, 0.0
        %v2679 = vadd.f32 %v2677, 0.0
        %v2680 = vmul.f32 %v2631, %v637
        %v2681 = vmul.f32 %v2646, %v638
        %v2682 = vsel %vm980, %v2680, 0.0
        %2683 = vadd.xlane.f32.xlu0 %v2682
        %v2684 = vpop.xlane.xlu0 %2683
        %v2685 = vsel %vm980, %v2681, 0.0
        %2686 = vadd.xlane.f32.xlu0 %v2685
        %v2687 = vpop.xlane.xlu0 %2686
        %v2688 = vmul.f32 %v2684, %v686
        %v2689 = vmul.f32 %v2687, %v686
        %v2690 = vadd.f32 %v2678, %v2688
        %v2691 = vadd.f32 %v2679, %v2689
        %v2692 = vmul.f32 %v2631, %v643
        %v2693 = vmul.f32 %v2646, %v644
        %v2694 = vsel %vm980, %v2692, 0.0
        %2695 = vadd.xlane.f32.xlu0 %v2694
        %v2696 = vpop.xlane.xlu0 %2695
        %v2697 = vsel %vm980, %v2693, 0.0
        %2698 = vadd.xlane.f32.xlu0 %v2697
        %v2699 = vpop.xlane.xlu0 %2698
        %v2700 = vmul.f32 %v2696, %v689
        %v2701 = vmul.f32 %v2699, %v689
        %v2702 = vadd.f32 %v2690, %v2700
        %v2703 = vadd.f32 %v2691, %v2701
        %v2704 = vmul.f32 %v2631, %v649
        %v2705 = vmul.f32 %v2646, %v650
        %v2706 = vsel %vm980, %v2704, 0.0
        %2707 = vadd.xlane.f32.xlu0 %v2706
        %v2708 = vpop.xlane.xlu0 %2707
        %v2709 = vsel %vm980, %v2705, 0.0
        %2710 = vadd.xlane.f32.xlu0 %v2709
        %v2711 = vpop.xlane.xlu0 %2710
        %v2712 = vmul.f32 %v2708, %v692
        %v2713 = vmul.f32 %v2711, %v692
        %v2714 = vadd.f32 %v2702, %v2712
        %v2715 = vadd.f32 %v2703, %v2713
        %v2716 = vmul.f32 %v2631, %v655
        %v2717 = vmul.f32 %v2646, %v656
        %v2718 = vsel %vm980, %v2716, 0.0
        %2719 = vadd.xlane.f32.xlu0 %v2718
        %v2720 = vpop.xlane.xlu0 %2719
        %v2721 = vsel %vm980, %v2717, 0.0
        %2722 = vadd.xlane.f32.xlu0 %v2721
        %v2723 = vpop.xlane.xlu0 %2722
        %v2724 = vmul.f32 %v2720, %v695
        %v2725 = vmul.f32 %v2723, %v695
        %v2726 = vadd.f32 %v2714, %v2724
        %v2727 = vadd.f32 %v2715, %v2725
        %v2728 = vmul.f32 %v2631, %v661
        %v2729 = vmul.f32 %v2646, %v662
        %v2730 = vsel %vm980, %v2728, 0.0
        %2731 = vadd.xlane.f32.xlu0 %v2730
        %v2732 = vpop.xlane.xlu0 %2731
        %v2733 = vsel %vm980, %v2729, 0.0
        %2734 = vadd.xlane.f32.xlu0 %v2733
        %v2735 = vpop.xlane.xlu0 %2734
        %v2736 = vmul.f32 %v2732, %v698
        %v2737 = vmul.f32 %v2735, %v698
        %v2738 = vadd.f32 %v2726, %v2736
        %v2739 = vadd.f32 %v2727, %v2737
        %v2740 = vmul.f32 %v2631, %v667
        %v2741 = vmul.f32 %v2646, %v668
        %v2742 = vsel %vm980, %v2740, 0.0
        %2743 = vadd.xlane.f32.xlu0 %v2742
        %v2744 = vpop.xlane.xlu0 %2743
        %v2745 = vsel %vm980, %v2741, 0.0
        %2746 = vadd.xlane.f32.xlu0 %v2745
        %v2747 = vpop.xlane.xlu0 %2746
        %v2748 = vmul.f32 %v2744, %v701
        %v2749 = vmul.f32 %v2747, %v701
        %v2750 = vadd.f32 %v2738, %v2748
        %v2751 = vadd.f32 %v2739, %v2749
        %v2752 = vmul.f32 %v2631, %v673
        %v2753 = vmul.f32 %v2646, %v674
        %v2754 = vsel %vm980, %v2752, 0.0
        %2755 = vadd.xlane.f32.xlu0 %v2754
        %v2756 = vpop.xlane.xlu0 %2755
        %v2757 = vsel %vm980, %v2753, 0.0
        %2758 = vadd.xlane.f32.xlu0 %v2757
        %v2759 = vpop.xlane.xlu0 %2758
        %v2760 = vmul.f32 %v2756, %v704
        %v2761 = vmul.f32 %v2759, %v704
        %v2762 = vadd.f32 %v2750, %v2760
        %v2763 = vadd.f32 %v2751, %v2761
        %v2764 = vmul.f32 %v2631, %v679
        %v2765 = vmul.f32 %v2646, %v680
        %v2766 = vsel %vm980, %v2764, 0.0
        %2767 = vadd.xlane.f32.xlu0 %v2766
        %v2768 = vpop.xlane.xlu0 %2767
        %v2769 = vsel %vm980, %v2765, 0.0
        %2770 = vadd.xlane.f32.xlu0 %v2769
        %v2771 = vpop.xlane.xlu0 %2770
        %v2772 = vmul.f32 %v2768, %v707
        %v2773 = vmul.f32 %v2771, %v707
        %v2774 = vadd.f32 %v2762, %v2772
        %v2775 = vadd.f32 %v2763, %v2773
        %2778 = vrot.lane.b32.xlu0 %v2664, 16
        %v2779 = vpop.permute.xlu0 %2778
        %2780 = vrot.lane.b32.xlu0 %v2666, 16
        %v2781 = vpop.permute.xlu0 %2780
        %v2784 = vsel %vm980, %v2355, %v2779
        %v2785 = vsel %vm980, %v2357, %v2781
        %2788 = vrot.lane.b32.xlu0 %v2774, 9
        %v2789 = vpop.permute.xlu0 %2788
        %2790 = vrot.lane.b32.xlu0 %v2775, 9
        %v2791 = vpop.permute.xlu0 %2790
        %v2794 = vsel %vm1602, %v2465, %v2789
        %v2795 = vsel %vm1602, %v2466, %v2791
        %v2796 = vpack.c.bf16 %v2795, %v2794
        %s2797 = scalar_lea.vmem %s10, 12
        %v2798 = vld [vmem:[%s2797] sm:$0xf]
        %v2799 = vld [vmem:[%s2797 + $0x4] sm:$0xf]
        %v2800 = vld [vmem:[%s2797 + $0x8] sm:$0x1]
        %v2804 = vunpack.c.l.b16 %v2798
        %v2805 = vunpack.c.l.b16 %v2799
        %v2806 = vunpack.c.l.b16 %v2800
        %v2807 = vpack.c.b16 %v2805, %v2804
        %v2808 = vpack.c.b16 %v2806, %v2806
        %v2811 = vsel %vm1618, %v2796, 0
        %v2814 = vsel %vm1622, %v2808, 0
        %2816 = vmatpush.bf16.msra.mxu0 0
        %2817 = vmatpush.bf16.msra.mxu0 0
        %2818 = vmatpush.bf16.msra.mxu0 0
        %2819 = vmatpush.bf16.msra.mxu0 0
        %2820 = vmatpush.bf16.msra.mxu0 0
        %2821 = vmatpush.bf16.msra.mxu0 0
        %2822 = vmatpush.bf16.msra.mxu0 %v2814
        %2823 = vmatpush.bf16.msra.mxu0 %v2807
        %2824 = vmatmul.bf16.gmra.mxu0 %v2811
        %v2825 = vpop.f32.mrf.mxu0
        %v2826 = vadd.f32 0.0, %v2825
        %v2827 = vpop.f32.mrf.mxu0
        %v2828 = vadd.f32 0.0, %v2827
        %2829 = vdwg.mxu0
        %v2830 = vadd.f32 %v2784, %v2826
        %v2831 = vadd.f32 %v2785, %v2828
        %v2832 = vpack.c.bf16 %v2831, %v2830
        %s2833 = scalar_lea.vmem %s7, 16
        %v2834 = vld [vmem:[%s2833] sm:$0xf]
        %v2835 = vld [vmem:[%s2833 + $0x4] sm:$0xf]
        %v2836 = vld [vmem:[%s2833 + $0x8] sm:$0xf]
        %v2837 = vld [vmem:[%s2833 + $0xc] sm:$0xf]
        %s2838 = scalar_lea.vmem %s8, 1
        %v2839 = vld [vmem:[%s2838] sm:$0x1]
        %v2841 = vperm.slane %v2839, 0
        %v2847 = vunpack.c.l.b16 %v2834
        %v2848 = vunpack.c.l.b16 %v2835
        %v2849 = vunpack.c.l.b16 %v2836
        %v2850 = vunpack.c.l.b16 %v2837
        %v2851 = vpack.c.b16 %v2848, %v2847
        %v2852 = vpack.c.b16 %v2850, %v2849
        %v2856 = vsel %vm899, %v2832, 0
        %2858 = vmatpush.bf16.msra.mxu0 0
        %2859 = vmatpush.bf16.msra.mxu0 0
        %2860 = vmatpush.bf16.msra.mxu0 0
        %2861 = vmatpush.bf16.msra.mxu0 0
        %2862 = vmatpush.bf16.msra.mxu0 0
        %2863 = vmatpush.bf16.msra.mxu0 0
        %2864 = vmatpush.bf16.msra.mxu0 %v2852
        %2865 = vmatpush.bf16.msra.mxu0 %v2851
        %2866 = vmatmul.bf16.gmra.mxu0 %v2856
        %v2867 = vpop.f32.mrf.mxu0
        %v2868 = vadd.f32 %v2841, %v2867
        %v2869 = vpop.f32.mrf.mxu0
        %v2870 = vadd.f32 %v2841, %v2869
        %2871 = vdwg.mxu0
        %v2872 = vadd.f32 %v2067, %v2868
        %v2873 = vadd.f32 %v2068, %v2870
        %s2874 = scalar_lea.vmem %s11, 1
        %v2875 = vld [vmem:[%s2874] sm:$0x1]
        %s2876 = scalar_lea.vmem %s12, 1
        %v2877 = vld [vmem:[%s2876] sm:$0x1]
        %v2878 = vsel %vm899, %v2872, 0.0
        %2879 = vadd.xlane.f32.xlu0 %v2878
        %v2880 = vpop.xlane.xlu0 %2879
        %v2881 = vsel %vm899, %v2873, 0.0
        %2882 = vadd.xlane.f32.xlu0 %v2881
        %v2883 = vpop.xlane.xlu0 %2882
        %v2884 = vmul.f32 %v2880, %v1696
        %v2885 = vmul.f32 %v2883, %v1696
        %v2886 = vsub.f32 %v2872, %v2884
        %v2887 = vsub.f32 %v2873, %v2885
        %v2888 = vmul.f32 %v2886, %v2886
        %v2889 = vmul.f32 %v2887, %v2887
        %v2890 = vsel %vm899, %v2888, 0.0
        %2891 = vadd.xlane.f32.xlu0 %v2890
        %v2892 = vpop.xlane.xlu0 %2891
        %v2893 = vsel %vm899, %v2889, 0.0
        %2894 = vadd.xlane.f32.xlu0 %v2893
        %v2895 = vpop.xlane.xlu0 %2894
        %v2896 = vmul.f32 %v2892, %v1696
        %v2897 = vmul.f32 %v2895, %v1696
        %v2898 = vadd.f32 %v2896, 1e-05
        %v2899 = vadd.f32 %v2897, 1e-05
        %v2900 = vrsqrt.pop %v2898
        %v2901 = vmul.f32 %v2900, %v2898
        %v2902 = vmul.f32 %v2901, %v2900
        %v2903 = vmul.f32 0.5, %v2902
        %v2904 = vsub.f32 1.5, %v2903
        %v2905 = vmul.f32 %v2900, %v2904
        %vm2906 = vweird.f32 %v2898
        %vm2907 = vweird.f32 %v2900
        %vm2908 = vmor %vm2906, %vm2907
        %v2909 = vsel %vm2908, %v2900, %v2905
        %v2910 = vrsqrt.pop %v2899
        %v2911 = vmul.f32 %v2910, %v2899
        %v2912 = vmul.f32 %v2911, %v2910
        %v2913 = vmul.f32 0.5, %v2912
        %v2914 = vsub.f32 1.5, %v2913
        %v2915 = vmul.f32 %v2910, %v2914
        %vm2916 = vweird.f32 %v2899
        %vm2917 = vweird.f32 %v2910
        %vm2918 = vmor %vm2916, %vm2917
        %v2919 = vsel %vm2918, %v2910, %v2915
        %v2920 = vmul.f32 %v2886, %v2909
        %v2921 = vmul.f32 %v2887, %v2919
        %v2923 = vperm.slane %v2875, 0
        %v2925 = vmul.f32 %v2920, %v2923
        %v2926 = vmul.f32 %v2921, %v2923
        %v2928 = vperm.slane %v2877, 0
        %v2930 = vadd.f32 %v2925, %v2928
        %v2931 = vadd.f32 %v2926, %v2928
        %v2932 = vmul.f32 %v2930, %v610
        %v2933 = vmul.f32 %v2931, %v611
        %v2936 = vrot.slane %v2932, 7
        %v2937 = vrot.slane %v2933, 7
        %v2938 = vsel %vm1622, %v2936, %v2937
        %v2941 = vsel %vm1622, 0.0, %v2936
        %v2942 = vrot.slane %v2932, 1
        %v2943 = vrot.slane %v2933, 1
        %v2944 = vsel %vm1755, %v2942, %v2943
        %v2946 = vsel %vm1755, %v2943, 0.0
        %2947 = vrot.lane.b32.xlu0 %v2932, 32
        %v2948 = vpop.permute.xlu0 %2947
        %2949 = vrot.lane.b32.xlu0 %v2933, 32
        %v2950 = vpop.permute.xlu0 %2949
        %2954 = vrot.lane.b32.xlu0 %v2944, 64
        %v2955 = vpop.permute.xlu0 %2954
        %2956 = vrot.lane.b32.xlu0 %v2946, 64
        %v2957 = vpop.permute.xlu0 %2956
        %v2960 = vsel %vm899, %v2941, %v2948
        %v2961 = vsel %vm899, %v2938, %v2950
        %v2962 = vsel %vm1776, %v2960, %v2955
        %v2963 = vsel %vm1776, %v2961, %v2957
        %v2964 = vpack.c.bf16 %v2963, %v2962
        %s2965 = scalar_lea.vmem %s13, 48
        %v2966 = vld [vmem:[%s2965] sm:$0xf]
        %v2967 = vld [vmem:[%s2965 + $0x4] sm:$0xf]
        %v2968 = vld [vmem:[%s2965 + $0x8] sm:$0xf]
        %v2969 = vld [vmem:[%s2965 + $0xc] sm:$0xf]
        %v2970 = vld [vmem:[%s2965 + $0x10] sm:$0xf]
        %v2971 = vld [vmem:[%s2965 + $0x14] sm:$0xf]
        %v2972 = vld [vmem:[%s2965 + $0x18] sm:$0xf]
        %v2973 = vld [vmem:[%s2965 + $0x1c] sm:$0xf]
        %v2974 = vld [vmem:[%s2965 + $0x20] sm:$0xf]
        %v2975 = vld [vmem:[%s2965 + $0x24] sm:$0xf]
        %v2976 = vld [vmem:[%s2965 + $0x28] sm:$0xf]
        %v2977 = vld [vmem:[%s2965 + $0x2c] sm:$0xf]
        %s2978 = scalar_lea.vmem %s14, 1
        %v2979 = vld [vmem:[%s2978] sm:$0x1]
        %v2981 = vperm.slane %v2979, 0
        %v2995 = vunpack.c.l.b16 %v2966
        %v2996 = vunpack.c.l.b16 %v2967
        %v2997 = vunpack.c.l.b16 %v2968
        %v2998 = vunpack.c.l.b16 %v2969
        %v2999 = vunpack.c.l.b16 %v2970
        %v3000 = vunpack.c.l.b16 %v2971
        %v3001 = vunpack.c.l.b16 %v2972
        %v3002 = vunpack.c.l.b16 %v2973
        %v3003 = vunpack.c.l.b16 %v2974
        %v3004 = vunpack.c.l.b16 %v2975
        %v3005 = vunpack.c.l.b16 %v2976
        %v3006 = vunpack.c.l.b16 %v2977
        %v3007 = vpack.c.b16 %v2996, %v2995
        %v3008 = vpack.c.b16 %v2998, %v2997
        %v3009 = vpack.c.b16 %v3000, %v2999
        %v3010 = vpack.c.b16 %v3002, %v3001
        %v3011 = vpack.c.b16 %v3004, %v3003
        %v3012 = vpack.c.b16 %v3006, %v3005
        %v3020 = vsel %vm1832, %v2964, 0
        %3022 = vmatpush.bf16.msra.mxu0 0
        %3023 = vmatpush.bf16.msra.mxu0 0
        %3024 = vmatpush.bf16.msra.mxu0 %v3012
        %3025 = vmatpush.bf16.msra.mxu0 %v3011
        %3026 = vmatpush.bf16.msra.mxu0 %v3010
        %3027 = vmatpush.bf16.msra.mxu0 %v3009
        %3028 = vmatpush.bf16.msra.mxu0 %v3008
        %3029 = vmatpush.bf16.msra.mxu0 %v3007
        %3030 = vmatmul.bf16.gmra.mxu0 %v3020
        %v3031 = vpop.f32.mrf.mxu0
        %v3032 = vadd.f32 %v2981, %v3031
        %v3033 = vpop.f32.mrf.mxu0
        %v3034 = vadd.f32 %v2981, %v3033
        %3035 = vdwg.mxu0
        %v3036 = vmax.f32 %v3032, 0.0
        %v3037 = vmax.f32 %v3034, 0.0
        %v3038 = vmul.f32 %v3036, %v610
        %v3039 = vmul.f32 %v3037, %v611
        %v3042 = vrot.slane %v3038, 7
        %v3043 = vrot.slane %v3039, 7
        %v3044 = vsel %vm1622, %v3042, %v3043
        %v3047 = vsel %vm1622, 0.0, %v3042
        %v3048 = vrot.slane %v3038, 1
        %v3049 = vrot.slane %v3039, 1
        %v3050 = vsel %vm1755, %v3048, %v3049
        %v3053 = vsel %vm1755, %v3049, 0.0
        %3054 = vrot.lane.b32.xlu0 %v3038, 64
        %v3055 = vpop.permute.xlu0 %3054
        %3056 = vrot.lane.b32.xlu0 %v3039, 64
        %v3057 = vpop.permute.xlu0 %3056
        %v3060 = vsel %vm1776, %v3047, %v3055
        %v3061 = vsel %vm1776, %v3044, %v3057
        %v3062 = vpack.c.bf16 %v3061, %v3060
        %v3063 = vpack.c.bf16 %v3053, %v3050
        %s3064 = scalar_lea.vmem %s15, 96
        %v3065 = vld [vmem:[%s3064] sm:$0xf]
        %v3066 = vld [vmem:[%s3064 + $0x4] sm:$0xf]
        %v3067 = vld [vmem:[%s3064 + $0x8] sm:$0xf]
        %v3068 = vld [vmem:[%s3064 + $0xc] sm:$0xf]
        %v3069 = vld [vmem:[%s3064 + $0x10] sm:$0xf]
        %v3070 = vld [vmem:[%s3064 + $0x14] sm:$0xf]
        %v3071 = vld [vmem:[%s3064 + $0x18] sm:$0xf]
        %v3072 = vld [vmem:[%s3064 + $0x1c] sm:$0xf]
        %v3073 = vld [vmem:[%s3064 + $0x20] sm:$0xf]
        %v3074 = vld [vmem:[%s3064 + $0x24] sm:$0xf]
        %v3075 = vld [vmem:[%s3064 + $0x28] sm:$0xf]
        %v3076 = vld [vmem:[%s3064 + $0x2c] sm:$0xf]
        %v3077 = vld [vmem:[%s3064 + $0x30] sm:$0xf]
        %v3078 = vld [vmem:[%s3064 + $0x34] sm:$0xf]
        %v3079 = vld [vmem:[%s3064 + $0x38] sm:$0xf]
        %v3080 = vld [vmem:[%s3064 + $0x3c] sm:$0xf]
        %v3081 = vld [vmem:[%s3064 + $0x40] sm:$0xf]
        %v3082 = vld [vmem:[%s3064 + $0x44] sm:$0xf]
        %v3083 = vld [vmem:[%s3064 + $0x48] sm:$0xf]
        %v3084 = vld [vmem:[%s3064 + $0x4c] sm:$0xf]
        %v3085 = vld [vmem:[%s3064 + $0x50] sm:$0xf]
        %v3086 = vld [vmem:[%s3064 + $0x54] sm:$0xf]
        %v3087 = vld [vmem:[%s3064 + $0x58] sm:$0xf]
        %v3088 = vld [vmem:[%s3064 + $0x5c] sm:$0xf]
        %s3089 = scalar_lea.vmem %s16, 1
        %v3090 = vld [vmem:[%s3089] sm:$0x1]
        %v3092 = vperm.slane %v3090, 0
        %v3118 = vunpack.c.l.b16 %v3065
        %v3119 = vunpack.c.l.b16 %v3066
        %v3120 = vunpack.c.l.b16 %v3067
        %v3121 = vunpack.c.l.b16 %v3068
        %v3122 = vunpack.c.l.b16 %v3069
        %v3123 = vunpack.c.l.b16 %v3070
        %v3124 = vunpack.c.l.b16 %v3071
        %v3125 = vunpack.c.l.b16 %v3072
        %v3126 = vunpack.c.l.b16 %v3073
        %v3127 = vunpack.c.l.b16 %v3074
        %v3128 = vunpack.c.l.b16 %v3075
        %v3129 = vunpack.c.l.b16 %v3076
        %v3130 = vunpack.c.l.b16 %v3077
        %v3131 = vunpack.c.l.b16 %v3078
        %v3132 = vunpack.c.l.b16 %v3079
        %v3133 = vunpack.c.l.b16 %v3080
        %v3134 = vunpack.c.l.b16 %v3081
        %v3135 = vunpack.c.l.b16 %v3082
        %v3136 = vunpack.c.l.b16 %v3083
        %v3137 = vunpack.c.l.b16 %v3084
        %v3138 = vunpack.c.l.b16 %v3085
        %v3139 = vunpack.c.l.b16 %v3086
        %v3140 = vunpack.c.l.b16 %v3087
        %v3141 = vunpack.c.l.b16 %v3088
        %v3142 = vpack.c.b16 %v3119, %v3118
        %v3143 = vpack.c.b16 %v3121, %v3120
        %v3144 = vpack.c.b16 %v3123, %v3122
        %v3145 = vpack.c.b16 %v3125, %v3124
        %v3146 = vpack.c.b16 %v3127, %v3126
        %v3147 = vpack.c.b16 %v3129, %v3128
        %v3148 = vpack.c.b16 %v3131, %v3130
        %v3149 = vpack.c.b16 %v3133, %v3132
        %v3150 = vpack.c.b16 %v3135, %v3134
        %v3151 = vpack.c.b16 %v3137, %v3136
        %v3152 = vpack.c.b16 %v3139, %v3138
        %v3153 = vpack.c.b16 %v3141, %v3140
        %v3167 = vsel %vm1776, %v3063, 0
        %3169 = vmatpush.bf16.msra.mxu0 %v3149
        %3170 = vmatpush.bf16.msra.mxu0 %v3148
        %3171 = vmatpush.bf16.msra.mxu0 %v3147
        %3172 = vmatpush.bf16.msra.mxu0 %v3146
        %3173 = vmatpush.bf16.msra.mxu0 %v3145
        %3174 = vmatpush.bf16.msra.mxu0 %v3144
        %3175 = vmatpush.bf16.msra.mxu0 %v3143
        %3176 = vmatpush.bf16.msra.mxu0 %v3142
        %3177 = vmatmul.bf16.gmra.mxu0 %v3062
        %v3178 = vpop.f32.mrf.mxu0
        %v3179 = vadd.f32 %v3092, %v3178
        %v3180 = vpop.f32.mrf.mxu0
        %v3181 = vadd.f32 %v3092, %v3180
        %3182 = vdwg.mxu0
        %3183 = vmatpush.bf16.msra.mxu0 0
        %3184 = vmatpush.bf16.msra.mxu0 0
        %3185 = vmatpush.bf16.msra.mxu0 0
        %3186 = vmatpush.bf16.msra.mxu0 0
        %3187 = vmatpush.bf16.msra.mxu0 %v3153
        %3188 = vmatpush.bf16.msra.mxu0 %v3152
        %3189 = vmatpush.bf16.msra.mxu0 %v3151
        %3190 = vmatpush.bf16.msra.mxu0 %v3150
        %3191 = vmatmul.bf16.gmra.mxu0 %v3167
        %v3192 = vpop.f32.mrf.mxu0
        %v3193 = vadd.f32 %v3179, %v3192
        %v3194 = vpop.f32.mrf.mxu0
        %v3195 = vadd.f32 %v3181, %v3194
        %3196 = vdwg.mxu0
        %v3197 = vmul.f32 %v3193, %v610
        %v3198 = vmul.f32 %v3195, %v611
        %v3199 = vadd.f32 %v2930, %v3197
        %v3200 = vadd.f32 %v2931, %v3198
        %s3201 = scalar_lea.vmem %s17, 1
        %v3202 = vld [vmem:[%s3201] sm:$0x1]
        %s3203 = scalar_lea.vmem %s18, 1
        %v3204 = vld [vmem:[%s3203] sm:$0x1]
        %v3205 = vsel %vm899, %v3199, 0.0
        %3206 = vadd.xlane.f32.xlu0 %v3205
        %v3207 = vpop.xlane.xlu0 %3206
        %v3208 = vsel %vm899, %v3200, 0.0
        %3209 = vadd.xlane.f32.xlu0 %v3208
        %v3210 = vpop.xlane.xlu0 %3209
        %v3211 = vmul.f32 %v3207, %v1696
        %v3212 = vmul.f32 %v3210, %v1696
        %v3213 = vsub.f32 %v3199, %v3211
        %v3214 = vsub.f32 %v3200, %v3212
        %v3215 = vmul.f32 %v3213, %v3213
        %v3216 = vmul.f32 %v3214, %v3214
        %v3217 = vsel %vm899, %v3215, 0.0
        %3218 = vadd.xlane.f32.xlu0 %v3217
        %v3219 = vpop.xlane.xlu0 %3218
        %v3220 = vsel %vm899, %v3216, 0.0
        %3221 = vadd.xlane.f32.xlu0 %v3220
        %v3222 = vpop.xlane.xlu0 %3221
        %v3223 = vmul.f32 %v3219, %v1696
        %v3224 = vmul.f32 %v3222, %v1696
        %v3225 = vadd.f32 %v3223, 1e-05
        %v3226 = vadd.f32 %v3224, 1e-05
        %v3227 = vrsqrt.pop %v3225
        %v3228 = vmul.f32 %v3227, %v3225
        %v3229 = vmul.f32 %v3228, %v3227
        %v3230 = vmul.f32 0.5, %v3229
        %v3231 = vsub.f32 1.5, %v3230
        %v3232 = vmul.f32 %v3227, %v3231
        %vm3233 = vweird.f32 %v3225
        %vm3234 = vweird.f32 %v3227
        %vm3235 = vmor %vm3233, %vm3234
        %v3236 = vsel %vm3235, %v3227, %v3232
        %v3237 = vrsqrt.pop %v3226
        %v3238 = vmul.f32 %v3237, %v3226
        %v3239 = vmul.f32 %v3238, %v3237
        %v3240 = vmul.f32 0.5, %v3239
        %v3241 = vsub.f32 1.5, %v3240
        %v3242 = vmul.f32 %v3237, %v3241
        %vm3243 = vweird.f32 %v3226
        %vm3244 = vweird.f32 %v3237
        %vm3245 = vmor %vm3243, %vm3244
        %v3246 = vsel %vm3245, %v3237, %v3242
        %v3247 = vmul.f32 %v3213, %v3236
        %v3248 = vmul.f32 %v3214, %v3246
        %v3250 = vperm.slane %v3202, 0
        %v3252 = vmul.f32 %v3247, %v3250
        %v3253 = vmul.f32 %v3248, %v3250
        %v3255 = vperm.slane %v3204, 0
        %v3257 = vadd.f32 %v3252, %v3255
        %v3258 = vadd.f32 %v3253, %v3255
        %v3259 = vmul.f32 %v3257, %v610
        %v3260 = vmul.f32 %v3258, %v611
        %v3261 = vpack.c.bf16 %v3260, %v3259
        %s3262 = scalar_lea.vmem %s5, 32
        %v3263 = vld [vmem:[%s3262] sm:$0xf]
        %v3264 = vld [vmem:[%s3262 + $0x4] sm:$0xf]
        %v3265 = vld [vmem:[%s3262 + $0x8] sm:$0xf]
        %v3266 = vld [vmem:[%s3262 + $0xc] sm:$0xf]
        %s3267 = scalar_lea.vmem %s6, 2
        %v3268 = vld [vmem:[%s3267] sm:$0x1]
        %v3270 = vperm.slane %v3268, 0
        %v3276 = vunpack.c.l.b16 %v3263
        %v3277 = vunpack.c.l.b16 %v3264
        %v3278 = vunpack.c.l.b16 %v3265
        %v3279 = vunpack.c.l.b16 %v3266
        %v3280 = vpack.c.b16 %v3277, %v3276
        %v3281 = vpack.c.b16 %v3279, %v3278
        %v3285 = vsel %vm899, %v3261, 0
        %3287 = vmatpush.bf16.msra.mxu0 0
        %3288 = vmatpush.bf16.msra.mxu0 0
        %3289 = vmatpush.bf16.msra.mxu0 0
        %3290 = vmatpush.bf16.msra.mxu0 0
        %3291 = vmatpush.bf16.msra.mxu0 0
        %3292 = vmatpush.bf16.msra.mxu0 0
        %3293 = vmatpush.bf16.msra.mxu0 %v3281
        %3294 = vmatpush.bf16.msra.mxu0 %v3280
        %3295 = vmatmul.bf16.gmra.mxu0 %v3285
        %v3296 = vpop.f32.mrf.mxu0
        %v3297 = vadd.f32 %v3270, %v3296
        %v3298 = vpop.f32.mrf.mxu0
        %v3299 = vadd.f32 %v3270, %v3298
        %3300 = vdwg.mxu0
        %v3301 = vmul.f32 %v3297, 0.25
        %v3302 = vmul.f32 %v3299, 0.25
        %v3303 = vpack.c.bf16 %v3301, %v3301
        %v3304 = vpack.c.bf16 %v3302, %v3302
        %v3305 = vpack.c.bf16 %v3297, %v3297
        %v3306 = vpack.c.bf16 %v3299, %v3299
        %s3307 = scalar_lea.vmem %s9, 32
        %v3308 = vld [vmem:[%s3307] sm:$0xf]
        %v3309 = vld [vmem:[%s3307 + $0x4] sm:$0xf]
        %v3310 = vld [vmem:[%s3307 + $0x8] sm:$0xf]
        %v3311 = vld [vmem:[%s3307 + $0xc] sm:$0xf]
        %v3314 = vunpack.c.l.b16 %v3303
        %v3315 = vunpack.c.l.b16 %v3304
        %v3316 = vpack.c.b16 %v3315, %v3314
        %v3321 = vunpack.c.l.b16 %v3308
        %v3322 = vunpack.c.l.b16 %v3309
        %v3323 = vunpack.c.l.b16 %v3310
        %v3324 = vunpack.c.l.b16 %v3311
        %v3325 = vpack.c.b16 %v3322, %v3321
        %v3326 = vpack.c.b16 %v3324, %v3323
        %v3330 = vsel %vm899, %v3316, 0
        %3332 = vmatpush.bf16.msra.mxu0 0
        %3333 = vmatpush.bf16.msra.mxu0 0
        %3334 = vmatpush.bf16.msra.mxu0 0
        %3335 = vmatpush.bf16.msra.mxu0 0
        %3336 = vmatpush.bf16.msra.mxu0 0
        %3337 = vmatpush.bf16.msra.mxu0 0
        %3338 = vmatpush.bf16.msra.mxu0 %v3326
        %3339 = vmatpush.bf16.msra.mxu0 %v3325
        %3340 = vmatmul.bf16.gmra.mxu0 %v3330
        %v3341 = vpop.f32.mrf.mxu0
        %v3342 = vadd.f32 0.0, %v3341
        %v3343 = vpop.f32.mrf.mxu0
        %v3344 = vadd.f32 0.0, %v3343
        %3345 = vdwg.mxu0
        %3347 = vset.pattern.permute.xlu0 0
        %3348 = vperm.xlu0 %3347, %v3342
        %v3349 = vpop.permute.xlu0 %3348
        %3352 = vset.pattern.permute.xlu0 0
        %3353 = vperm.xlu0 %3352, %v3344
        %v3354 = vpop.permute.xlu0 %3353
        %v3356 = vmul.f32 %v3349, %v631
        %v3357 = vmul.f32 %v3354, %v632
        %v3360 = vunpack.c.l.b16 %v3305
        %v3361 = vunpack.c.l.b16 %v3306
        %v3362 = vpack.c.b16 %v3361, %v3360
        %3363 = vrot.lane.b32.xlu0 %v3362, 96
        %v3364 = vpop.permute.xlu0 %3363
        %v3365 = vsel %vm980, %v3316, 0
        %v3368 = vsel %vm980, %v3364, 0
        %3370 = vmatpush.bf16.xpose.msra.mxu0 0
        %3371 = vmatpush.bf16.xpose.msra.mxu0 0
        %3372 = vmatpush.bf16.xpose.msra.mxu0 0
        %3373 = vmatpush.bf16.xpose.msra.mxu0 0
        %3374 = vmatpush.bf16.xpose.msra.mxu0 0
        %3375 = vmatpush.bf16.xpose.msra.mxu0 0
        %3376 = vmatpush.bf16.xpose.msra.mxu0 0
        %3377 = vmatpush.bf16.xpose.msra.mxu0 %v3368
        %3378 = vmatmul.bf16.gmra.mxu0 %v3365
        %v3379 = vpop.f32.mrf.mxu0
        %v3380 = vadd.f32 %v3356, %v3379
        %v3381 = vpop.f32.mrf.mxu0
        %v3382 = vadd.f32 %v3357, %v3381
        %3383 = vdwg.mxu0
        %3384 = vset.pattern.permute.xlu0 1
        %3385 = vperm.xlu0 %3384, %v3342
        %v3386 = vpop.permute.xlu0 %3385
        %3388 = vset.pattern.permute.xlu0 1
        %3389 = vperm.xlu0 %3388, %v3344
        %v3390 = vpop.permute.xlu0 %3389
        %v3392 = vmul.f32 %v3386, %v637
        %v3393 = vmul.f32 %v3390, %v638
        %v3394 = vadd.f32 %v3380, %v3392
        %v3395 = vadd.f32 %v3382, %v3393
        %3396 = vset.pattern.permute.xlu0 2
        %3397 = vperm.xlu0 %3396, %v3342
        %v3398 = vpop.permute.xlu0 %3397
        %3400 = vset.pattern.permute.xlu0 2
        %3401 = vperm.xlu0 %3400, %v3344
        %v3402 = vpop.permute.xlu0 %3401
        %v3404 = vmul.f32 %v3398, %v643
        %v3405 = vmul.f32 %v3402, %v644
        %v3406 = vadd.f32 %v3394, %v3404
        %v3407 = vadd.f32 %v3395, %v3405
        %3408 = vset.pattern.permute.xlu0 3
        %3409 = vperm.xlu0 %3408, %v3342
        %v3410 = vpop.permute.xlu0 %3409
        %3412 = vset.pattern.permute.xlu0 3
        %3413 = vperm.xlu0 %3412, %v3344
        %v3414 = vpop.permute.xlu0 %3413
        %v3416 = vmul.f32 %v3410, %v649
        %v3417 = vmul.f32 %v3414, %v650
        %v3418 = vadd.f32 %v3406, %v3416
        %v3419 = vadd.f32 %v3407, %v3417
        %3420 = vset.pattern.permute.xlu0 4
        %3421 = vperm.xlu0 %3420, %v3342
        %v3422 = vpop.permute.xlu0 %3421
        %3424 = vset.pattern.permute.xlu0 4
        %3425 = vperm.xlu0 %3424, %v3344
        %v3426 = vpop.permute.xlu0 %3425
        %v3428 = vmul.f32 %v3422, %v655
        %v3429 = vmul.f32 %v3426, %v656
        %v3430 = vadd.f32 %v3418, %v3428
        %v3431 = vadd.f32 %v3419, %v3429
        %3432 = vset.pattern.permute.xlu0 5
        %3433 = vperm.xlu0 %3432, %v3342
        %v3434 = vpop.permute.xlu0 %3433
        %3436 = vset.pattern.permute.xlu0 5
        %3437 = vperm.xlu0 %3436, %v3344
        %v3438 = vpop.permute.xlu0 %3437
        %v3440 = vmul.f32 %v3434, %v661
        %v3441 = vmul.f32 %v3438, %v662
        %v3442 = vadd.f32 %v3430, %v3440
        %v3443 = vadd.f32 %v3431, %v3441
        %3444 = vset.pattern.permute.xlu0 6
        %3445 = vperm.xlu0 %3444, %v3342
        %v3446 = vpop.permute.xlu0 %3445
        %3448 = vset.pattern.permute.xlu0 6
        %3449 = vperm.xlu0 %3448, %v3344
        %v3450 = vpop.permute.xlu0 %3449
        %v3452 = vmul.f32 %v3446, %v667
        %v3453 = vmul.f32 %v3450, %v668
        %v3454 = vadd.f32 %v3442, %v3452
        %v3455 = vadd.f32 %v3443, %v3453
        %3456 = vset.pattern.permute.xlu0 7
        %3457 = vperm.xlu0 %3456, %v3342
        %v3458 = vpop.permute.xlu0 %3457
        %3460 = vset.pattern.permute.xlu0 7
        %3461 = vperm.xlu0 %3460, %v3344
        %v3462 = vpop.permute.xlu0 %3461
        %v3464 = vmul.f32 %v3458, %v673
        %v3465 = vmul.f32 %v3462, %v674
        %v3466 = vadd.f32 %v3454, %v3464
        %v3467 = vadd.f32 %v3455, %v3465
        %3468 = vset.pattern.permute.xlu0 8
        %3469 = vperm.xlu0 %3468, %v3342
        %v3470 = vpop.permute.xlu0 %3469
        %3472 = vset.pattern.permute.xlu0 8
        %3473 = vperm.xlu0 %3472, %v3344
        %v3474 = vpop.permute.xlu0 %3473
        %v3476 = vmul.f32 %v3470, %v679
        %v3477 = vmul.f32 %v3474, %v680
        %v3478 = vadd.f32 %v3466, %v3476
        %v3479 = vadd.f32 %v3467, %v3477
        %v3480 = vadd.f32 %v3478, %v621
        %v3481 = vadd.f32 %v3479, %v622
        %v3482 = vsel %vm980, %v3480, -inf
        %3483 = vmax.xlane.f32.xlu0 %v3482
        %v3484 = vpop.xlane.xlu0 %3483
        %v3485 = vsel %vm980, %v3481, -inf
        %3486 = vmax.xlane.f32.xlu0 %v3485
        %v3487 = vpop.xlane.xlu0 %3486
        %v3488 = vsub.f32 %v3480, %v3484
        %v3489 = vsub.f32 %v3481, %v3487
        %v3490 = vmul.f32 %v3488, 1.442695
        %v3491 = vpow.pop %v3490
        %v3492 = vmul.f32 %v3489, 1.442695
        %v3493 = vpow.pop %v3492
        %v3494 = vsel %vm980, %v3491, 0.0
        %3495 = vadd.xlane.f32.xlu0 %v3494
        %v3496 = vpop.xlane.xlu0 %3495
        %v3497 = vsel %vm980, %v3493, 0.0
        %3498 = vadd.xlane.f32.xlu0 %v3497
        %v3499 = vpop.xlane.xlu0 %3498
        %v3500 = vrcp.pop %v3496
        %v3501 = vmul.f32 %v3496, %v3500
        %v3502 = vsub.f32 1.0, %v3501
        %v3503 = vmul.f32 %v3500, %v3502
        %v3504 = vadd.f32 %v3500, %v3503
        %vm3505 = vweird.f32 %v3496
        %vm3506 = vweird.f32 %v3500
        %vm3507 = vmor %vm3505, %vm3506
        %v3508 = vsel %vm3507, %v3500, %v3504
        %v3509 = vand.u32 2147483647, %v3496
        %vm3510 = vcmp.eq.f32.partialorder %v3509, 8.507059e+37
        %v3511 = vand.u32 %v3496, 2147483648
        %v3512 = vor.u32 1.1754944e-38, %v3511
        %v3513 = vsel %vm3510, %v3512, %v3508
        %v3514 = vmul.f32 %v3491, %v3513
        %v3515 = vrcp.pop %v3499
        %v3516 = vmul.f32 %v3499, %v3515
        %v3517 = vsub.f32 1.0, %v3516
        %v3518 = vmul.f32 %v3515, %v3517
        %v3519 = vadd.f32 %v3515, %v3518
        %vm3520 = vweird.f32 %v3499
        %vm3521 = vweird.f32 %v3515
        %vm3522 = vmor %vm3520, %vm3521
        %v3523 = vsel %vm3522, %v3515, %v3519
        %v3524 = vand.u32 2147483647, %v3499
        %vm3525 = vcmp.eq.f32.partialorder %v3524, 8.507059e+37
        %v3526 = vand.u32 %v3499, 2147483648
        %v3527 = vor.u32 1.1754944e-38, %v3526
        %v3528 = vsel %vm3525, %v3527, %v3523
        %v3529 = vmul.f32 %v3493, %v3528
        %v3530 = vpack.c.bf16 %v3529, %v3514
        %3531 = vrot.lane.b32.xlu0 %v3362, 64
        %v3532 = vpop.permute.xlu0 %3531
        %v3535 = vsel %vm980, %v3530, 0
        %3537 = vmatpush.bf16.msra.mxu0 0
        %3538 = vmatpush.bf16.msra.mxu0 0
        %3539 = vmatpush.bf16.msra.mxu0 0
        %3540 = vmatpush.bf16.msra.mxu0 0
        %3541 = vmatpush.bf16.msra.mxu0 0
        %3542 = vmatpush.bf16.msra.mxu0 0
        %3543 = vmatpush.bf16.msra.mxu0 0
        %3544 = vmatpush.bf16.msra.mxu0 %v3532
        %3545 = vmatmul.bf16.gmra.mxu0 %v3535
        %v3546 = vpop.f32.mrf.mxu0
        %v3547 = vadd.f32 0.0, %v3546
        %v3548 = vpop.f32.mrf.mxu0
        %v3549 = vadd.f32 0.0, %v3548
        %3550 = vdwg.mxu0
        %v3551 = vmul.f32 %v3514, %v631
        %v3552 = vmul.f32 %v3529, %v632
        %v3553 = vsel %vm980, %v3551, 0.0
        %3554 = vadd.xlane.f32.xlu0 %v3553
        %v3555 = vpop.xlane.xlu0 %3554
        %v3556 = vsel %vm980, %v3552, 0.0
        %3557 = vadd.xlane.f32.xlu0 %v3556
        %v3558 = vpop.xlane.xlu0 %3557
        %v3559 = vmul.f32 %v3555, %v683
        %v3560 = vmul.f32 %v3558, %v683
        %v3561 = vadd.f32 %v3559, 0.0
        %v3562 = vadd.f32 %v3560, 0.0
        %v3563 = vmul.f32 %v3514, %v637
        %v3564 = vmul.f32 %v3529, %v638
        %v3565 = vsel %vm980, %v3563, 0.0
        %3566 = vadd.xlane.f32.xlu0 %v3565
        %v3567 = vpop.xlane.xlu0 %3566
        %v3568 = vsel %vm980, %v3564, 0.0
        %3569 = vadd.xlane.f32.xlu0 %v3568
        %v3570 = vpop.xlane.xlu0 %3569
        %v3571 = vmul.f32 %v3567, %v686
        %v3572 = vmul.f32 %v3570, %v686
        %v3573 = vadd.f32 %v3561, %v3571
        %v3574 = vadd.f32 %v3562, %v3572
        %v3575 = vmul.f32 %v3514, %v643
        %v3576 = vmul.f32 %v3529, %v644
        %v3577 = vsel %vm980, %v3575, 0.0
        %3578 = vadd.xlane.f32.xlu0 %v3577
        %v3579 = vpop.xlane.xlu0 %3578
        %v3580 = vsel %vm980, %v3576, 0.0
        %3581 = vadd.xlane.f32.xlu0 %v3580
        %v3582 = vpop.xlane.xlu0 %3581
        %v3583 = vmul.f32 %v3579, %v689
        %v3584 = vmul.f32 %v3582, %v689
        %v3585 = vadd.f32 %v3573, %v3583
        %v3586 = vadd.f32 %v3574, %v3584
        %v3587 = vmul.f32 %v3514, %v649
        %v3588 = vmul.f32 %v3529, %v650
        %v3589 = vsel %vm980, %v3587, 0.0
        %3590 = vadd.xlane.f32.xlu0 %v3589
        %v3591 = vpop.xlane.xlu0 %3590
        %v3592 = vsel %vm980, %v3588, 0.0
        %3593 = vadd.xlane.f32.xlu0 %v3592
        %v3594 = vpop.xlane.xlu0 %3593
        %v3595 = vmul.f32 %v3591, %v692
        %v3596 = vmul.f32 %v3594, %v692
        %v3597 = vadd.f32 %v3585, %v3595
        %v3598 = vadd.f32 %v3586, %v3596
        %v3599 = vmul.f32 %v3514, %v655
        %v3600 = vmul.f32 %v3529, %v656
        %v3601 = vsel %vm980, %v3599, 0.0
        %3602 = vadd.xlane.f32.xlu0 %v3601
        %v3603 = vpop.xlane.xlu0 %3602
        %v3604 = vsel %vm980, %v3600, 0.0
        %3605 = vadd.xlane.f32.xlu0 %v3604
        %v3606 = vpop.xlane.xlu0 %3605
        %v3607 = vmul.f32 %v3603, %v695
        %v3608 = vmul.f32 %v3606, %v695
        %v3609 = vadd.f32 %v3597, %v3607
        %v3610 = vadd.f32 %v3598, %v3608
        %v3611 = vmul.f32 %v3514, %v661
        %v3612 = vmul.f32 %v3529, %v662
        %v3613 = vsel %vm980, %v3611, 0.0
        %3614 = vadd.xlane.f32.xlu0 %v3613
        %v3615 = vpop.xlane.xlu0 %3614
        %v3616 = vsel %vm980, %v3612, 0.0
        %3617 = vadd.xlane.f32.xlu0 %v3616
        %v3618 = vpop.xlane.xlu0 %3617
        %v3619 = vmul.f32 %v3615, %v698
        %v3620 = vmul.f32 %v3618, %v698
        %v3621 = vadd.f32 %v3609, %v3619
        %v3622 = vadd.f32 %v3610, %v3620
        %v3623 = vmul.f32 %v3514, %v667
        %v3624 = vmul.f32 %v3529, %v668
        %v3625 = vsel %vm980, %v3623, 0.0
        %3626 = vadd.xlane.f32.xlu0 %v3625
        %v3627 = vpop.xlane.xlu0 %3626
        %v3628 = vsel %vm980, %v3624, 0.0
        %3629 = vadd.xlane.f32.xlu0 %v3628
        %v3630 = vpop.xlane.xlu0 %3629
        %v3631 = vmul.f32 %v3627, %v701
        %v3632 = vmul.f32 %v3630, %v701
        %v3633 = vadd.f32 %v3621, %v3631
        %v3634 = vadd.f32 %v3622, %v3632
        %v3635 = vmul.f32 %v3514, %v673
        %v3636 = vmul.f32 %v3529, %v674
        %v3637 = vsel %vm980, %v3635, 0.0
        %3638 = vadd.xlane.f32.xlu0 %v3637
        %v3639 = vpop.xlane.xlu0 %3638
        %v3640 = vsel %vm980, %v3636, 0.0
        %3641 = vadd.xlane.f32.xlu0 %v3640
        %v3642 = vpop.xlane.xlu0 %3641
        %v3643 = vmul.f32 %v3639, %v704
        %v3644 = vmul.f32 %v3642, %v704
        %v3645 = vadd.f32 %v3633, %v3643
        %v3646 = vadd.f32 %v3634, %v3644
        %v3647 = vmul.f32 %v3514, %v679
        %v3648 = vmul.f32 %v3529, %v680
        %v3649 = vsel %vm980, %v3647, 0.0
        %3650 = vadd.xlane.f32.xlu0 %v3649
        %v3651 = vpop.xlane.xlu0 %3650
        %v3652 = vsel %vm980, %v3648, 0.0
        %3653 = vadd.xlane.f32.xlu0 %v3652
        %v3654 = vpop.xlane.xlu0 %3653
        %v3655 = vmul.f32 %v3651, %v707
        %v3656 = vmul.f32 %v3654, %v707
        %v3657 = vadd.f32 %v3645, %v3655
        %v3658 = vadd.f32 %v3646, %v3656
        %3659 = vset.pattern.permute.xlu0 9
        %3660 = vperm.xlu0 %3659, %v3342
        %v3661 = vpop.permute.xlu0 %3660
        %3663 = vset.pattern.permute.xlu0 9
        %3664 = vperm.xlu0 %3663, %v3344
        %v3665 = vpop.permute.xlu0 %3664
        %v3667 = vmul.f32 %v3661, %v631
        %v3668 = vmul.f32 %v3665, %v632
        %3669 = vrot.lane.b32.xlu0 %v3316, 112
        %v3670 = vpop.permute.xlu0 %3669
        %3671 = vrot.lane.b32.xlu0 %v3362, 80
        %v3672 = vpop.permute.xlu0 %3671
        %v3674 = vsel %vm980, %v3670, 0
        %v3677 = vsel %vm980, %v3672, 0
        %3679 = vmatpush.bf16.xpose.msra.mxu0 0
        %3680 = vmatpush.bf16.xpose.msra.mxu0 0
        %3681 = vmatpush.bf16.xpose.msra.mxu0 0
        %3682 = vmatpush.bf16.xpose.msra.mxu0 0
        %3683 = vmatpush.bf16.xpose.msra.mxu0 0
        %3684 = vmatpush.bf16.xpose.msra.mxu0 0
        %3685 = vmatpush.bf16.xpose.msra.mxu0 0
        %3686 = vmatpush.bf16.xpose.msra.mxu0 %v3677
        %3687 = vmatmul.bf16.gmra.mxu0 %v3674
        %v3688 = vpop.f32.mrf.mxu0
        %v3689 = vadd.f32 %v3667, %v3688
        %v3690 = vpop.f32.mrf.mxu0
        %v3691 = vadd.f32 %v3668, %v3690
        %3692 = vdwg.mxu0
        %3693 = vset.pattern.permute.xlu0 10
        %3694 = vperm.xlu0 %3693, %v3342
        %v3695 = vpop.permute.xlu0 %3694
        %3697 = vset.pattern.permute.xlu0 10
        %3698 = vperm.xlu0 %3697, %v3344
        %v3699 = vpop.permute.xlu0 %3698
        %v3701 = vmul.f32 %v3695, %v637
        %v3702 = vmul.f32 %v3699, %v638
        %v3703 = vadd.f32 %v3689, %v3701
        %v3704 = vadd.f32 %v3691, %v3702
        %3705 = vset.pattern.permute.xlu0 11
        %3706 = vperm.xlu0 %3705, %v3342
        %v3707 = vpop.permute.xlu0 %3706
        %3709 = vset.pattern.permute.xlu0 11
        %3710 = vperm.xlu0 %3709, %v3344
        %v3711 = vpop.permute.xlu0 %3710
        %v3713 = vmul.f32 %v3707, %v643
        %v3714 = vmul.f32 %v3711, %v644
        %v3715 = vadd.f32 %v3703, %v3713
        %v3716 = vadd.f32 %v3704, %v3714
        %3717 = vset.pattern.permute.xlu0 12
        %3718 = vperm.xlu0 %3717, %v3342
        %v3719 = vpop.permute.xlu0 %3718
        %3721 = vset.pattern.permute.xlu0 12
        %3722 = vperm.xlu0 %3721, %v3344
        %v3723 = vpop.permute.xlu0 %3722
        %v3725 = vmul.f32 %v3719, %v649
        %v3726 = vmul.f32 %v3723, %v650
        %v3727 = vadd.f32 %v3715, %v3725
        %v3728 = vadd.f32 %v3716, %v3726
        %3729 = vset.pattern.permute.xlu0 13
        %3730 = vperm.xlu0 %3729, %v3342
        %v3731 = vpop.permute.xlu0 %3730
        %3733 = vset.pattern.permute.xlu0 13
        %3734 = vperm.xlu0 %3733, %v3344
        %v3735 = vpop.permute.xlu0 %3734
        %v3737 = vmul.f32 %v3731, %v655
        %v3738 = vmul.f32 %v3735, %v656
        %v3739 = vadd.f32 %v3727, %v3737
        %v3740 = vadd.f32 %v3728, %v3738
        %3741 = vset.pattern.permute.xlu0 14
        %3742 = vperm.xlu0 %3741, %v3342
        %v3743 = vpop.permute.xlu0 %3742
        %3745 = vset.pattern.permute.xlu0 14
        %3746 = vperm.xlu0 %3745, %v3344
        %v3747 = vpop.permute.xlu0 %3746
        %v3749 = vmul.f32 %v3743, %v661
        %v3750 = vmul.f32 %v3747, %v662
        %v3751 = vadd.f32 %v3739, %v3749
        %v3752 = vadd.f32 %v3740, %v3750
        %3753 = vset.pattern.permute.xlu0 15
        %3754 = vperm.xlu0 %3753, %v3342
        %v3755 = vpop.permute.xlu0 %3754
        %3757 = vset.pattern.permute.xlu0 15
        %3758 = vperm.xlu0 %3757, %v3344
        %v3759 = vpop.permute.xlu0 %3758
        %v3761 = vmul.f32 %v3755, %v667
        %v3762 = vmul.f32 %v3759, %v668
        %v3763 = vadd.f32 %v3751, %v3761
        %v3764 = vadd.f32 %v3752, %v3762
        %3765 = vset.pattern.permute.xlu0 16
        %3766 = vperm.xlu0 %3765, %v3342
        %v3767 = vpop.permute.xlu0 %3766
        %3769 = vset.pattern.permute.xlu0 16
        %3770 = vperm.xlu0 %3769, %v3344
        %v3771 = vpop.permute.xlu0 %3770
        %v3773 = vmul.f32 %v3767, %v673
        %v3774 = vmul.f32 %v3771, %v674
        %v3775 = vadd.f32 %v3763, %v3773
        %v3776 = vadd.f32 %v3764, %v3774
        %3777 = vset.pattern.permute.xlu0 17
        %3778 = vperm.xlu0 %3777, %v3342
        %v3779 = vpop.permute.xlu0 %3778
        %3781 = vset.pattern.permute.xlu0 17
        %3782 = vperm.xlu0 %3781, %v3344
        %v3783 = vpop.permute.xlu0 %3782
        %v3785 = vmul.f32 %v3779, %v679
        %v3786 = vmul.f32 %v3783, %v680
        %v3787 = vadd.f32 %v3775, %v3785
        %v3788 = vadd.f32 %v3776, %v3786
        %v3789 = vadd.f32 %v3787, %v621
        %v3790 = vadd.f32 %v3788, %v622
        %v3791 = vsel %vm980, %v3789, -inf
        %3792 = vmax.xlane.f32.xlu0 %v3791
        %v3793 = vpop.xlane.xlu0 %3792
        %v3794 = vsel %vm980, %v3790, -inf
        %3795 = vmax.xlane.f32.xlu0 %v3794
        %v3796 = vpop.xlane.xlu0 %3795
        %v3797 = vsub.f32 %v3789, %v3793
        %v3798 = vsub.f32 %v3790, %v3796
        %v3799 = vmul.f32 %v3797, 1.442695
        %v3800 = vpow.pop %v3799
        %v3801 = vmul.f32 %v3798, 1.442695
        %v3802 = vpow.pop %v3801
        %v3803 = vsel %vm980, %v3800, 0.0
        %3804 = vadd.xlane.f32.xlu0 %v3803
        %v3805 = vpop.xlane.xlu0 %3804
        %v3806 = vsel %vm980, %v3802, 0.0
        %3807 = vadd.xlane.f32.xlu0 %v3806
        %v3808 = vpop.xlane.xlu0 %3807
        %v3809 = vrcp.pop %v3805
        %v3810 = vmul.f32 %v3805, %v3809
        %v3811 = vsub.f32 1.0, %v3810
        %v3812 = vmul.f32 %v3809, %v3811
        %v3813 = vadd.f32 %v3809, %v3812
        %vm3814 = vweird.f32 %v3805
        %vm3815 = vweird.f32 %v3809
        %vm3816 = vmor %vm3814, %vm3815
        %v3817 = vsel %vm3816, %v3809, %v3813
        %v3818 = vand.u32 2147483647, %v3805
        %vm3819 = vcmp.eq.f32.partialorder %v3818, 8.507059e+37
        %v3820 = vand.u32 %v3805, 2147483648
        %v3821 = vor.u32 1.1754944e-38, %v3820
        %v3822 = vsel %vm3819, %v3821, %v3817
        %v3823 = vmul.f32 %v3800, %v3822
        %v3824 = vrcp.pop %v3808
        %v3825 = vmul.f32 %v3808, %v3824
        %v3826 = vsub.f32 1.0, %v3825
        %v3827 = vmul.f32 %v3824, %v3826
        %v3828 = vadd.f32 %v3824, %v3827
        %vm3829 = vweird.f32 %v3808
        %vm3830 = vweird.f32 %v3824
        %vm3831 = vmor %vm3829, %vm3830
        %v3832 = vsel %vm3831, %v3824, %v3828
        %v3833 = vand.u32 2147483647, %v3808
        %vm3834 = vcmp.eq.f32.partialorder %v3833, 8.507059e+37
        %v3835 = vand.u32 %v3808, 2147483648
        %v3836 = vor.u32 1.1754944e-38, %v3835
        %v3837 = vsel %vm3834, %v3836, %v3832
        %v3838 = vmul.f32 %v3802, %v3837
        %v3839 = vpack.c.bf16 %v3838, %v3823
        %3840 = vrot.lane.b32.xlu0 %v3362, 48
        %v3841 = vpop.permute.xlu0 %3840
        %v3844 = vsel %vm980, %v3839, 0
        %3846 = vmatpush.bf16.msra.mxu0 0
        %3847 = vmatpush.bf16.msra.mxu0 0
        %3848 = vmatpush.bf16.msra.mxu0 0
        %3849 = vmatpush.bf16.msra.mxu0 0
        %3850 = vmatpush.bf16.msra.mxu0 0
        %3851 = vmatpush.bf16.msra.mxu0 0
        %3852 = vmatpush.bf16.msra.mxu0 0
        %3853 = vmatpush.bf16.msra.mxu0 %v3841
        %3854 = vmatmul.bf16.gmra.mxu0 %v3844
        %v3855 = vpop.f32.mrf.mxu0
        %v3856 = vadd.f32 0.0, %v3855
        %v3857 = vpop.f32.mrf.mxu0
        %v3858 = vadd.f32 0.0, %v3857
        %3859 = vdwg.mxu0
        %v3860 = vmul.f32 %v3823, %v631
        %v3861 = vmul.f32 %v3838, %v632
        %v3862 = vsel %vm980, %v3860, 0.0
        %3863 = vadd.xlane.f32.xlu0 %v3862
        %v3864 = vpop.xlane.xlu0 %3863
        %v3865 = vsel %vm980, %v3861, 0.0
        %3866 = vadd.xlane.f32.xlu0 %v3865
        %v3867 = vpop.xlane.xlu0 %3866
        %v3868 = vmul.f32 %v3864, %v683
        %v3869 = vmul.f32 %v3867, %v683
        %v3870 = vadd.f32 %v3868, 0.0
        %v3871 = vadd.f32 %v3869, 0.0
        %v3872 = vmul.f32 %v3823, %v637
        %v3873 = vmul.f32 %v3838, %v638
        %v3874 = vsel %vm980, %v3872, 0.0
        %3875 = vadd.xlane.f32.xlu0 %v3874
        %v3876 = vpop.xlane.xlu0 %3875
        %v3877 = vsel %vm980, %v3873, 0.0
        %3878 = vadd.xlane.f32.xlu0 %v3877
        %v3879 = vpop.xlane.xlu0 %3878
        %v3880 = vmul.f32 %v3876, %v686
        %v3881 = vmul.f32 %v3879, %v686
        %v3882 = vadd.f32 %v3870, %v3880
        %v3883 = vadd.f32 %v3871, %v3881
        %v3884 = vmul.f32 %v3823, %v643
        %v3885 = vmul.f32 %v3838, %v644
        %v3886 = vsel %vm980, %v3884, 0.0
        %3887 = vadd.xlane.f32.xlu0 %v3886
        %v3888 = vpop.xlane.xlu0 %3887
        %v3889 = vsel %vm980, %v3885, 0.0
        %3890 = vadd.xlane.f32.xlu0 %v3889
        %v3891 = vpop.xlane.xlu0 %3890
        %v3892 = vmul.f32 %v3888, %v689
        %v3893 = vmul.f32 %v3891, %v689
        %v3894 = vadd.f32 %v3882, %v3892
        %v3895 = vadd.f32 %v3883, %v3893
        %v3896 = vmul.f32 %v3823, %v649
        %v3897 = vmul.f32 %v3838, %v650
        %v3898 = vsel %vm980, %v3896, 0.0
        %3899 = vadd.xlane.f32.xlu0 %v3898
        %v3900 = vpop.xlane.xlu0 %3899
        %v3901 = vsel %vm980, %v3897, 0.0
        %3902 = vadd.xlane.f32.xlu0 %v3901
        %v3903 = vpop.xlane.xlu0 %3902
        %v3904 = vmul.f32 %v3900, %v692
        %v3905 = vmul.f32 %v3903, %v692
        %v3906 = vadd.f32 %v3894, %v3904
        %v3907 = vadd.f32 %v3895, %v3905
        %v3908 = vmul.f32 %v3823, %v655
        %v3909 = vmul.f32 %v3838, %v656
        %v3910 = vsel %vm980, %v3908, 0.0
        %3911 = vadd.xlane.f32.xlu0 %v3910
        %v3912 = vpop.xlane.xlu0 %3911
        %v3913 = vsel %vm980, %v3909, 0.0
        %3914 = vadd.xlane.f32.xlu0 %v3913
        %v3915 = vpop.xlane.xlu0 %3914
        %v3916 = vmul.f32 %v3912, %v695
        %v3917 = vmul.f32 %v3915, %v695
        %v3918 = vadd.f32 %v3906, %v3916
        %v3919 = vadd.f32 %v3907, %v3917
        %v3920 = vmul.f32 %v3823, %v661
        %v3921 = vmul.f32 %v3838, %v662
        %v3922 = vsel %vm980, %v3920, 0.0
        %3923 = vadd.xlane.f32.xlu0 %v3922
        %v3924 = vpop.xlane.xlu0 %3923
        %v3925 = vsel %vm980, %v3921, 0.0
        %3926 = vadd.xlane.f32.xlu0 %v3925
        %v3927 = vpop.xlane.xlu0 %3926
        %v3928 = vmul.f32 %v3924, %v698
        %v3929 = vmul.f32 %v3927, %v698
        %v3930 = vadd.f32 %v3918, %v3928
        %v3931 = vadd.f32 %v3919, %v3929
        %v3932 = vmul.f32 %v3823, %v667
        %v3933 = vmul.f32 %v3838, %v668
        %v3934 = vsel %vm980, %v3932, 0.0
        %3935 = vadd.xlane.f32.xlu0 %v3934
        %v3936 = vpop.xlane.xlu0 %3935
        %v3937 = vsel %vm980, %v3933, 0.0
        %3938 = vadd.xlane.f32.xlu0 %v3937
        %v3939 = vpop.xlane.xlu0 %3938
        %v3940 = vmul.f32 %v3936, %v701
        %v3941 = vmul.f32 %v3939, %v701
        %v3942 = vadd.f32 %v3930, %v3940
        %v3943 = vadd.f32 %v3931, %v3941
        %v3944 = vmul.f32 %v3823, %v673
        %v3945 = vmul.f32 %v3838, %v674
        %v3946 = vsel %vm980, %v3944, 0.0
        %3947 = vadd.xlane.f32.xlu0 %v3946
        %v3948 = vpop.xlane.xlu0 %3947
        %v3949 = vsel %vm980, %v3945, 0.0
        %3950 = vadd.xlane.f32.xlu0 %v3949
        %v3951 = vpop.xlane.xlu0 %3950
        %v3952 = vmul.f32 %v3948, %v704
        %v3953 = vmul.f32 %v3951, %v704
        %v3954 = vadd.f32 %v3942, %v3952
        %v3955 = vadd.f32 %v3943, %v3953
        %v3956 = vmul.f32 %v3823, %v679
        %v3957 = vmul.f32 %v3838, %v680
        %v3958 = vsel %vm980, %v3956, 0.0
        %3959 = vadd.xlane.f32.xlu0 %v3958
        %v3960 = vpop.xlane.xlu0 %3959
        %v3961 = vsel %vm980, %v3957, 0.0
        %3962 = vadd.xlane.f32.xlu0 %v3961
        %v3963 = vpop.xlane.xlu0 %3962
        %v3964 = vmul.f32 %v3960, %v707
        %v3965 = vmul.f32 %v3963, %v707
        %v3966 = vadd.f32 %v3954, %v3964
        %v3967 = vadd.f32 %v3955, %v3965
        %3970 = vrot.lane.b32.xlu0 %v3856, 16
        %v3971 = vpop.permute.xlu0 %3970
        %3972 = vrot.lane.b32.xlu0 %v3858, 16
        %v3973 = vpop.permute.xlu0 %3972
        %v3976 = vsel %vm980, %v3547, %v3971
        %v3977 = vsel %vm980, %v3549, %v3973
        %3980 = vrot.lane.b32.xlu0 %v3966, 9
        %v3981 = vpop.permute.xlu0 %3980
        %3982 = vrot.lane.b32.xlu0 %v3967, 9
        %v3983 = vpop.permute.xlu0 %3982
        %v3986 = vsel %vm1602, %v3657, %v3981
        %v3987 = vsel %vm1602, %v3658, %v3983
        %v3988 = vpack.c.bf16 %v3987, %v3986
        %s3989 = scalar_lea.vmem %s10, 24
        %v3990 = vld [vmem:[%s3989] sm:$0xf]
        %v3991 = vld [vmem:[%s3989 + $0x4] sm:$0xf]
        %v3992 = vld [vmem:[%s3989 + $0x8] sm:$0x1]
        %v3996 = vunpack.c.l.b16 %v3990
        %v3997 = vunpack.c.l.b16 %v3991
        %v3998 = vunpack.c.l.b16 %v3992
        %v3999 = vpack.c.b16 %v3997, %v3996
        %v4000 = vpack.c.b16 %v3998, %v3998
        %v4003 = vsel %vm1618, %v3988, 0
        %v4006 = vsel %vm1622, %v4000, 0
        %4008 = vmatpush.bf16.msra.mxu0 0
        %4009 = vmatpush.bf16.msra.mxu0 0
        %4010 = vmatpush.bf16.msra.mxu0 0
        %4011 = vmatpush.bf16.msra.mxu0 0
        %4012 = vmatpush.bf16.msra.mxu0 0
        %4013 = vmatpush.bf16.msra.mxu0 0
        %4014 = vmatpush.bf16.msra.mxu0 %v4006
        %4015 = vmatpush.bf16.msra.mxu0 %v3999
        %4016 = vmatmul.bf16.gmra.mxu0 %v4003
        %v4017 = vpop.f32.mrf.mxu0
        %v4018 = vadd.f32 0.0, %v4017
        %v4019 = vpop.f32.mrf.mxu0
        %v4020 = vadd.f32 0.0, %v4019
        %4021 = vdwg.mxu0
        %v4022 = vadd.f32 %v3976, %v4018
        %v4023 = vadd.f32 %v3977, %v4020
        %v4024 = vpack.c.bf16 %v4023, %v4022
        %s4025 = scalar_lea.vmem %s7, 32
        %v4026 = vld [vmem:[%s4025] sm:$0xf]
        %v4027 = vld [vmem:[%s4025 + $0x4] sm:$0xf]
        %v4028 = vld [vmem:[%s4025 + $0x8] sm:$0xf]
        %v4029 = vld [vmem:[%s4025 + $0xc] sm:$0xf]
        %s4030 = scalar_lea.vmem %s8, 2
        %v4031 = vld [vmem:[%s4030] sm:$0x1]
        %v4033 = vperm.slane %v4031, 0
        %v4039 = vunpack.c.l.b16 %v4026
        %v4040 = vunpack.c.l.b16 %v4027
        %v4041 = vunpack.c.l.b16 %v4028
        %v4042 = vunpack.c.l.b16 %v4029
        %v4043 = vpack.c.b16 %v4040, %v4039
        %v4044 = vpack.c.b16 %v4042, %v4041
        %v4048 = vsel %vm899, %v4024, 0
        %4050 = vmatpush.bf16.msra.mxu0 0
        %4051 = vmatpush.bf16.msra.mxu0 0
        %4052 = vmatpush.bf16.msra.mxu0 0
        %4053 = vmatpush.bf16.msra.mxu0 0
        %4054 = vmatpush.bf16.msra.mxu0 0
        %4055 = vmatpush.bf16.msra.mxu0 0
        %4056 = vmatpush.bf16.msra.mxu0 %v4044
        %4057 = vmatpush.bf16.msra.mxu0 %v4043
        %4058 = vmatmul.bf16.gmra.mxu0 %v4048
        %v4059 = vpop.f32.mrf.mxu0
        %v4060 = vadd.f32 %v4033, %v4059
        %v4061 = vpop.f32.mrf.mxu0
        %v4062 = vadd.f32 %v4033, %v4061
        %4063 = vdwg.mxu0
        %v4064 = vadd.f32 %v3259, %v4060
        %v4065 = vadd.f32 %v3260, %v4062
        %s4066 = scalar_lea.vmem %s11, 2
        %v4067 = vld [vmem:[%s4066] sm:$0x1]
        %s4068 = scalar_lea.vmem %s12, 2
        %v4069 = vld [vmem:[%s4068] sm:$0x1]
        %v4070 = vsel %vm899, %v4064, 0.0
        %4071 = vadd.xlane.f32.xlu0 %v4070
        %v4072 = vpop.xlane.xlu0 %4071
        %v4073 = vsel %vm899, %v4065, 0.0
        %4074 = vadd.xlane.f32.xlu0 %v4073
        %v4075 = vpop.xlane.xlu0 %4074
        %v4076 = vmul.f32 %v4072, %v1696
        %v4077 = vmul.f32 %v4075, %v1696
        %v4078 = vsub.f32 %v4064, %v4076
        %v4079 = vsub.f32 %v4065, %v4077
        %v4080 = vmul.f32 %v4078, %v4078
        %v4081 = vmul.f32 %v4079, %v4079
        %v4082 = vsel %vm899, %v4080, 0.0
        %4083 = vadd.xlane.f32.xlu0 %v4082
        %v4084 = vpop.xlane.xlu0 %4083
        %v4085 = vsel %vm899, %v4081, 0.0
        %4086 = vadd.xlane.f32.xlu0 %v4085
        %v4087 = vpop.xlane.xlu0 %4086
        %v4088 = vmul.f32 %v4084, %v1696
        %v4089 = vmul.f32 %v4087, %v1696
        %v4090 = vadd.f32 %v4088, 1e-05
        %v4091 = vadd.f32 %v4089, 1e-05
        %v4092 = vrsqrt.pop %v4090
        %v4093 = vmul.f32 %v4092, %v4090
        %v4094 = vmul.f32 %v4093, %v4092
        %v4095 = vmul.f32 0.5, %v4094
        %v4096 = vsub.f32 1.5, %v4095
        %v4097 = vmul.f32 %v4092, %v4096
        %vm4098 = vweird.f32 %v4090
        %vm4099 = vweird.f32 %v4092
        %vm4100 = vmor %vm4098, %vm4099
        %v4101 = vsel %vm4100, %v4092, %v4097
        %v4102 = vrsqrt.pop %v4091
        %v4103 = vmul.f32 %v4102, %v4091
        %v4104 = vmul.f32 %v4103, %v4102
        %v4105 = vmul.f32 0.5, %v4104
        %v4106 = vsub.f32 1.5, %v4105
        %v4107 = vmul.f32 %v4102, %v4106
        %vm4108 = vweird.f32 %v4091
        %vm4109 = vweird.f32 %v4102
        %vm4110 = vmor %vm4108, %vm4109
        %v4111 = vsel %vm4110, %v4102, %v4107
        %v4112 = vmul.f32 %v4078, %v4101
        %v4113 = vmul.f32 %v4079, %v4111
        %v4115 = vperm.slane %v4067, 0
        %v4117 = vmul.f32 %v4112, %v4115
        %v4118 = vmul.f32 %v4113, %v4115
        %v4120 = vperm.slane %v4069, 0
        %v4122 = vadd.f32 %v4117, %v4120
        %v4123 = vadd.f32 %v4118, %v4120
        %v4124 = vmul.f32 %v4122, %v610
        %v4125 = vmul.f32 %v4123, %v611
        %v4128 = vrot.slane %v4124, 7
        %v4129 = vrot.slane %v4125, 7
        %v4130 = vsel %vm1622, %v4128, %v4129
        %v4133 = vsel %vm1622, 0.0, %v4128
        %v4134 = vrot.slane %v4124, 1
        %v4135 = vrot.slane %v4125, 1
        %v4136 = vsel %vm1755, %v4134, %v4135
        %v4138 = vsel %vm1755, %v4135, 0.0
        %4139 = vrot.lane.b32.xlu0 %v4124, 32
        %v4140 = vpop.permute.xlu0 %4139
        %4141 = vrot.lane.b32.xlu0 %v4125, 32
        %v4142 = vpop.permute.xlu0 %4141
        %4146 = vrot.lane.b32.xlu0 %v4136, 64
        %v4147 = vpop.permute.xlu0 %4146
        %4148 = vrot.lane.b32.xlu0 %v4138, 64
        %v4149 = vpop.permute.xlu0 %4148
        %v4152 = vsel %vm899, %v4133, %v4140
        %v4153 = vsel %vm899, %v4130, %v4142
        %v4154 = vsel %vm1776, %v4152, %v4147
        %v4155 = vsel %vm1776, %v4153, %v4149
        %v4156 = vpack.c.bf16 %v4155, %v4154
        %s4157 = scalar_lea.vmem %s13, 96
        %v4158 = vld [vmem:[%s4157] sm:$0xf]
        %v4159 = vld [vmem:[%s4157 + $0x4] sm:$0xf]
        %v4160 = vld [vmem:[%s4157 + $0x8] sm:$0xf]
        %v4161 = vld [vmem:[%s4157 + $0xc] sm:$0xf]
        %v4162 = vld [vmem:[%s4157 + $0x10] sm:$0xf]
        %v4163 = vld [vmem:[%s4157 + $0x14] sm:$0xf]
        %v4164 = vld [vmem:[%s4157 + $0x18] sm:$0xf]
        %v4165 = vld [vmem:[%s4157 + $0x1c] sm:$0xf]
        %v4166 = vld [vmem:[%s4157 + $0x20] sm:$0xf]
        %v4167 = vld [vmem:[%s4157 + $0x24] sm:$0xf]
        %v4168 = vld [vmem:[%s4157 + $0x28] sm:$0xf]
        %v4169 = vld [vmem:[%s4157 + $0x2c] sm:$0xf]
        %s4170 = scalar_lea.vmem %s14, 2
        %v4171 = vld [vmem:[%s4170] sm:$0x1]
        %v4173 = vperm.slane %v4171, 0
        %v4187 = vunpack.c.l.b16 %v4158
        %v4188 = vunpack.c.l.b16 %v4159
        %v4189 = vunpack.c.l.b16 %v4160
        %v4190 = vunpack.c.l.b16 %v4161
        %v4191 = vunpack.c.l.b16 %v4162
        %v4192 = vunpack.c.l.b16 %v4163
        %v4193 = vunpack.c.l.b16 %v4164
        %v4194 = vunpack.c.l.b16 %v4165
        %v4195 = vunpack.c.l.b16 %v4166
        %v4196 = vunpack.c.l.b16 %v4167
        %v4197 = vunpack.c.l.b16 %v4168
        %v4198 = vunpack.c.l.b16 %v4169
        %v4199 = vpack.c.b16 %v4188, %v4187
        %v4200 = vpack.c.b16 %v4190, %v4189
        %v4201 = vpack.c.b16 %v4192, %v4191
        %v4202 = vpack.c.b16 %v4194, %v4193
        %v4203 = vpack.c.b16 %v4196, %v4195
        %v4204 = vpack.c.b16 %v4198, %v4197
        %v4212 = vsel %vm1832, %v4156, 0
        %4214 = vmatpush.bf16.msra.mxu0 0
        %4215 = vmatpush.bf16.msra.mxu0 0
        %4216 = vmatpush.bf16.msra.mxu0 %v4204
        %4217 = vmatpush.bf16.msra.mxu0 %v4203
        %4218 = vmatpush.bf16.msra.mxu0 %v4202
        %4219 = vmatpush.bf16.msra.mxu0 %v4201
        %4220 = vmatpush.bf16.msra.mxu0 %v4200
        %4221 = vmatpush.bf16.msra.mxu0 %v4199
        %4222 = vmatmul.bf16.gmra.mxu0 %v4212
        %v4223 = vpop.f32.mrf.mxu0
        %v4224 = vadd.f32 %v4173, %v4223
        %v4225 = vpop.f32.mrf.mxu0
        %v4226 = vadd.f32 %v4173, %v4225
        %4227 = vdwg.mxu0
        %v4228 = vmax.f32 %v4224, 0.0
        %v4229 = vmax.f32 %v4226, 0.0
        %v4230 = vmul.f32 %v4228, %v610
        %v4231 = vmul.f32 %v4229, %v611
        %v4234 = vrot.slane %v4230, 7
        %v4235 = vrot.slane %v4231, 7
        %v4236 = vsel %vm1622, %v4234, %v4235
        %v4239 = vsel %vm1622, 0.0, %v4234
        %v4240 = vrot.slane %v4230, 1
        %v4241 = vrot.slane %v4231, 1
        %v4242 = vsel %vm1755, %v4240, %v4241
        %v4245 = vsel %vm1755, %v4241, 0.0
        %4246 = vrot.lane.b32.xlu0 %v4230, 64
        %v4247 = vpop.permute.xlu0 %4246
        %4248 = vrot.lane.b32.xlu0 %v4231, 64
        %v4249 = vpop.permute.xlu0 %4248
        %v4252 = vsel %vm1776, %v4239, %v4247
        %v4253 = vsel %vm1776, %v4236, %v4249
        %v4254 = vpack.c.bf16 %v4253, %v4252
        %v4255 = vpack.c.bf16 %v4245, %v4242
        %s4256 = scalar_lea.vmem %s15, 192
        %v4257 = vld [vmem:[%s4256] sm:$0xf]
        %v4258 = vld [vmem:[%s4256 + $0x4] sm:$0xf]
        %v4259 = vld [vmem:[%s4256 + $0x8] sm:$0xf]
        %v4260 = vld [vmem:[%s4256 + $0xc] sm:$0xf]
        %v4261 = vld [vmem:[%s4256 + $0x10] sm:$0xf]
        %v4262 = vld [vmem:[%s4256 + $0x14] sm:$0xf]
        %v4263 = vld [vmem:[%s4256 + $0x18] sm:$0xf]
        %v4264 = vld [vmem:[%s4256 + $0x1c] sm:$0xf]
        %v4265 = vld [vmem:[%s4256 + $0x20] sm:$0xf]
        %v4266 = vld [vmem:[%s4256 + $0x24] sm:$0xf]
        %v4267 = vld [vmem:[%s4256 + $0x28] sm:$0xf]
        %v4268 = vld [vmem:[%s4256 + $0x2c] sm:$0xf]
        %v4269 = vld [vmem:[%s4256 + $0x30] sm:$0xf]
        %v4270 = vld [vmem:[%s4256 + $0x34] sm:$0xf]
        %v4271 = vld [vmem:[%s4256 + $0x38] sm:$0xf]
        %v4272 = vld [vmem:[%s4256 + $0x3c] sm:$0xf]
        %v4273 = vld [vmem:[%s4256 + $0x40] sm:$0xf]
        %v4274 = vld [vmem:[%s4256 + $0x44] sm:$0xf]
        %v4275 = vld [vmem:[%s4256 + $0x48] sm:$0xf]
        %v4276 = vld [vmem:[%s4256 + $0x4c] sm:$0xf]
        %v4277 = vld [vmem:[%s4256 + $0x50] sm:$0xf]
        %v4278 = vld [vmem:[%s4256 + $0x54] sm:$0xf]
        %v4279 = vld [vmem:[%s4256 + $0x58] sm:$0xf]
        %v4280 = vld [vmem:[%s4256 + $0x5c] sm:$0xf]
        %s4281 = scalar_lea.vmem %s16, 2
        %v4282 = vld [vmem:[%s4281] sm:$0x1]
        %v4284 = vperm.slane %v4282, 0
        %v4310 = vunpack.c.l.b16 %v4257
        %v4311 = vunpack.c.l.b16 %v4258
        %v4312 = vunpack.c.l.b16 %v4259
        %v4313 = vunpack.c.l.b16 %v4260
        %v4314 = vunpack.c.l.b16 %v4261
        %v4315 = vunpack.c.l.b16 %v4262
        %v4316 = vunpack.c.l.b16 %v4263
        %v4317 = vunpack.c.l.b16 %v4264
        %v4318 = vunpack.c.l.b16 %v4265
        %v4319 = vunpack.c.l.b16 %v4266
        %v4320 = vunpack.c.l.b16 %v4267
        %v4321 = vunpack.c.l.b16 %v4268
        %v4322 = vunpack.c.l.b16 %v4269
        %v4323 = vunpack.c.l.b16 %v4270
        %v4324 = vunpack.c.l.b16 %v4271
        %v4325 = vunpack.c.l.b16 %v4272
        %v4326 = vunpack.c.l.b16 %v4273
        %v4327 = vunpack.c.l.b16 %v4274
        %v4328 = vunpack.c.l.b16 %v4275
        %v4329 = vunpack.c.l.b16 %v4276
        %v4330 = vunpack.c.l.b16 %v4277
        %v4331 = vunpack.c.l.b16 %v4278
        %v4332 = vunpack.c.l.b16 %v4279
        %v4333 = vunpack.c.l.b16 %v4280
        %v4334 = vpack.c.b16 %v4311, %v4310
        %v4335 = vpack.c.b16 %v4313, %v4312
        %v4336 = vpack.c.b16 %v4315, %v4314
        %v4337 = vpack.c.b16 %v4317, %v4316
        %v4338 = vpack.c.b16 %v4319, %v4318
        %v4339 = vpack.c.b16 %v4321, %v4320
        %v4340 = vpack.c.b16 %v4323, %v4322
        %v4341 = vpack.c.b16 %v4325, %v4324
        %v4342 = vpack.c.b16 %v4327, %v4326
        %v4343 = vpack.c.b16 %v4329, %v4328
        %v4344 = vpack.c.b16 %v4331, %v4330
        %v4345 = vpack.c.b16 %v4333, %v4332
        %v4359 = vsel %vm1776, %v4255, 0
        %4361 = vmatpush.bf16.msra.mxu0 %v4341
        %4362 = vmatpush.bf16.msra.mxu0 %v4340
        %4363 = vmatpush.bf16.msra.mxu0 %v4339
        %4364 = vmatpush.bf16.msra.mxu0 %v4338
        %4365 = vmatpush.bf16.msra.mxu0 %v4337
        %4366 = vmatpush.bf16.msra.mxu0 %v4336
        %4367 = vmatpush.bf16.msra.mxu0 %v4335
        %4368 = vmatpush.bf16.msra.mxu0 %v4334
        %4369 = vmatmul.bf16.gmra.mxu0 %v4254
        %v4370 = vpop.f32.mrf.mxu0
        %v4371 = vadd.f32 %v4284, %v4370
        %v4372 = vpop.f32.mrf.mxu0
        %v4373 = vadd.f32 %v4284, %v4372
        %4374 = vdwg.mxu0
        %4375 = vmatpush.bf16.msra.mxu0 0
        %4376 = vmatpush.bf16.msra.mxu0 0
        %4377 = vmatpush.bf16.msra.mxu0 0
        %4378 = vmatpush.bf16.msra.mxu0 0
        %4379 = vmatpush.bf16.msra.mxu0 %v4345
        %4380 = vmatpush.bf16.msra.mxu0 %v4344
        %4381 = vmatpush.bf16.msra.mxu0 %v4343
        %4382 = vmatpush.bf16.msra.mxu0 %v4342
        %4383 = vmatmul.bf16.gmra.mxu0 %v4359
        %v4384 = vpop.f32.mrf.mxu0
        %v4385 = vadd.f32 %v4371, %v4384
        %v4386 = vpop.f32.mrf.mxu0
        %v4387 = vadd.f32 %v4373, %v4386
        %4388 = vdwg.mxu0
        %v4389 = vmul.f32 %v4385, %v610
        %v4390 = vmul.f32 %v4387, %v611
        %v4391 = vadd.f32 %v4122, %v4389
        %v4392 = vadd.f32 %v4123, %v4390
        %s4393 = scalar_lea.vmem %s17, 2
        %v4394 = vld [vmem:[%s4393] sm:$0x1]
        %s4395 = scalar_lea.vmem %s18, 2
        %v4396 = vld [vmem:[%s4395] sm:$0x1]
        %v4397 = vsel %vm899, %v4391, 0.0
        %4398 = vadd.xlane.f32.xlu0 %v4397
        %v4399 = vpop.xlane.xlu0 %4398
        %v4400 = vsel %vm899, %v4392, 0.0
        %4401 = vadd.xlane.f32.xlu0 %v4400
        %v4402 = vpop.xlane.xlu0 %4401
        %v4403 = vmul.f32 %v4399, %v1696
        %v4404 = vmul.f32 %v4402, %v1696
        %v4405 = vsub.f32 %v4391, %v4403
        %v4406 = vsub.f32 %v4392, %v4404
        %v4407 = vmul.f32 %v4405, %v4405
        %v4408 = vmul.f32 %v4406, %v4406
        %v4409 = vsel %vm899, %v4407, 0.0
        %4410 = vadd.xlane.f32.xlu0 %v4409
        %v4411 = vpop.xlane.xlu0 %4410
        %v4412 = vsel %vm899, %v4408, 0.0
        %4413 = vadd.xlane.f32.xlu0 %v4412
        %v4414 = vpop.xlane.xlu0 %4413
        %v4415 = vmul.f32 %v4411, %v1696
        %v4416 = vmul.f32 %v4414, %v1696
        %v4417 = vadd.f32 %v4415, 1e-05
        %v4418 = vadd.f32 %v4416, 1e-05
        %v4419 = vrsqrt.pop %v4417
        %v4420 = vmul.f32 %v4419, %v4417
        %v4421 = vmul.f32 %v4420, %v4419
        %v4422 = vmul.f32 0.5, %v4421
        %v4423 = vsub.f32 1.5, %v4422
        %v4424 = vmul.f32 %v4419, %v4423
        %vm4425 = vweird.f32 %v4417
        %vm4426 = vweird.f32 %v4419
        %vm4427 = vmor %vm4425, %vm4426
        %v4428 = vsel %vm4427, %v4419, %v4424
        %v4429 = vrsqrt.pop %v4418
        %v4430 = vmul.f32 %v4429, %v4418
        %v4431 = vmul.f32 %v4430, %v4429
        %v4432 = vmul.f32 0.5, %v4431
        %v4433 = vsub.f32 1.5, %v4432
        %v4434 = vmul.f32 %v4429, %v4433
        %vm4435 = vweird.f32 %v4418
        %vm4436 = vweird.f32 %v4429
        %vm4437 = vmor %vm4435, %vm4436
        %v4438 = vsel %vm4437, %v4429, %v4434
        %v4439 = vmul.f32 %v4405, %v4428
        %v4440 = vmul.f32 %v4406, %v4438
        %v4442 = vperm.slane %v4394, 0
        %v4444 = vmul.f32 %v4439, %v4442
        %v4445 = vmul.f32 %v4440, %v4442
        %v4447 = vperm.slane %v4396, 0
        %v4449 = vadd.f32 %v4444, %v4447
        %v4450 = vadd.f32 %v4445, %v4447
        %v4451 = vmul.f32 %v4449, %v610
        %v4452 = vmul.f32 %v4450, %v611
        %4453 = vst.msk [vmem:[%s590] sm:$0xff] %vm899, %v4451
        %4454 = vst.msk [vmem:[%s590 + $0x8] sm:$0xff] %vm899, %v4452
        %s4455 = sand.u32 %s437, 1
        %s4456 = scalar_lea.sflag [#allocation5], %s4455
        %s4457 = sand.u32 %s437, 1
        %s4458 = smul.addr %s4457, 16
        %s4459 = scalar_lea.vmem [#allocation4], %s4458
        // Predicated region
        $region93: #{w2v_encoder_forward.1} parent=91 // pred_check
          %p4460 = pneg %p447
        $region94: #{w2v_encoder_forward.1} parent=91 // pred_check_branch
          %4462 = sbr.rel (%p4460) target = $region96
        $region95: #{w2v_encoder_forward.1} parent=91 // pred_region
          %4464 = vsyncadd %s4456, 0
          %s4465 = smul.addr %s41, 2
          %s4466 = smul.addr %s4465, 8
          %s4467 = scalar_lea.hbm %s19, %s4466
          %s4468 = sshll.u32 %s4459, 4
          %s4469 = int_to_ptr.vmem [resolvable:$true] %s4468
          %s4470 = sshll.u32 %s4467, 4
          %s4471 = int_to_ptr.hbm [resolvable:$true] %s4470
          %4476 = dma.vmem_to_hbm [thread:$0]  %s4469, 256, %s4471, %s4456, 128, 128, 8
        $region96: #{w2v_encoder_forward.1} parent=91 // pred_fallthru
          _
      $region92: #{w2v_encoder_forward.1} parent=5 // pred_fallthru
        _
      %p4477 = scmp.le.s32.totalorder 2, %s36
      // Predicated region
      $region97: #{w2v_encoder_forward.1} parent=5 // pred_check
        %p4478 = pneg %p4477
      $region98: #{w2v_encoder_forward.1} parent=5 // pred_check_branch
        %4480 = sbr.rel (%p4478) target = $region100
      $region99: #{w2v_encoder_forward.1} parent=5 // pred_region
        %s4481 = ssub.s32 %s36, 2
        // Predicated region
        $region101: #{w2v_encoder_forward.1} parent=99 // pred_check
          %p4482 = pneg %p453
        $region102: #{w2v_encoder_forward.1} parent=99 // pred_check_branch
          %4484 = sbr.rel (%p4482) target = $region104
        $region103: #{w2v_encoder_forward.1} parent=99 // pred_region
          %s4485 = sand.u32 %s438, 1
          %s4486 = scalar_lea.sflag [#allocation5], %s4485
          %s4487 = sand.u32 %s438, 1
          %s4488 = smul.addr %s4487, 16
          %s4489 = scalar_lea.vmem [#allocation4], %s4488
          %4491 = dma.done %s4486, 256
        $region104: #{w2v_encoder_forward.1} parent=99 // pred_fallthru
          _
      $region100: #{w2v_encoder_forward.1} parent=5 // pred_fallthru
        _
    $region6: #{w2v_encoder_forward.1} parent=1 // loop_footer
      %s40 = sadd.s32 1, %s36
    $region7: #{w2v_encoder_forward.1} parent=1 // loop_footer_branch
      %35 = sbr.rel target = $region3
    $region8: #{w2v_encoder_forward.1} parent=1 // loop_exit
      _
    %4492 = vsyncpa [#allocation5], 1
    %s4493 = scalar_lea.sflag [#allocation5], 1
    %4494 = vsyncpa %s4493, 1

</llo_original>
